<compile_context>
chip_gen: v7x
topology: tpu7x:2x2x1
jax: 0.10.0
libtpu: 0.0.40
codegen_flags: <defaults>
</compile_context>

<pallas_src>
import math
import functools

import jax
import jax.numpy as jnp
from jax import lax
from jax.experimental import pallas as pl
from jax.experimental.pallas import tpu as pltpu

# ---- scaled-down hyperparameters ----
D_MODEL = 128
N_HEADS = 4
HEAD_DIM = D_MODEL // N_HEADS
N_LAYERS = 2
DIM_FF = 256
NUM_CLASSES = 10
C_PAD = 128            # classifier head padded to a lane-dense 128-wide slab
VOCAB = 512
MAX_LEN = 512
LN_EPS = 1e-5          # PyTorch nn.LayerNorm default


# ---------------- in-kernel helpers ----------------

def _mm_t(x, w_bf16):
    """x[M,K] @ w[N,K]^T without materializing a transpose.

    Weight is already bf16 (stored that way in HBM); activation is cast to bf16
    at the MXU; accumulation is f32."""
    return lax.dot_general(
        x.astype(jnp.bfloat16), w_bf16,
        dimension_numbers=(((1,), (1,)), ((), ())),
        preferred_element_type=jnp.float32)


def _ln(z, g, b):
    """LayerNorm over the last dim (f32 math). g, b are [1, D]."""
    mu = jnp.mean(z, axis=-1, keepdims=True)
    var = jnp.mean((z - mu) ** 2, axis=-1, keepdims=True)
    return (z - mu) * lax.rsqrt(var + LN_EPS) * g + b


def _pick_batch_tile(batch, seq, target_m=256):
    """Batch tile so TB*S targets ~256 MXU rows (v6e/v7x); must divide batch."""
    tb = max(1, min(batch, target_m // max(seq, 1)))
    while batch % tb:
        tb -= 1
    return tb


# ---------------- fused encoder-layer kernel ----------------

def _encoder_layer_kernel(mask_ref, x_ref,
                          w_in_ref, b_in_ref, w_out_ref, b_out_ref,
                          g1_ref, be1_ref, w1_ref, b1_ref, w2_ref, b2_ref,
                          g2_ref, be2_ref, o_ref, *, n_heads):
    TB, S, D = x_ref.shape
    dh = D // n_heads
    scale = 1.0 / math.sqrt(dh)

    # batch folded into M: (TB, S, D) bf16 -> f32 -> (TB*S, D)
    x = x_ref[...].astype(jnp.float32).reshape(TB * S, D)

    # ---- multi-head self-attention ----
    # one (TB*S, D) x (3D, D)^T matmul for the packed Q,K,V projection
    qkv = _mm_t(x, w_in_ref[...]) + b_in_ref[...]            # (TB*S, 3D) f32
    q = (qkv[:, :D] * scale).reshape(TB, S, D)               # fold 1/sqrt(dh) into q
    k = qkv[:, D:2 * D].reshape(TB, S, D)
    v = qkv[:, 2 * D:].reshape(TB, S, D)

    # key-padding bias built in-kernel from the int32 mask (mask==0 -> padding)
    bias = jnp.where(mask_ref[...] == 0, -1e9, 0.0).astype(jnp.float32)  # (TB, S)
    bias = bias[:, None, :]                                  # (TB, 1, S)

    # Per-head attention (static unroll, H=4); attention itself is per-sample via
    # batched einsums over the TB dim.  Per-head contexts are concatenated into a
    # lane-dense (TB*S, D) slab so the out-projection is ONE matmul with K=D.
    ctx_heads = []
    for h in range(n_heads):
        sl = slice(h * dh, (h + 1) * dh)
        s = jnp.einsum('bqd,bkd->bqk',
                       q[:, :, sl].astype(jnp.bfloat16),
                       k[:, :, sl].astype(jnp.bfloat16),
                       preferred_element_type=jnp.float32) + bias       # (TB, S, S)
        m = jnp.max(s, axis=-1, keepdims=True)
        p = jnp.exp(s - m)
        p = p * pl.reciprocal(jnp.sum(p, axis=-1, keepdims=True), approx=True)
        ctx = jnp.einsum('bqk,bkd->bqd',
                         p.astype(jnp.bfloat16),
                         v[:, :, sl].astype(jnp.bfloat16),
                         preferred_element_type=jnp.float32)            # (TB, S, dh)
        ctx_heads.append(ctx)
    ctx_all = jnp.concatenate(ctx_heads, axis=-1).reshape(TB * S, D)    # (TB*S, D)

    attn = _mm_t(ctx_all, w_out_ref[...]) + b_out_ref[...]   # (TB*S, D) f32

    # residual + norm1
    z = _ln(x + attn, g1_ref[...], be1_ref[...])             # (TB*S, D) f32

    # ---- feed-forward ----
    h1 = jnp.maximum(_mm_t(z, w1_ref[...]) + b1_ref[...], 0.0)   # (TB*S, FF)
    h2 = _mm_t(h1, w2_ref[...]) + b2_ref[...]                    # (TB*S, D)

    # residual + norm2, stored bf16 (inter-layer activations live in bf16 in HBM)
    out = _ln(z + h2, g2_ref[...], be2_ref[...])
    o_ref[...] = out.reshape(TB, S, D).astype(o_ref.dtype)


def encoder_layer(x, mask, lp, *, tb):
    """x: [B, S, D] bf16, mask: [B, S] int32 -> [B, S, D] bf16."""
    B, S, D = x.shape
    FF = lp["w1"].shape[0]
    const2 = lambda b: (0, 0)
    return pl.pallas_call(
        functools.partial(_encoder_layer_kernel, n_heads=N_HEADS),
        grid=(B // tb,),
        in_specs=[
            pl.BlockSpec((tb, S), lambda b: (b, 0)),         # key-padding mask
            pl.BlockSpec((tb, S, D), lambda b: (b, 0, 0)),   # activations (bf16)
            pl.BlockSpec((3 * D, D), const2),                # packed in_proj weight
            pl.BlockSpec((1, 3 * D), const2),                # packed in_proj bias
            pl.BlockSpec((D, D), const2),                    # out_proj weight
            pl.BlockSpec((1, D), const2),                    # out_proj bias
            pl.BlockSpec((1, D), const2),                    # norm1 gamma
            pl.BlockSpec((1, D), const2),                    # norm1 beta
            pl.BlockSpec((FF, D), const2),                   # linear1 weight
            pl.BlockSpec((1, FF), const2),                   # linear1 bias
            pl.BlockSpec((D, FF), const2),                   # linear2 weight
            pl.BlockSpec((1, D), const2),                    # linear2 bias
            pl.BlockSpec((1, D), const2),                    # norm2 gamma
            pl.BlockSpec((1, D), const2),                    # norm2 beta
        ],
        out_specs=pl.BlockSpec((tb, S, D), lambda b: (b, 0, 0)),
        out_shape=jax.ShapeDtypeStruct((B, S, D), jnp.bfloat16),
        compiler_params=pltpu.CompilerParams(
            dimension_semantics=("parallel",),       # split batch blocks over TCs
            vmem_limit_bytes=32 * 1024 * 1024),      # plenty at demo scale; tune per gen
    )(mask, x, lp["w_in"], lp["b_in"], lp["w_out"], lp["b_out"],
      lp["g1"], lp["be1"], lp["w1"], lp["b1"], lp["w2"], lp["b2"],
      lp["g2"], lp["be2"])


# ---------------- fused final LN + mean-pool + classifier head ----------------

def _final_kernel(x_ref, g_ref, b_ref, wfc_ref, bfc_ref, o_ref):
    x = x_ref[...].astype(jnp.float32)                       # (TB, S, D)
    z = _ln(x, g_ref[...], b_ref[...])                       # final encoder LayerNorm
    pooled = jnp.mean(z, axis=1)                             # mean over seq (TB, D)
    # lane-dense (TB, 128) logits slab (classes padded to 128; sliced in wrapper)
    o_ref[...] = _mm_t(pooled, wfc_ref[...]) + bfc_ref[...]


def final_ln_pool_fc(x, gamma, beta, w_fc_pad, b_fc_pad, *, tb):
    B, S, D = x.shape
    C = w_fc_pad.shape[0]
    const2 = lambda b: (0, 0)
    return pl.pallas_call(
        _final_kernel,
        grid=(B // tb,),
        in_specs=[
            pl.BlockSpec((tb, S, D), lambda b: (b, 0, 0)),
            pl.BlockSpec((1, D), const2),
            pl.BlockSpec((1, D), const2),
            pl.BlockSpec((C, D), const2),
            pl.BlockSpec((1, C), const2),
        ],
        out_specs=pl.BlockSpec((tb, C), lambda b: (b, 0)),
        out_shape=jax.ShapeDtypeStruct((B, C), jnp.float32),
        compiler_params=pltpu.CompilerParams(
            dimension_semantics=("parallel",)),
    )(x, gamma, beta, w_fc_pad, b_fc_pad)


# ---------------- model glue ----------------

def positional_encoding(seq_len, d_model):
    pos = jnp.arange(seq_len, dtype=jnp.float32)[:, None]
    div = jnp.exp(jnp.arange(0, d_model, 2, dtype=jnp.float32)
                  * (-math.log(10000.0) / d_model))
    pe = jnp.zeros((seq_len, d_model), jnp.float32)
    pe = pe.at[:, 0::2].set(jnp.sin(pos * div))
    pe = pe.at[:, 1::2].set(jnp.cos(pos * div))
    return pe


def init_params(key):
    keys = iter(jax.random.split(key, 64))

    def nrm(shape, scale=0.02):
        return scale * jax.random.normal(next(keys), shape, jnp.float32)

    bf = lambda a: a.astype(jnp.bfloat16)   # dense weights stored bf16 in HBM

    params = {
        "embedding": nrm((VOCAB, D_MODEL)),
        "pe": positional_encoding(MAX_LEN, D_MODEL),   # precomputed once (hoisted)
        "layers": [],
    }
    for _ in range(N_LAYERS):
        params["layers"].append(dict(
            w_in=bf(nrm((3 * D_MODEL, D_MODEL))),            # packed in_proj (Q,K,V)
            b_in=jnp.zeros((1, 3 * D_MODEL), jnp.float32),
            w_out=bf(nrm((D_MODEL, D_MODEL))),
            b_out=jnp.zeros((1, D_MODEL), jnp.float32),
            g1=jnp.ones((1, D_MODEL), jnp.float32),
            be1=jnp.zeros((1, D_MODEL), jnp.float32),
            w1=bf(nrm((DIM_FF, D_MODEL))),
            b1=jnp.zeros((1, DIM_FF), jnp.float32),
            w2=bf(nrm((D_MODEL, DIM_FF))),
            b2=jnp.zeros((1, D_MODEL), jnp.float32),
            g2=jnp.ones((1, D_MODEL), jnp.float32),
            be2=jnp.zeros((1, D_MODEL), jnp.float32),
        ))
    params["g_final"] = jnp.ones((1, D_MODEL), jnp.float32)
    params["b_final"] = jnp.zeros((1, D_MODEL), jnp.float32)
    # classifier head zero-padded to a lane-dense 128-wide slab
    w_fc = nrm((NUM_CLASSES, D_MODEL))
    params["w_fc_pad"] = bf(jnp.zeros((C_PAD, D_MODEL), jnp.float32)
                            .at[:NUM_CLASSES].set(w_fc))
    params["b_fc_pad"] = jnp.zeros((1, C_PAD), jnp.float32)
    return params


def text_classifier_forward(params, input_ids, attention_mask):
    B, S = input_ids.shape
    # embedding lookup + (precomputed) positional encoding, then cast residual
    # stream to bf16 for the kernels
    x = jnp.take(params["embedding"], input_ids, axis=0)            # [B, S, D] f32
    x = (x + params["pe"][None, :S, :]).astype(jnp.bfloat16)

    # key_padding_mask = ~attention_mask.bool(); the -1e9 bias is built in-kernel
    mask = attention_mask.astype(jnp.int32)                         # [B, S]

    tb = _pick_batch_tile(B, S)
    for lp in params["layers"]:
        x = encoder_layer(x, mask, lp, tb=tb)

    # final LayerNorm + mean over seq + classification head (dropout == identity)
    # NOTE: mean pools over all positions incl. padding, matching the PyTorch spec.
    logits_pad = final_ln_pool_fc(x, params["g_final"], params["b_final"],
                                  params["w_fc_pad"], params["b_fc_pad"], tb=tb)
    return logits_pad[:, :NUM_CLASSES]


if __name__ == "__main__":
    key = jax.random.PRNGKey(0)
    pkey, ikey = jax.random.split(key)
    params = init_params(pkey)

    B, S = 2, 8
    input_ids = jax.random.randint(ikey, (B, S), 0, VOCAB, dtype=jnp.int32)
    attention_mask = jnp.array([[1, 1, 1, 1, 1, 1, 1, 1],
                                [1, 1, 1, 1, 1, 1, 0, 0]], dtype=jnp.int32)

    logits = jax.jit(text_classifier_forward)(params, input_ids, attention_mask)
    jax.block_until_ready(logits)
    assert logits.shape == (B, NUM_CLASSES) and bool(jnp.all(jnp.isfinite(logits)))
    print("KERNEL_OK")
</pallas_src>

<mosaic_0001>
module attributes {stable_mosaic.version = 11 : i64} {
  func.func @_encoder_layer_kernel(%arg0: i32, %arg1: memref<2x8xi32, #tpu.memory_space<vmem>>, %arg2: memref<2x8x128xbf16, #tpu.memory_space<vmem>>, %arg3: memref<384x128xbf16, #tpu.memory_space<vmem>>, %arg4: memref<1x384xf32, #tpu.memory_space<vmem>>, %arg5: memref<128x128xbf16, #tpu.memory_space<vmem>>, %arg6: memref<1x128xf32, #tpu.memory_space<vmem>>, %arg7: memref<1x128xf32, #tpu.memory_space<vmem>>, %arg8: memref<1x128xf32, #tpu.memory_space<vmem>>, %arg9: memref<256x128xbf16, #tpu.memory_space<vmem>>, %arg10: memref<1x256xf32, #tpu.memory_space<vmem>>, %arg11: memref<128x256xbf16, #tpu.memory_space<vmem>>, %arg12: memref<1x128xf32, #tpu.memory_space<vmem>>, %arg13: memref<1x128xf32, #tpu.memory_space<vmem>>, %arg14: memref<1x128xf32, #tpu.memory_space<vmem>>, %arg15: memref<2x8x128xbf16, #tpu.memory_space<vmem>>) attributes {dimension_semantics = [#tpu.dimension_semantics<parallel>], iteration_bounds = array<i64: 1>, scalar_prefetch = 0 : i64, scratch_operands = 0 : i64, tpu.core_type = #tpu.core_type<tc>, window_params = [{transform_indices = @transform_0, window_bounds = array<i64: 2, 8>}, {transform_indices = @transform_1, window_bounds = array<i64: 2, 8, 128>}, {pipeline_mode = #tpu.pipeline_mode<synchronous>, transform_indices = @transform_2, window_bounds = array<i64: 384, 128>}, {pipeline_mode = #tpu.pipeline_mode<synchronous>, transform_indices = @transform_3, window_bounds = array<i64: 1, 384>}, {pipeline_mode = #tpu.pipeline_mode<synchronous>, transform_indices = @transform_4, window_bounds = array<i64: 128, 128>}, {pipeline_mode = #tpu.pipeline_mode<synchronous>, transform_indices = @transform_5, window_bounds = array<i64: 1, 128>}, {pipeline_mode = #tpu.pipeline_mode<synchronous>, transform_indices = @transform_6, window_bounds = array<i64: 1, 128>}, {pipeline_mode = #tpu.pipeline_mode<synchronous>, transform_indices = @transform_7, window_bounds = array<i64: 1, 128>}, {pipeline_mode = #tpu.pipeline_mode<synchronous>, transform_indices = @transform_8, window_bounds = array<i64: 256, 128>}, {pipeline_mode = #tpu.pipeline_mode<synchronous>, transform_indices = @transform_9, window_bounds = array<i64: 1, 256>}, {pipeline_mode = #tpu.pipeline_mode<synchronous>, transform_indices = @transform_10, window_bounds = array<i64: 128, 256>}, {pipeline_mode = #tpu.pipeline_mode<synchronous>, transform_indices = @transform_11, window_bounds = array<i64: 1, 128>}, {pipeline_mode = #tpu.pipeline_mode<synchronous>, transform_indices = @transform_12, window_bounds = array<i64: 1, 128>}, {pipeline_mode = #tpu.pipeline_mode<synchronous>, transform_indices = @transform_13, window_bounds = array<i64: 1, 128>}, {transform_indices = @transform_14, window_bounds = array<i64: 2, 8, 128>}]} {
    %c0 = arith.constant 0 : index
    %c0_0 = arith.constant 0 : index
    %c0_1 = arith.constant 0 : index
    %0 = vector.load %arg2[%c0, %c0_0, %c0_1] : memref<2x8x128xbf16, #tpu.memory_space<vmem>>, vector<2x8x128xbf16>
    %1 = arith.extf %0 : vector<2x8x128xbf16> to vector<2x8x128xf32>
    %2 = vector.shape_cast %1 : vector<2x8x128xf32> to vector<16x128xf32>
    %c0_2 = arith.constant 0 : index
    %c0_3 = arith.constant 0 : index
    %3 = vector.load %arg3[%c0_2, %c0_3] : memref<384x128xbf16, #tpu.memory_space<vmem>>, vector<384x128xbf16>
    %4 = arith.truncf %2 : vector<16x128xf32> to vector<16x128xbf16>
    %cst = arith.constant dense<0.000000e+00> : vector<16x384xf32>
    %5 = tpu.matmul %4, %3, %cst {dimension_numbers = #tpu.dot_dimension_numbers<[1], [1], [0], [0], [0, 0, 1, 0], [], []>} : vector<16x128xbf16>, vector<384x128xbf16>, vector<16x384xf32> -> vector<16x384xf32>
    %c0_4 = arith.constant 0 : index
    %c0_5 = arith.constant 0 : index
    %6 = vector.load %arg4[%c0_4, %c0_5] : memref<1x384xf32, #tpu.memory_space<vmem>>, vector<1x384xf32>
    %7 = vector.broadcast %6 : vector<1x384xf32> to vector<16x384xf32>
    %8 = arith.addf %5, %7 : vector<16x384xf32>
    %9 = vector.extract_strided_slice %8 {offsets = [0, 0], sizes = [16, 128], strides = [1, 1]} : vector<16x384xf32> to vector<16x128xf32>
    %cst_6 = arith.constant 0.176776692 : f32
    %10 = vector.broadcast %cst_6 : f32 to vector<16x128xf32>
    %11 = arith.mulf %9, %10 : vector<16x128xf32>
    %12 = vector.shape_cast %11 : vector<16x128xf32> to vector<2x8x128xf32>
    %13 = vector.extract_strided_slice %8 {offsets = [0, 128], sizes = [16, 128], strides = [1, 1]} : vector<16x384xf32> to vector<16x128xf32>
    %14 = vector.shape_cast %13 : vector<16x128xf32> to vector<2x8x128xf32>
    %15 = vector.extract_strided_slice %8 {offsets = [0, 256], sizes = [16, 128], strides = [1, 1]} : vector<16x384xf32> to vector<16x128xf32>
    %16 = vector.shape_cast %15 : vector<16x128xf32> to vector<2x8x128xf32>
    %c0_7 = arith.constant 0 : index
    %c0_8 = arith.constant 0 : index
    %17 = vector.load %arg1[%c0_7, %c0_8] : memref<2x8xi32, #tpu.memory_space<vmem>>, vector<2x8xi32>
    %c0_i32 = arith.constant 0 : i32
    %18 = vector.broadcast %c0_i32 : i32 to vector<2x8xi32>
    %19 = arith.cmpi eq, %17, %18 : vector<2x8xi32>
    %cst_9 = arith.constant -1.000000e+09 : f32
    %cst_10 = arith.constant 0.000000e+00 : f32
    %20 = vector.broadcast %cst_9 : f32 to vector<2x8xf32>
    %21 = vector.broadcast %cst_10 : f32 to vector<2x8xf32>
    %22 = arith.select %19, %20, %21 : vector<2x8xi1>, vector<2x8xf32>
    %23 = vector.shape_cast %22 : vector<2x8xf32> to vector<2x1x8xf32>
    %24 = vector.extract_strided_slice %12 {offsets = [0, 0, 0], sizes = [2, 8, 32], strides = [1, 1, 1]} : vector<2x8x128xf32> to vector<2x8x32xf32>
    %25 = arith.truncf %24 : vector<2x8x32xf32> to vector<2x8x32xbf16>
    %26 = vector.extract_strided_slice %14 {offsets = [0, 0, 0], sizes = [2, 8, 32], strides = [1, 1, 1]} : vector<2x8x128xf32> to vector<2x8x32xf32>
    %27 = arith.truncf %26 : vector<2x8x32xf32> to vector<2x8x32xbf16>
    "tpu.trace_start"() <{level = 10 : i32, message = "bqd,bkd->bqk"}> : () -> ()
    %cst_11 = arith.constant dense<0.000000e+00> : vector<2x8x8xf32>
    %28 = tpu.matmul %25, %27, %cst_11 {dimension_numbers = #tpu.dot_dimension_numbers<[2], [2], [1], [1], [0, 0, 0, 1, 1, 1], [0], [0]>} : vector<2x8x32xbf16>, vector<2x8x32xbf16>, vector<2x8x8xf32> -> vector<2x8x8xf32>
    "tpu.trace_stop"() : () -> ()
    %29 = vector.broadcast %23 : vector<2x1x8xf32> to vector<2x8x8xf32>
    %30 = arith.addf %28, %29 : vector<2x8x8xf32>
    %cst_12 = arith.constant dense<0xFF800000> : vector<2x8xf32>
    %31 = vector.multi_reduction <maximumf>, %30, %cst_12 [2] : vector<2x8x8xf32> to vector<2x8xf32>
    %32 = vector.shape_cast %31 : vector<2x8xf32> to vector<2x8x1xf32>
    %33 = vector.broadcast %32 : vector<2x8x1xf32> to vector<2x8x8xf32>
    %34 = arith.subf %30, %33 : vector<2x8x8xf32>
    %35 = math.exp %34 : vector<2x8x8xf32>
    %cst_13 = arith.constant dense<0.000000e+00> : vector<2x8xf32>
    %36 = vector.multi_reduction <add>, %35, %cst_13 [2] : vector<2x8x8xf32> to vector<2x8xf32>
    %37 = vector.shape_cast %36 : vector<2x8xf32> to vector<2x8x1xf32>
    %38 = tpu.reciprocal %37 {approx = true} : vector<2x8x1xf32> -> vector<2x8x1xf32>
    %39 = vector.broadcast %38 : vector<2x8x1xf32> to vector<2x8x8xf32>
    %40 = arith.mulf %35, %39 : vector<2x8x8xf32>
    %41 = arith.truncf %40 : vector<2x8x8xf32> to vector<2x8x8xbf16>
    %42 = vector.extract_strided_slice %16 {offsets = [0, 0, 0], sizes = [2, 8, 32], strides = [1, 1, 1]} : vector<2x8x128xf32> to vector<2x8x32xf32>
    %43 = arith.truncf %42 : vector<2x8x32xf32> to vector<2x8x32xbf16>
    "tpu.trace_start"() <{level = 10 : i32, message = "bqk,bkd->bqd"}> : () -> ()
    %cst_14 = arith.constant dense<0.000000e+00> : vector<2x8x32xf32>
    %44 = tpu.matmul %41, %43, %cst_14 {dimension_numbers = #tpu.dot_dimension_numbers<[2], [1], [1], [2], [0, 0, 0, 1, 1, 2], [0], [0]>} : vector<2x8x8xbf16>, vector<2x8x32xbf16>, vector<2x8x32xf32> -> vector<2x8x32xf32>
    "tpu.trace_stop"() : () -> ()
    %45 = vector.extract_strided_slice %12 {offsets = [0, 0, 32], sizes = [2, 8, 32], strides = [1, 1, 1]} : vector<2x8x128xf32> to vector<2x8x32xf32>
    %46 = arith.truncf %45 : vector<2x8x32xf32> to vector<2x8x32xbf16>
    %47 = vector.extract_strided_slice %14 {offsets = [0, 0, 32], sizes = [2, 8, 32], strides = [1, 1, 1]} : vector<2x8x128xf32> to vector<2x8x32xf32>
    %48 = arith.truncf %47 : vector<2x8x32xf32> to vector<2x8x32xbf16>
    "tpu.trace_start"() <{level = 10 : i32, message = "bqd,bkd->bqk"}> : () -> ()
    %cst_15 = arith.constant dense<0.000000e+00> : vector<2x8x8xf32>
    %49 = tpu.matmul %46, %48, %cst_15 {dimension_numbers = #tpu.dot_dimension_numbers<[2], [2], [1], [1], [0, 0, 0, 1, 1, 1], [0], [0]>} : vector<2x8x32xbf16>, vector<2x8x32xbf16>, vector<2x8x8xf32> -> vector<2x8x8xf32>
    "tpu.trace_stop"() : () -> ()
    %50 = vector.broadcast %23 : vector<2x1x8xf32> to vector<2x8x8xf32>
    %51 = arith.addf %49, %50 : vector<2x8x8xf32>
    %cst_16 = arith.constant dense<0xFF800000> : vector<2x8xf32>
    %52 = vector.multi_reduction <maximumf>, %51, %cst_16 [2] : vector<2x8x8xf32> to vector<2x8xf32>
    %53 = vector.shape_cast %52 : vector<2x8xf32> to vector<2x8x1xf32>
    %54 = vector.broadcast %53 : vector<2x8x1xf32> to vector<2x8x8xf32>
    %55 = arith.subf %51, %54 : vector<2x8x8xf32>
    %56 = math.exp %55 : vector<2x8x8xf32>
    %cst_17 = arith.constant dense<0.000000e+00> : vector<2x8xf32>
    %57 = vector.multi_reduction <add>, %56, %cst_17 [2] : vector<2x8x8xf32> to vector<2x8xf32>
    %58 = vector.shape_cast %57 : vector<2x8xf32> to vector<2x8x1xf32>
    %59 = tpu.reciprocal %58 {approx = true} : vector<2x8x1xf32> -> vector<2x8x1xf32>
    %60 = vector.broadcast %59 : vector<2x8x1xf32> to vector<2x8x8xf32>
    %61 = arith.mulf %56, %60 : vector<2x8x8xf32>
    %62 = arith.truncf %61 : vector<2x8x8xf32> to vector<2x8x8xbf16>
    %63 = vector.extract_strided_slice %16 {offsets = [0, 0, 32], sizes = [2, 8, 32], strides = [1, 1, 1]} : vector<2x8x128xf32> to vector<2x8x32xf32>
    %64 = arith.truncf %63 : vector<2x8x32xf32> to vector<2x8x32xbf16>
    "tpu.trace_start"() <{level = 10 : i32, message = "bqk,bkd->bqd"}> : () -> ()
    %cst_18 = arith.constant dense<0.000000e+00> : vector<2x8x32xf32>
    %65 = tpu.matmul %62, %64, %cst_18 {dimension_numbers = #tpu.dot_dimension_numbers<[2], [1], [1], [2], [0, 0, 0, 1, 1, 2], [0], [0]>} : vector<2x8x8xbf16>, vector<2x8x32xbf16>, vector<2x8x32xf32> -> vector<2x8x32xf32>
    "tpu.trace_stop"() : () -> ()
    %66 = vector.extract_strided_slice %12 {offsets = [0, 0, 64], sizes = [2, 8, 32], strides = [1, 1, 1]} : vector<2x8x128xf32> to vector<2x8x32xf32>
    %67 = arith.truncf %66 : vector<2x8x32xf32> to vector<2x8x32xbf16>
    %68 = vector.extract_strided_slice %14 {offsets = [0, 0, 64], sizes = [2, 8, 32], strides = [1, 1, 1]} : vector<2x8x128xf32> to vector<2x8x32xf32>
    %69 = arith.truncf %68 : vector<2x8x32xf32> to vector<2x8x32xbf16>
    "tpu.trace_start"() <{level = 10 : i32, message = "bqd,bkd->bqk"}> : () -> ()
    %cst_19 = arith.constant dense<0.000000e+00> : vector<2x8x8xf32>
    %70 = tpu.matmul %67, %69, %cst_19 {dimension_numbers = #tpu.dot_dimension_numbers<[2], [2], [1], [1], [0, 0, 0, 1, 1, 1], [0], [0]>} : vector<2x8x32xbf16>, vector<2x8x32xbf16>, vector<2x8x8xf32> -> vector<2x8x8xf32>
    "tpu.trace_stop"() : () -> ()
    %71 = vector.broadcast %23 : vector<2x1x8xf32> to vector<2x8x8xf32>
    %72 = arith.addf %70, %71 : vector<2x8x8xf32>
    %cst_20 = arith.constant dense<0xFF800000> : vector<2x8xf32>
    %73 = vector.multi_reduction <maximumf>, %72, %cst_20 [2] : vector<2x8x8xf32> to vector<2x8xf32>
    %74 = vector.shape_cast %73 : vector<2x8xf32> to vector<2x8x1xf32>
    %75 = vector.broadcast %74 : vector<2x8x1xf32> to vector<2x8x8xf32>
    %76 = arith.subf %72, %75 : vector<2x8x8xf32>
    %77 = math.exp %76 : vector<2x8x8xf32>
    %cst_21 = arith.constant dense<0.000000e+00> : vector<2x8xf32>
    %78 = vector.multi_reduction <add>, %77, %cst_21 [2] : vector<2x8x8xf32> to vector<2x8xf32>
    %79 = vector.shape_cast %78 : vector<2x8xf32> to vector<2x8x1xf32>
    %80 = tpu.reciprocal %79 {approx = true} : vector<2x8x1xf32> -> vector<2x8x1xf32>
    %81 = vector.broadcast %80 : vector<2x8x1xf32> to vector<2x8x8xf32>
    %82 = arith.mulf %77, %81 : vector<2x8x8xf32>
    %83 = arith.truncf %82 : vector<2x8x8xf32> to vector<2x8x8xbf16>
    %84 = vector.extract_strided_slice %16 {offsets = [0, 0, 64], sizes = [2, 8, 32], strides = [1, 1, 1]} : vector<2x8x128xf32> to vector<2x8x32xf32>
    %85 = arith.truncf %84 : vector<2x8x32xf32> to vector<2x8x32xbf16>
    "tpu.trace_start"() <{level = 10 : i32, message = "bqk,bkd->bqd"}> : () -> ()
    %cst_22 = arith.constant dense<0.000000e+00> : vector<2x8x32xf32>
    %86 = tpu.matmul %83, %85, %cst_22 {dimension_numbers = #tpu.dot_dimension_numbers<[2], [1], [1], [2], [0, 0, 0, 1, 1, 2], [0], [0]>} : vector<2x8x8xbf16>, vector<2x8x32xbf16>, vector<2x8x32xf32> -> vector<2x8x32xf32>
    "tpu.trace_stop"() : () -> ()
    %87 = vector.extract_strided_slice %12 {offsets = [0, 0, 96], sizes = [2, 8, 32], strides = [1, 1, 1]} : vector<2x8x128xf32> to vector<2x8x32xf32>
    %88 = arith.truncf %87 : vector<2x8x32xf32> to vector<2x8x32xbf16>
    %89 = vector.extract_strided_slice %14 {offsets = [0, 0, 96], sizes = [2, 8, 32], strides = [1, 1, 1]} : vector<2x8x128xf32> to vector<2x8x32xf32>
    %90 = arith.truncf %89 : vector<2x8x32xf32> to vector<2x8x32xbf16>
    "tpu.trace_start"() <{level = 10 : i32, message = "bqd,bkd->bqk"}> : () -> ()
    %cst_23 = arith.constant dense<0.000000e+00> : vector<2x8x8xf32>
    %91 = tpu.matmul %88, %90, %cst_23 {dimension_numbers = #tpu.dot_dimension_numbers<[2], [2], [1], [1], [0, 0, 0, 1, 1, 1], [0], [0]>} : vector<2x8x32xbf16>, vector<2x8x32xbf16>, vector<2x8x8xf32> -> vector<2x8x8xf32>
    "tpu.trace_stop"() : () -> ()
    %92 = vector.broadcast %23 : vector<2x1x8xf32> to vector<2x8x8xf32>
    %93 = arith.addf %91, %92 : vector<2x8x8xf32>
    %cst_24 = arith.constant dense<0xFF800000> : vector<2x8xf32>
    %94 = vector.multi_reduction <maximumf>, %93, %cst_24 [2] : vector<2x8x8xf32> to vector<2x8xf32>
    %95 = vector.shape_cast %94 : vector<2x8xf32> to vector<2x8x1xf32>
    %96 = vector.broadcast %95 : vector<2x8x1xf32> to vector<2x8x8xf32>
    %97 = arith.subf %93, %96 : vector<2x8x8xf32>
    %98 = math.exp %97 : vector<2x8x8xf32>
    %cst_25 = arith.constant dense<0.000000e+00> : vector<2x8xf32>
    %99 = vector.multi_reduction <add>, %98, %cst_25 [2] : vector<2x8x8xf32> to vector<2x8xf32>
    %100 = vector.shape_cast %99 : vector<2x8xf32> to vector<2x8x1xf32>
    %101 = tpu.reciprocal %100 {approx = true} : vector<2x8x1xf32> -> vector<2x8x1xf32>
    %102 = vector.broadcast %101 : vector<2x8x1xf32> to vector<2x8x8xf32>
    %103 = arith.mulf %98, %102 : vector<2x8x8xf32>
    %104 = arith.truncf %103 : vector<2x8x8xf32> to vector<2x8x8xbf16>
    %105 = vector.extract_strided_slice %16 {offsets = [0, 0, 96], sizes = [2, 8, 32], strides = [1, 1, 1]} : vector<2x8x128xf32> to vector<2x8x32xf32>
    %106 = arith.truncf %105 : vector<2x8x32xf32> to vector<2x8x32xbf16>
    "tpu.trace_start"() <{level = 10 : i32, message = "bqk,bkd->bqd"}> : () -> ()
    %cst_26 = arith.constant dense<0.000000e+00> : vector<2x8x32xf32>
    %107 = tpu.matmul %104, %106, %cst_26 {dimension_numbers = #tpu.dot_dimension_numbers<[2], [1], [1], [2], [0, 0, 0, 1, 1, 2], [0], [0]>} : vector<2x8x8xbf16>, vector<2x8x32xbf16>, vector<2x8x32xf32> -> vector<2x8x32xf32>
    "tpu.trace_stop"() : () -> ()
    %108 = tpu.concatenate %44, %65, %86, %107 in 2 : vector<2x8x32xf32>, vector<2x8x32xf32>, vector<2x8x32xf32>, vector<2x8x32xf32> -> vector<2x8x128xf32>
    %109 = vector.shape_cast %108 : vector<2x8x128xf32> to vector<16x128xf32>
    %c0_27 = arith.constant 0 : index
    %c0_28 = arith.constant 0 : index
    %110 = vector.load %arg5[%c0_27, %c0_28] : memref<128x128xbf16, #tpu.memory_space<vmem>>, vector<128x128xbf16>
    %111 = arith.truncf %109 : vector<16x128xf32> to vector<16x128xbf16>
    %cst_29 = arith.constant dense<0.000000e+00> : vector<16x128xf32>
    %112 = tpu.matmul %111, %110, %cst_29 {dimension_numbers = #tpu.dot_dimension_numbers<[1], [1], [0], [0], [0, 0, 1, 0], [], []>} : vector<16x128xbf16>, vector<128x128xbf16>, vector<16x128xf32> -> vector<16x128xf32>
    %c0_30 = arith.constant 0 : index
    %c0_31 = arith.constant 0 : index
    %113 = vector.load %arg6[%c0_30, %c0_31] : memref<1x128xf32, #tpu.memory_space<vmem>>, vector<1x128xf32>
    %114 = vector.broadcast %113 : vector<1x128xf32> to vector<16x128xf32>
    %115 = arith.addf %112, %114 : vector<16x128xf32>
    %116 = arith.addf %2, %115 : vector<16x128xf32>
    %c0_32 = arith.constant 0 : index
    %c0_33 = arith.constant 0 : index
    %117 = vector.load %arg7[%c0_32, %c0_33] : memref<1x128xf32, #tpu.memory_space<vmem>>, vector<1x128xf32>
    %c0_34 = arith.constant 0 : index
    %c0_35 = arith.constant 0 : index
    %118 = vector.load %arg8[%c0_34, %c0_35] : memref<1x128xf32, #tpu.memory_space<vmem>>, vector<1x128xf32>
    %cst_36 = arith.constant dense<0.000000e+00> : vector<16xf32>
    %119 = vector.multi_reduction <add>, %116, %cst_36 [1] : vector<16x128xf32> to vector<16xf32>
    %120 = vector.shape_cast %119 : vector<16xf32> to vector<16x1xf32>
    %cst_37 = arith.constant 1.280000e+02 : f32
    %121 = vector.broadcast %cst_37 : f32 to vector<16x1xf32>
    %122 = arith.divf %120, %121 : vector<16x1xf32>
    %123 = vector.broadcast %122 : vector<16x1xf32> to vector<16x128xf32>
    %124 = arith.subf %116, %123 : vector<16x128xf32>
    %125 = arith.mulf %124, %124 : vector<16x128xf32>
    %cst_38 = arith.constant dense<0.000000e+00> : vector<16xf32>
    %126 = vector.multi_reduction <add>, %125, %cst_38 [1] : vector<16x128xf32> to vector<16xf32>
    %127 = vector.shape_cast %126 : vector<16xf32> to vector<16x1xf32>
    %cst_39 = arith.constant 1.280000e+02 : f32
    %128 = vector.broadcast %cst_39 : f32 to vector<16x1xf32>
    %129 = arith.divf %127, %128 : vector<16x1xf32>
    %130 = vector.broadcast %122 : vector<16x1xf32> to vector<16x128xf32>
    %131 = arith.subf %116, %130 : vector<16x128xf32>
    %cst_40 = arith.constant 9.99999974E-6 : f32
    %132 = vector.broadcast %cst_40 : f32 to vector<16x1xf32>
    %133 = arith.addf %129, %132 : vector<16x1xf32>
    %134 = math.rsqrt %133 : vector<16x1xf32>
    %135 = vector.broadcast %134 : vector<16x1xf32> to vector<16x128xf32>
    %136 = arith.mulf %131, %135 : vector<16x128xf32>
    %137 = vector.broadcast %117 : vector<1x128xf32> to vector<16x128xf32>
    %138 = arith.mulf %136, %137 : vector<16x128xf32>
    %139 = vector.broadcast %118 : vector<1x128xf32> to vector<16x128xf32>
    %140 = arith.addf %138, %139 : vector<16x128xf32>
    %c0_41 = arith.constant 0 : index
    %c0_42 = arith.constant 0 : index
    %141 = vector.load %arg9[%c0_41, %c0_42] : memref<256x128xbf16, #tpu.memory_space<vmem>>, vector<256x128xbf16>
    %142 = arith.truncf %140 : vector<16x128xf32> to vector<16x128xbf16>
    %cst_43 = arith.constant dense<0.000000e+00> : vector<16x256xf32>
    %143 = tpu.matmul %142, %141, %cst_43 {dimension_numbers = #tpu.dot_dimension_numbers<[1], [1], [0], [0], [0, 0, 1, 0], [], []>} : vector<16x128xbf16>, vector<256x128xbf16>, vector<16x256xf32> -> vector<16x256xf32>
    %c0_44 = arith.constant 0 : index
    %c0_45 = arith.constant 0 : index
    %144 = vector.load %arg10[%c0_44, %c0_45] : memref<1x256xf32, #tpu.memory_space<vmem>>, vector<1x256xf32>
    %145 = vector.broadcast %144 : vector<1x256xf32> to vector<16x256xf32>
    %146 = arith.addf %143, %145 : vector<16x256xf32>
    %cst_46 = arith.constant 0.000000e+00 : f32
    %147 = vector.broadcast %cst_46 : f32 to vector<16x256xf32>
    %148 = arith.maximumf %146, %147 : vector<16x256xf32>
    %c0_47 = arith.constant 0 : index
    %c0_48 = arith.constant 0 : index
    %149 = vector.load %arg11[%c0_47, %c0_48] : memref<128x256xbf16, #tpu.memory_space<vmem>>, vector<128x256xbf16>
    %150 = arith.truncf %148 : vector<16x256xf32> to vector<16x256xbf16>
    %cst_49 = arith.constant dense<0.000000e+00> : vector<16x128xf32>
    %151 = tpu.matmul %150, %149, %cst_49 {dimension_numbers = #tpu.dot_dimension_numbers<[1], [1], [0], [0], [0, 0, 1, 0], [], []>} : vector<16x256xbf16>, vector<128x256xbf16>, vector<16x128xf32> -> vector<16x128xf32>
    %c0_50 = arith.constant 0 : index
    %c0_51 = arith.constant 0 : index
    %152 = vector.load %arg12[%c0_50, %c0_51] : memref<1x128xf32, #tpu.memory_space<vmem>>, vector<1x128xf32>
    %153 = vector.broadcast %152 : vector<1x128xf32> to vector<16x128xf32>
    %154 = arith.addf %151, %153 : vector<16x128xf32>
    %155 = arith.addf %140, %154 : vector<16x128xf32>
    %c0_52 = arith.constant 0 : index
    %c0_53 = arith.constant 0 : index
    %156 = vector.load %arg13[%c0_52, %c0_53] : memref<1x128xf32, #tpu.memory_space<vmem>>, vector<1x128xf32>
    %c0_54 = arith.constant 0 : index
    %c0_55 = arith.constant 0 : index
    %157 = vector.load %arg14[%c0_54, %c0_55] : memref<1x128xf32, #tpu.memory_space<vmem>>, vector<1x128xf32>
    %cst_56 = arith.constant dense<0.000000e+00> : vector<16xf32>
    %158 = vector.multi_reduction <add>, %155, %cst_56 [1] : vector<16x128xf32> to vector<16xf32>
    %159 = vector.shape_cast %158 : vector<16xf32> to vector<16x1xf32>
    %cst_57 = arith.constant 1.280000e+02 : f32
    %160 = vector.broadcast %cst_57 : f32 to vector<16x1xf32>
    %161 = arith.divf %159, %160 : vector<16x1xf32>
    %162 = vector.broadcast %161 : vector<16x1xf32> to vector<16x128xf32>
    %163 = arith.subf %155, %162 : vector<16x128xf32>
    %164 = arith.mulf %163, %163 : vector<16x128xf32>
    %cst_58 = arith.constant dense<0.000000e+00> : vector<16xf32>
    %165 = vector.multi_reduction <add>, %164, %cst_58 [1] : vector<16x128xf32> to vector<16xf32>
    %166 = vector.shape_cast %165 : vector<16xf32> to vector<16x1xf32>
    %cst_59 = arith.constant 1.280000e+02 : f32
    %167 = vector.broadcast %cst_59 : f32 to vector<16x1xf32>
    %168 = arith.divf %166, %167 : vector<16x1xf32>
    %169 = vector.broadcast %161 : vector<16x1xf32> to vector<16x128xf32>
    %170 = arith.subf %155, %169 : vector<16x128xf32>
    %cst_60 = arith.constant 9.99999974E-6 : f32
    %171 = vector.broadcast %cst_60 : f32 to vector<16x1xf32>
    %172 = arith.addf %168, %171 : vector<16x1xf32>
    %173 = math.rsqrt %172 : vector<16x1xf32>
    %174 = vector.broadcast %173 : vector<16x1xf32> to vector<16x128xf32>
    %175 = arith.mulf %170, %174 : vector<16x128xf32>
    %176 = vector.broadcast %156 : vector<1x128xf32> to vector<16x128xf32>
    %177 = arith.mulf %175, %176 : vector<16x128xf32>
    %178 = vector.broadcast %157 : vector<1x128xf32> to vector<16x128xf32>
    %179 = arith.addf %177, %178 : vector<16x128xf32>
    %180 = vector.shape_cast %179 : vector<16x128xf32> to vector<2x8x128xf32>
    %181 = arith.truncf %180 : vector<2x8x128xf32> to vector<2x8x128xbf16>
    %c0_61 = arith.constant 0 : index
    %c0_62 = arith.constant 0 : index
    %c0_63 = arith.constant 0 : index
    %182 = vector.load %arg15[%c0_61, %c0_62, %c0_63] : memref<2x8x128xbf16, #tpu.memory_space<vmem>>, vector<2x8x128xbf16>
    tpu.vector_store %arg15[%c0_61, %c0_62, %c0_63], %181 {strides = array<i32>} : memref<2x8x128xbf16, #tpu.memory_space<vmem>>, vector<2x8x128xbf16>,
    return
  }
  func.func @transform_0(%arg0: i32) -> (i32, i32) {
    %c0_i32 = arith.constant 0 : i32
    %c0_i32_0 = arith.constant 0 : i32
    return %arg0, %c0_i32 : i32, i32
  }
  func.func @transform_1(%arg0: i32) -> (i32, i32, i32) {
    %c0_i32 = arith.constant 0 : i32
    %c0_i32_0 = arith.constant 0 : i32
    %c0_i32_1 = arith.constant 0 : i32
    return %arg0, %c0_i32, %c0_i32_0 : i32, i32, i32
  }
  func.func @transform_2(%arg0: i32) -> (i32, i32) {
    %c0_i32 = arith.constant 0 : i32
    %c0_i32_0 = arith.constant 0 : i32
    %c0_i32_1 = arith.constant 0 : i32
    return %c0_i32, %c0_i32_0 : i32, i32
  }
  func.func @transform_3(%arg0: i32) -> (i32, i32) {
    %c0_i32 = arith.constant 0 : i32
    %c0_i32_0 = arith.constant 0 : i32
    %c0_i32_1 = arith.constant 0 : i32
    return %c0_i32, %c0_i32_0 : i32, i32
  }
  func.func @transform_4(%arg0: i32) -> (i32, i32) {
    %c0_i32 = arith.constant 0 : i32
    %c0_i32_0 = arith.constant 0 : i32
    %c0_i32_1 = arith.constant 0 : i32
    return %c0_i32, %c0_i32_0 : i32, i32
  }
  func.func @transform_5(%arg0: i32) -> (i32, i32) {
    %c0_i32 = arith.constant 0 : i32
    %c0_i32_0 = arith.constant 0 : i32
    %c0_i32_1 = arith.constant 0 : i32
    return %c0_i32, %c0_i32_0 : i32, i32
  }
  func.func @transform_6(%arg0: i32) -> (i32, i32) {
    %c0_i32 = arith.constant 0 : i32
    %c0_i32_0 = arith.constant 0 : i32
    %c0_i32_1 = arith.constant 0 : i32
    return %c0_i32, %c0_i32_0 : i32, i32
  }
  func.func @transform_7(%arg0: i32) -> (i32, i32) {
    %c0_i32 = arith.constant 0 : i32
    %c0_i32_0 = arith.constant 0 : i32
    %c0_i32_1 = arith.constant 0 : i32
    return %c0_i32, %c0_i32_0 : i32, i32
  }
  func.func @transform_8(%arg0: i32) -> (i32, i32) {
    %c0_i32 = arith.constant 0 : i32
    %c0_i32_0 = arith.constant 0 : i32
    %c0_i32_1 = arith.constant 0 : i32
    return %c0_i32, %c0_i32_0 : i32, i32
  }
  func.func @transform_9(%arg0: i32) -> (i32, i32) {
    %c0_i32 = arith.constant 0 : i32
    %c0_i32_0 = arith.constant 0 : i32
    %c0_i32_1 = arith.constant 0 : i32
    return %c0_i32, %c0_i32_0 : i32, i32
  }
  func.func @transform_10(%arg0: i32) -> (i32, i32) {
    %c0_i32 = arith.constant 0 : i32
    %c0_i32_0 = arith.constant 0 : i32
    %c0_i32_1 = arith.constant 0 : i32
    return %c0_i32, %c0_i32_0 : i32, i32
  }
  func.func @transform_11(%arg0: i32) -> (i32, i32) {
    %c0_i32 = arith.constant 0 : i32
    %c0_i32_0 = arith.constant 0 : i32
    %c0_i32_1 = arith.constant 0 : i32
    return %c0_i32, %c0_i32_0 : i32, i32
  }
  func.func @transform_12(%arg0: i32) -> (i32, i32) {
    %c0_i32 = arith.constant 0 : i32
    %c0_i32_0 = arith.constant 0 : i32
    %c0_i32_1 = arith.constant 0 : i32
    return %c0_i32, %c0_i32_0 : i32, i32
  }
  func.func @transform_13(%arg0: i32) -> (i32, i32) {
    %c0_i32 = arith.constant 0 : i32
    %c0_i32_0 = arith.constant 0 : i32
    %c0_i32_1 = arith.constant 0 : i32
    return %c0_i32, %c0_i32_0 : i32, i32
  }
  func.func @transform_14(%arg0: i32) -> (i32, i32, i32) {
    %c0_i32 = arith.constant 0 : i32
    %c0_i32_0 = arith.constant 0 : i32
    %c0_i32_1 = arith.constant 0 : i32
    return %arg0, %c0_i32, %c0_i32_0 : i32, i32, i32
  }
}

module attributes {stable_mosaic.version = 11 : i64} {
  func.func @_encoder_layer_kernel(%arg0: i32, %arg1: memref<2x8xi32, #tpu.memory_space<vmem>>, %arg2: memref<2x8x128xbf16, #tpu.memory_space<vmem>>, %arg3: memref<384x128xbf16, #tpu.memory_space<vmem>>, %arg4: memref<1x384xf32, #tpu.memory_space<vmem>>, %arg5: memref<128x128xbf16, #tpu.memory_space<vmem>>, %arg6: memref<1x128xf32, #tpu.memory_space<vmem>>, %arg7: memref<1x128xf32, #tpu.memory_space<vmem>>, %arg8: memref<1x128xf32, #tpu.memory_space<vmem>>, %arg9: memref<256x128xbf16, #tpu.memory_space<vmem>>, %arg10: memref<1x256xf32, #tpu.memory_space<vmem>>, %arg11: memref<128x256xbf16, #tpu.memory_space<vmem>>, %arg12: memref<1x128xf32, #tpu.memory_space<vmem>>, %arg13: memref<1x128xf32, #tpu.memory_space<vmem>>, %arg14: memref<1x128xf32, #tpu.memory_space<vmem>>, %arg15: memref<2x8x128xbf16, #tpu.memory_space<vmem>>) attributes {dimension_semantics = [#tpu.dimension_semantics<parallel>], iteration_bounds = array<i64: 1>, scalar_prefetch = 0 : i64, scratch_operands = 0 : i64, tpu.core_type = #tpu.core_type<tc>, window_params = [{transform_indices = @transform_0, window_bounds = array<i64: 2, 8>}, {transform_indices = @transform_1, window_bounds = array<i64: 2, 8, 128>}, {pipeline_mode = #tpu.pipeline_mode<synchronous>, transform_indices = @transform_2, window_bounds = array<i64: 384, 128>}, {pipeline_mode = #tpu.pipeline_mode<synchronous>, transform_indices = @transform_3, window_bounds = array<i64: 1, 384>}, {pipeline_mode = #tpu.pipeline_mode<synchronous>, transform_indices = @transform_4, window_bounds = array<i64: 128, 128>}, {pipeline_mode = #tpu.pipeline_mode<synchronous>, transform_indices = @transform_5, window_bounds = array<i64: 1, 128>}, {pipeline_mode = #tpu.pipeline_mode<synchronous>, transform_indices = @transform_6, window_bounds = array<i64: 1, 128>}, {pipeline_mode = #tpu.pipeline_mode<synchronous>, transform_indices = @transform_7, window_bounds = array<i64: 1, 128>}, {pipeline_mode = #tpu.pipeline_mode<synchronous>, transform_indices = @transform_8, window_bounds = array<i64: 256, 128>}, {pipeline_mode = #tpu.pipeline_mode<synchronous>, transform_indices = @transform_9, window_bounds = array<i64: 1, 256>}, {pipeline_mode = #tpu.pipeline_mode<synchronous>, transform_indices = @transform_10, window_bounds = array<i64: 128, 256>}, {pipeline_mode = #tpu.pipeline_mode<synchronous>, transform_indices = @transform_11, window_bounds = array<i64: 1, 128>}, {pipeline_mode = #tpu.pipeline_mode<synchronous>, transform_indices = @transform_12, window_bounds = array<i64: 1, 128>}, {pipeline_mode = #tpu.pipeline_mode<synchronous>, transform_indices = @transform_13, window_bounds = array<i64: 1, 128>}, {transform_indices = @transform_14, window_bounds = array<i64: 2, 8, 128>}]} {
    %c0 = arith.constant 0 : index
    %c0_0 = arith.constant 0 : index
    %c0_1 = arith.constant 0 : index
    %0 = vector.load %arg2[%c0, %c0_0, %c0_1] : memref<2x8x128xbf16, #tpu.memory_space<vmem>>, vector<2x8x128xbf16>
    %1 = arith.extf %0 : vector<2x8x128xbf16> to vector<2x8x128xf32>
    %2 = vector.shape_cast %1 : vector<2x8x128xf32> to vector<16x128xf32>
    %c0_2 = arith.constant 0 : index
    %c0_3 = arith.constant 0 : index
    %3 = vector.load %arg3[%c0_2, %c0_3] : memref<384x128xbf16, #tpu.memory_space<vmem>>, vector<384x128xbf16>
    %4 = arith.truncf %2 : vector<16x128xf32> to vector<16x128xbf16>
    %cst = arith.constant dense<0.000000e+00> : vector<16x384xf32>
    %5 = tpu.matmul %4, %3, %cst {dimension_numbers = #tpu.dot_dimension_numbers<[1], [1], [0], [0], [0, 0, 1, 0], [], []>} : vector<16x128xbf16>, vector<384x128xbf16>, vector<16x384xf32> -> vector<16x384xf32>
    %c0_4 = arith.constant 0 : index
    %c0_5 = arith.constant 0 : index
    %6 = vector.load %arg4[%c0_4, %c0_5] : memref<1x384xf32, #tpu.memory_space<vmem>>, vector<1x384xf32>
    %7 = vector.broadcast %6 : vector<1x384xf32> to vector<16x384xf32>
    %8 = arith.addf %5, %7 : vector<16x384xf32>
    %9 = vector.extract_strided_slice %8 {offsets = [0, 0], sizes = [16, 128], strides = [1, 1]} : vector<16x384xf32> to vector<16x128xf32>
    %cst_6 = arith.constant 0.176776692 : f32
    %10 = vector.broadcast %cst_6 : f32 to vector<16x128xf32>
    %11 = arith.mulf %9, %10 : vector<16x128xf32>
    %12 = vector.shape_cast %11 : vector<16x128xf32> to vector<2x8x128xf32>
    %13 = vector.extract_strided_slice %8 {offsets = [0, 128], sizes = [16, 128], strides = [1, 1]} : vector<16x384xf32> to vector<16x128xf32>
    %14 = vector.shape_cast %13 : vector<16x128xf32> to vector<2x8x128xf32>
    %15 = vector.extract_strided_slice %8 {offsets = [0, 256], sizes = [16, 128], strides = [1, 1]} : vector<16x384xf32> to vector<16x128xf32>
    %16 = vector.shape_cast %15 : vector<16x128xf32> to vector<2x8x128xf32>
    %c0_7 = arith.constant 0 : index
    %c0_8 = arith.constant 0 : index
    %17 = vector.load %arg1[%c0_7, %c0_8] : memref<2x8xi32, #tpu.memory_space<vmem>>, vector<2x8xi32>
    %c0_i32 = arith.constant 0 : i32
    %18 = vector.broadcast %c0_i32 : i32 to vector<2x8xi32>
    %19 = arith.cmpi eq, %17, %18 : vector<2x8xi32>
    %cst_9 = arith.constant -1.000000e+09 : f32
    %cst_10 = arith.constant 0.000000e+00 : f32
    %20 = vector.broadcast %cst_9 : f32 to vector<2x8xf32>
    %21 = vector.broadcast %cst_10 : f32 to vector<2x8xf32>
    %22 = arith.select %19, %20, %21 : vector<2x8xi1>, vector<2x8xf32>
    %23 = vector.shape_cast %22 : vector<2x8xf32> to vector<2x1x8xf32>
    %24 = vector.extract_strided_slice %12 {offsets = [0, 0, 0], sizes = [2, 8, 32], strides = [1, 1, 1]} : vector<2x8x128xf32> to vector<2x8x32xf32>
    %25 = arith.truncf %24 : vector<2x8x32xf32> to vector<2x8x32xbf16>
    %26 = vector.extract_strided_slice %14 {offsets = [0, 0, 0], sizes = [2, 8, 32], strides = [1, 1, 1]} : vector<2x8x128xf32> to vector<2x8x32xf32>
    %27 = arith.truncf %26 : vector<2x8x32xf32> to vector<2x8x32xbf16>
    "tpu.trace_start"() <{level = 10 : i32, message = "bqd,bkd->bqk"}> : () -> ()
    %cst_11 = arith.constant dense<0.000000e+00> : vector<2x8x8xf32>
    %28 = tpu.matmul %25, %27, %cst_11 {dimension_numbers = #tpu.dot_dimension_numbers<[2], [2], [1], [1], [0, 0, 0, 1, 1, 1], [0], [0]>} : vector<2x8x32xbf16>, vector<2x8x32xbf16>, vector<2x8x8xf32> -> vector<2x8x8xf32>
    "tpu.trace_stop"() : () -> ()
    %29 = vector.broadcast %23 : vector<2x1x8xf32> to vector<2x8x8xf32>
    %30 = arith.addf %28, %29 : vector<2x8x8xf32>
    %cst_12 = arith.constant dense<0xFF800000> : vector<2x8xf32>
    %31 = vector.multi_reduction <maximumf>, %30, %cst_12 [2] : vector<2x8x8xf32> to vector<2x8xf32>
    %32 = vector.shape_cast %31 : vector<2x8xf32> to vector<2x8x1xf32>
    %33 = vector.broadcast %32 : vector<2x8x1xf32> to vector<2x8x8xf32>
    %34 = arith.subf %30, %33 : vector<2x8x8xf32>
    %35 = math.exp %34 : vector<2x8x8xf32>
    %cst_13 = arith.constant dense<0.000000e+00> : vector<2x8xf32>
    %36 = vector.multi_reduction <add>, %35, %cst_13 [2] : vector<2x8x8xf32> to vector<2x8xf32>
    %37 = vector.shape_cast %36 : vector<2x8xf32> to vector<2x8x1xf32>
    %38 = tpu.reciprocal %37 {approx = true} : vector<2x8x1xf32> -> vector<2x8x1xf32>
    %39 = vector.broadcast %38 : vector<2x8x1xf32> to vector<2x8x8xf32>
    %40 = arith.mulf %35, %39 : vector<2x8x8xf32>
    %41 = arith.truncf %40 : vector<2x8x8xf32> to vector<2x8x8xbf16>
    %42 = vector.extract_strided_slice %16 {offsets = [0, 0, 0], sizes = [2, 8, 32], strides = [1, 1, 1]} : vector<2x8x128xf32> to vector<2x8x32xf32>
    %43 = arith.truncf %42 : vector<2x8x32xf32> to vector<2x8x32xbf16>
    "tpu.trace_start"() <{level = 10 : i32, message = "bqk,bkd->bqd"}> : () -> ()
    %cst_14 = arith.constant dense<0.000000e+00> : vector<2x8x32xf32>
    %44 = tpu.matmul %41, %43, %cst_14 {dimension_numbers = #tpu.dot_dimension_numbers<[2], [1], [1], [2], [0, 0, 0, 1, 1, 2], [0], [0]>} : vector<2x8x8xbf16>, vector<2x8x32xbf16>, vector<2x8x32xf32> -> vector<2x8x32xf32>
    "tpu.trace_stop"() : () -> ()
    %45 = vector.extract_strided_slice %12 {offsets = [0, 0, 32], sizes = [2, 8, 32], strides = [1, 1, 1]} : vector<2x8x128xf32> to vector<2x8x32xf32>
    %46 = arith.truncf %45 : vector<2x8x32xf32> to vector<2x8x32xbf16>
    %47 = vector.extract_strided_slice %14 {offsets = [0, 0, 32], sizes = [2, 8, 32], strides = [1, 1, 1]} : vector<2x8x128xf32> to vector<2x8x32xf32>
    %48 = arith.truncf %47 : vector<2x8x32xf32> to vector<2x8x32xbf16>
    "tpu.trace_start"() <{level = 10 : i32, message = "bqd,bkd->bqk"}> : () -> ()
    %cst_15 = arith.constant dense<0.000000e+00> : vector<2x8x8xf32>
    %49 = tpu.matmul %46, %48, %cst_15 {dimension_numbers = #tpu.dot_dimension_numbers<[2], [2], [1], [1], [0, 0, 0, 1, 1, 1], [0], [0]>} : vector<2x8x32xbf16>, vector<2x8x32xbf16>, vector<2x8x8xf32> -> vector<2x8x8xf32>
    "tpu.trace_stop"() : () -> ()
    %50 = vector.broadcast %23 : vector<2x1x8xf32> to vector<2x8x8xf32>
    %51 = arith.addf %49, %50 : vector<2x8x8xf32>
    %cst_16 = arith.constant dense<0xFF800000> : vector<2x8xf32>
    %52 = vector.multi_reduction <maximumf>, %51, %cst_16 [2] : vector<2x8x8xf32> to vector<2x8xf32>
    %53 = vector.shape_cast %52 : vector<2x8xf32> to vector<2x8x1xf32>
    %54 = vector.broadcast %53 : vector<2x8x1xf32> to vector<2x8x8xf32>
    %55 = arith.subf %51, %54 : vector<2x8x8xf32>
    %56 = math.exp %55 : vector<2x8x8xf32>
    %cst_17 = arith.constant dense<0.000000e+00> : vector<2x8xf32>
    %57 = vector.multi_reduction <add>, %56, %cst_17 [2] : vector<2x8x8xf32> to vector<2x8xf32>
    %58 = vector.shape_cast %57 : vector<2x8xf32> to vector<2x8x1xf32>
    %59 = tpu.reciprocal %58 {approx = true} : vector<2x8x1xf32> -> vector<2x8x1xf32>
    %60 = vector.broadcast %59 : vector<2x8x1xf32> to vector<2x8x8xf32>
    %61 = arith.mulf %56, %60 : vector<2x8x8xf32>
    %62 = arith.truncf %61 : vector<2x8x8xf32> to vector<2x8x8xbf16>
    %63 = vector.extract_strided_slice %16 {offsets = [0, 0, 32], sizes = [2, 8, 32], strides = [1, 1, 1]} : vector<2x8x128xf32> to vector<2x8x32xf32>
    %64 = arith.truncf %63 : vector<2x8x32xf32> to vector<2x8x32xbf16>
    "tpu.trace_start"() <{level = 10 : i32, message = "bqk,bkd->bqd"}> : () -> ()
    %cst_18 = arith.constant dense<0.000000e+00> : vector<2x8x32xf32>
    %65 = tpu.matmul %62, %64, %cst_18 {dimension_numbers = #tpu.dot_dimension_numbers<[2], [1], [1], [2], [0, 0, 0, 1, 1, 2], [0], [0]>} : vector<2x8x8xbf16>, vector<2x8x32xbf16>, vector<2x8x32xf32> -> vector<2x8x32xf32>
    "tpu.trace_stop"() : () -> ()
    %66 = vector.extract_strided_slice %12 {offsets = [0, 0, 64], sizes = [2, 8, 32], strides = [1, 1, 1]} : vector<2x8x128xf32> to vector<2x8x32xf32>
    %67 = arith.truncf %66 : vector<2x8x32xf32> to vector<2x8x32xbf16>
    %68 = vector.extract_strided_slice %14 {offsets = [0, 0, 64], sizes = [2, 8, 32], strides = [1, 1, 1]} : vector<2x8x128xf32> to vector<2x8x32xf32>
    %69 = arith.truncf %68 : vector<2x8x32xf32> to vector<2x8x32xbf16>
    "tpu.trace_start"() <{level = 10 : i32, message = "bqd,bkd->bqk"}> : () -> ()
    %cst_19 = arith.constant dense<0.000000e+00> : vector<2x8x8xf32>
    %70 = tpu.matmul %67, %69, %cst_19 {dimension_numbers = #tpu.dot_dimension_numbers<[2], [2], [1], [1], [0, 0, 0, 1, 1, 1], [0], [0]>} : vector<2x8x32xbf16>, vector<2x8x32xbf16>, vector<2x8x8xf32> -> vector<2x8x8xf32>
    "tpu.trace_stop"() : () -> ()
    %71 = vector.broadcast %23 : vector<2x1x8xf32> to vector<2x8x8xf32>
    %72 = arith.addf %70, %71 : vector<2x8x8xf32>
    %cst_20 = arith.constant dense<0xFF800000> : vector<2x8xf32>
    %73 = vector.multi_reduction <maximumf>, %72, %cst_20 [2] : vector<2x8x8xf32> to vector<2x8xf32>
    %74 = vector.shape_cast %73 : vector<2x8xf32> to vector<2x8x1xf32>
    %75 = vector.broadcast %74 : vector<2x8x1xf32> to vector<2x8x8xf32>
    %76 = arith.subf %72, %75 : vector<2x8x8xf32>
    %77 = math.exp %76 : vector<2x8x8xf32>
    %cst_21 = arith.constant dense<0.000000e+00> : vector<2x8xf32>
    %78 = vector.multi_reduction <add>, %77, %cst_21 [2] : vector<2x8x8xf32> to vector<2x8xf32>
    %79 = vector.shape_cast %78 : vector<2x8xf32> to vector<2x8x1xf32>
    %80 = tpu.reciprocal %79 {approx = true} : vector<2x8x1xf32> -> vector<2x8x1xf32>
    %81 = vector.broadcast %80 : vector<2x8x1xf32> to vector<2x8x8xf32>
    %82 = arith.mulf %77, %81 : vector<2x8x8xf32>
    %83 = arith.truncf %82 : vector<2x8x8xf32> to vector<2x8x8xbf16>
    %84 = vector.extract_strided_slice %16 {offsets = [0, 0, 64], sizes = [2, 8, 32], strides = [1, 1, 1]} : vector<2x8x128xf32> to vector<2x8x32xf32>
    %85 = arith.truncf %84 : vector<2x8x32xf32> to vector<2x8x32xbf16>
    "tpu.trace_start"() <{level = 10 : i32, message = "bqk,bkd->bqd"}> : () -> ()
    %cst_22 = arith.constant dense<0.000000e+00> : vector<2x8x32xf32>
    %86 = tpu.matmul %83, %85, %cst_22 {dimension_numbers = #tpu.dot_dimension_numbers<[2], [1], [1], [2], [0, 0, 0, 1, 1, 2], [0], [0]>} : vector<2x8x8xbf16>, vector<2x8x32xbf16>, vector<2x8x32xf32> -> vector<2x8x32xf32>
    "tpu.trace_stop"() : () -> ()
    %87 = vector.extract_strided_slice %12 {offsets = [0, 0, 96], sizes = [2, 8, 32], strides = [1, 1, 1]} : vector<2x8x128xf32> to vector<2x8x32xf32>
    %88 = arith.truncf %87 : vector<2x8x32xf32> to vector<2x8x32xbf16>
    %89 = vector.extract_strided_slice %14 {offsets = [0, 0, 96], sizes = [2, 8, 32], strides = [1, 1, 1]} : vector<2x8x128xf32> to vector<2x8x32xf32>
    %90 = arith.truncf %89 : vector<2x8x32xf32> to vector<2x8x32xbf16>
    "tpu.trace_start"() <{level = 10 : i32, message = "bqd,bkd->bqk"}> : () -> ()
    %cst_23 = arith.constant dense<0.000000e+00> : vector<2x8x8xf32>
    %91 = tpu.matmul %88, %90, %cst_23 {dimension_numbers = #tpu.dot_dimension_numbers<[2], [2], [1], [1], [0, 0, 0, 1, 1, 1], [0], [0]>} : vector<2x8x32xbf16>, vector<2x8x32xbf16>, vector<2x8x8xf32> -> vector<2x8x8xf32>
    "tpu.trace_stop"() : () -> ()
    %92 = vector.broadcast %23 : vector<2x1x8xf32> to vector<2x8x8xf32>
    %93 = arith.addf %91, %92 : vector<2x8x8xf32>
    %cst_24 = arith.constant dense<0xFF800000> : vector<2x8xf32>
    %94 = vector.multi_reduction <maximumf>, %93, %cst_24 [2] : vector<2x8x8xf32> to vector<2x8xf32>
    %95 = vector.shape_cast %94 : vector<2x8xf32> to vector<2x8x1xf32>
    %96 = vector.broadcast %95 : vector<2x8x1xf32> to vector<2x8x8xf32>
    %97 = arith.subf %93, %96 : vector<2x8x8xf32>
    %98 = math.exp %97 : vector<2x8x8xf32>
    %cst_25 = arith.constant dense<0.000000e+00> : vector<2x8xf32>
    %99 = vector.multi_reduction <add>, %98, %cst_25 [2] : vector<2x8x8xf32> to vector<2x8xf32>
    %100 = vector.shape_cast %99 : vector<2x8xf32> to vector<2x8x1xf32>
    %101 = tpu.reciprocal %100 {approx = true} : vector<2x8x1xf32> -> vector<2x8x1xf32>
    %102 = vector.broadcast %101 : vector<2x8x1xf32> to vector<2x8x8xf32>
    %103 = arith.mulf %98, %102 : vector<2x8x8xf32>
    %104 = arith.truncf %103 : vector<2x8x8xf32> to vector<2x8x8xbf16>
    %105 = vector.extract_strided_slice %16 {offsets = [0, 0, 96], sizes = [2, 8, 32], strides = [1, 1, 1]} : vector<2x8x128xf32> to vector<2x8x32xf32>
    %106 = arith.truncf %105 : vector<2x8x32xf32> to vector<2x8x32xbf16>
    "tpu.trace_start"() <{level = 10 : i32, message = "bqk,bkd->bqd"}> : () -> ()
    %cst_26 = arith.constant dense<0.000000e+00> : vector<2x8x32xf32>
    %107 = tpu.matmul %104, %106, %cst_26 {dimension_numbers = #tpu.dot_dimension_numbers<[2], [1], [1], [2], [0, 0, 0, 1, 1, 2], [0], [0]>} : vector<2x8x8xbf16>, vector<2x8x32xbf16>, vector<2x8x32xf32> -> vector<2x8x32xf32>
    "tpu.trace_stop"() : () -> ()
    %108 = tpu.concatenate %44, %65, %86, %107 in 2 : vector<2x8x32xf32>, vector<2x8x32xf32>, vector<2x8x32xf32>, vector<2x8x32xf32> -> vector<2x8x128xf32>
    %109 = vector.shape_cast %108 : vector<2x8x128xf32> to vector<16x128xf32>
    %c0_27 = arith.constant 0 : index
    %c0_28 = arith.constant 0 : index
    %110 = vector.load %arg5[%c0_27, %c0_28] : memref<128x128xbf16, #tpu.memory_space<vmem>>, vector<128x128xbf16>
    %111 = arith.truncf %109 : vector<16x128xf32> to vector<16x128xbf16>
    %cst_29 = arith.constant dense<0.000000e+00> : vector<16x128xf32>
    %112 = tpu.matmul %111, %110, %cst_29 {dimension_numbers = #tpu.dot_dimension_numbers<[1], [1], [0], [0], [0, 0, 1, 0], [], []>} : vector<16x128xbf16>, vector<128x128xbf16>, vector<16x128xf32> -> vector<16x128xf32>
    %c0_30 = arith.constant 0 : index
    %c0_31 = arith.constant 0 : index
    %113 = vector.load %arg6[%c0_30, %c0_31] : memref<1x128xf32, #tpu.memory_space<vmem>>, vector<1x128xf32>
    %114 = vector.broadcast %113 : vector<1x128xf32> to vector<16x128xf32>
    %115 = arith.addf %112, %114 : vector<16x128xf32>
    %116 = arith.addf %2, %115 : vector<16x128xf32>
    %c0_32 = arith.constant 0 : index
    %c0_33 = arith.constant 0 : index
    %117 = vector.load %arg7[%c0_32, %c0_33] : memref<1x128xf32, #tpu.memory_space<vmem>>, vector<1x128xf32>
    %c0_34 = arith.constant 0 : index
    %c0_35 = arith.constant 0 : index
    %118 = vector.load %arg8[%c0_34, %c0_35] : memref<1x128xf32, #tpu.memory_space<vmem>>, vector<1x128xf32>
    %cst_36 = arith.constant dense<0.000000e+00> : vector<16xf32>
    %119 = vector.multi_reduction <add>, %116, %cst_36 [1] : vector<16x128xf32> to vector<16xf32>
    %120 = vector.shape_cast %119 : vector<16xf32> to vector<16x1xf32>
    %cst_37 = arith.constant 1.280000e+02 : f32
    %121 = vector.broadcast %cst_37 : f32 to vector<16x1xf32>
    %122 = arith.divf %120, %121 : vector<16x1xf32>
    %123 = vector.broadcast %122 : vector<16x1xf32> to vector<16x128xf32>
    %124 = arith.subf %116, %123 : vector<16x128xf32>
    %125 = arith.mulf %124, %124 : vector<16x128xf32>
    %cst_38 = arith.constant dense<0.000000e+00> : vector<16xf32>
    %126 = vector.multi_reduction <add>, %125, %cst_38 [1] : vector<16x128xf32> to vector<16xf32>
    %127 = vector.shape_cast %126 : vector<16xf32> to vector<16x1xf32>
    %cst_39 = arith.constant 1.280000e+02 : f32
    %128 = vector.broadcast %cst_39 : f32 to vector<16x1xf32>
    %129 = arith.divf %127, %128 : vector<16x1xf32>
    %130 = vector.broadcast %122 : vector<16x1xf32> to vector<16x128xf32>
    %131 = arith.subf %116, %130 : vector<16x128xf32>
    %cst_40 = arith.constant 9.99999974E-6 : f32
    %132 = vector.broadcast %cst_40 : f32 to vector<16x1xf32>
    %133 = arith.addf %129, %132 : vector<16x1xf32>
    %134 = math.rsqrt %133 : vector<16x1xf32>
    %135 = vector.broadcast %134 : vector<16x1xf32> to vector<16x128xf32>
    %136 = arith.mulf %131, %135 : vector<16x128xf32>
    %137 = vector.broadcast %117 : vector<1x128xf32> to vector<16x128xf32>
    %138 = arith.mulf %136, %137 : vector<16x128xf32>
    %139 = vector.broadcast %118 : vector<1x128xf32> to vector<16x128xf32>
    %140 = arith.addf %138, %139 : vector<16x128xf32>
    %c0_41 = arith.constant 0 : index
    %c0_42 = arith.constant 0 : index
    %141 = vector.load %arg9[%c0_41, %c0_42] : memref<256x128xbf16, #tpu.memory_space<vmem>>, vector<256x128xbf16>
    %142 = arith.truncf %140 : vector<16x128xf32> to vector<16x128xbf16>
    %cst_43 = arith.constant dense<0.000000e+00> : vector<16x256xf32>
    %143 = tpu.matmul %142, %141, %cst_43 {dimension_numbers = #tpu.dot_dimension_numbers<[1], [1], [0], [0], [0, 0, 1, 0], [], []>} : vector<16x128xbf16>, vector<256x128xbf16>, vector<16x256xf32> -> vector<16x256xf32>
    %c0_44 = arith.constant 0 : index
    %c0_45 = arith.constant 0 : index
    %144 = vector.load %arg10[%c0_44, %c0_45] : memref<1x256xf32, #tpu.memory_space<vmem>>, vector<1x256xf32>
    %145 = vector.broadcast %144 : vector<1x256xf32> to vector<16x256xf32>
    %146 = arith.addf %143, %145 : vector<16x256xf32>
    %cst_46 = arith.constant 0.000000e+00 : f32
    %147 = vector.broadcast %cst_46 : f32 to vector<16x256xf32>
    %148 = arith.maximumf %146, %147 : vector<16x256xf32>
    %c0_47 = arith.constant 0 : index
    %c0_48 = arith.constant 0 : index
    %149 = vector.load %arg11[%c0_47, %c0_48] : memref<128x256xbf16, #tpu.memory_space<vmem>>, vector<128x256xbf16>
    %150 = arith.truncf %148 : vector<16x256xf32> to vector<16x256xbf16>
    %cst_49 = arith.constant dense<0.000000e+00> : vector<16x128xf32>
    %151 = tpu.matmul %150, %149, %cst_49 {dimension_numbers = #tpu.dot_dimension_numbers<[1], [1], [0], [0], [0, 0, 1, 0], [], []>} : vector<16x256xbf16>, vector<128x256xbf16>, vector<16x128xf32> -> vector<16x128xf32>
    %c0_50 = arith.constant 0 : index
    %c0_51 = arith.constant 0 : index
    %152 = vector.load %arg12[%c0_50, %c0_51] : memref<1x128xf32, #tpu.memory_space<vmem>>, vector<1x128xf32>
    %153 = vector.broadcast %152 : vector<1x128xf32> to vector<16x128xf32>
    %154 = arith.addf %151, %153 : vector<16x128xf32>
    %155 = arith.addf %140, %154 : vector<16x128xf32>
    %c0_52 = arith.constant 0 : index
    %c0_53 = arith.constant 0 : index
    %156 = vector.load %arg13[%c0_52, %c0_53] : memref<1x128xf32, #tpu.memory_space<vmem>>, vector<1x128xf32>
    %c0_54 = arith.constant 0 : index
    %c0_55 = arith.constant 0 : index
    %157 = vector.load %arg14[%c0_54, %c0_55] : memref<1x128xf32, #tpu.memory_space<vmem>>, vector<1x128xf32>
    %cst_56 = arith.constant dense<0.000000e+00> : vector<16xf32>
    %158 = vector.multi_reduction <add>, %155, %cst_56 [1] : vector<16x128xf32> to vector<16xf32>
    %159 = vector.shape_cast %158 : vector<16xf32> to vector<16x1xf32>
    %cst_57 = arith.constant 1.280000e+02 : f32
    %160 = vector.broadcast %cst_57 : f32 to vector<16x1xf32>
    %161 = arith.divf %159, %160 : vector<16x1xf32>
    %162 = vector.broadcast %161 : vector<16x1xf32> to vector<16x128xf32>
    %163 = arith.subf %155, %162 : vector<16x128xf32>
    %164 = arith.mulf %163, %163 : vector<16x128xf32>
    %cst_58 = arith.constant dense<0.000000e+00> : vector<16xf32>
    %165 = vector.multi_reduction <add>, %164, %cst_58 [1] : vector<16x128xf32> to vector<16xf32>
    %166 = vector.shape_cast %165 : vector<16xf32> to vector<16x1xf32>
    %cst_59 = arith.constant 1.280000e+02 : f32
    %167 = vector.broadcast %cst_59 : f32 to vector<16x1xf32>
    %168 = arith.divf %166, %167 : vector<16x1xf32>
    %169 = vector.broadcast %161 : vector<16x1xf32> to vector<16x128xf32>
    %170 = arith.subf %155, %169 : vector<16x128xf32>
    %cst_60 = arith.constant 9.99999974E-6 : f32
    %171 = vector.broadcast %cst_60 : f32 to vector<16x1xf32>
    %172 = arith.addf %168, %171 : vector<16x1xf32>
    %173 = math.rsqrt %172 : vector<16x1xf32>
    %174 = vector.broadcast %173 : vector<16x1xf32> to vector<16x128xf32>
    %175 = arith.mulf %170, %174 : vector<16x128xf32>
    %176 = vector.broadcast %156 : vector<1x128xf32> to vector<16x128xf32>
    %177 = arith.mulf %175, %176 : vector<16x128xf32>
    %178 = vector.broadcast %157 : vector<1x128xf32> to vector<16x128xf32>
    %179 = arith.addf %177, %178 : vector<16x128xf32>
    %180 = vector.shape_cast %179 : vector<16x128xf32> to vector<2x8x128xf32>
    %181 = arith.truncf %180 : vector<2x8x128xf32> to vector<2x8x128xbf16>
    %c0_61 = arith.constant 0 : index
    %c0_62 = arith.constant 0 : index
    %c0_63 = arith.constant 0 : index
    %182 = vector.load %arg15[%c0_61, %c0_62, %c0_63] : memref<2x8x128xbf16, #tpu.memory_space<vmem>>, vector<2x8x128xbf16>
    tpu.vector_store %arg15[%c0_61, %c0_62, %c0_63], %181 {strides = array<i32>} : memref<2x8x128xbf16, #tpu.memory_space<vmem>>, vector<2x8x128xbf16>,
    return
  }
  func.func @transform_0(%arg0: i32) -> (i32, i32) {
    %c0_i32 = arith.constant 0 : i32
    %c0_i32_0 = arith.constant 0 : i32
    return %arg0, %c0_i32 : i32, i32
  }
  func.func @transform_1(%arg0: i32) -> (i32, i32, i32) {
    %c0_i32 = arith.constant 0 : i32
    %c0_i32_0 = arith.constant 0 : i32
    %c0_i32_1 = arith.constant 0 : i32
    return %arg0, %c0_i32, %c0_i32_0 : i32, i32, i32
  }
  func.func @transform_2(%arg0: i32) -> (i32, i32) {
    %c0_i32 = arith.constant 0 : i32
    %c0_i32_0 = arith.constant 0 : i32
    %c0_i32_1 = arith.constant 0 : i32
    return %c0_i32, %c0_i32_0 : i32, i32
  }
  func.func @transform_3(%arg0: i32) -> (i32, i32) {
    %c0_i32 = arith.constant 0 : i32
    %c0_i32_0 = arith.constant 0 : i32
    %c0_i32_1 = arith.constant 0 : i32
    return %c0_i32, %c0_i32_0 : i32, i32
  }
  func.func @transform_4(%arg0: i32) -> (i32, i32) {
    %c0_i32 = arith.constant 0 : i32
    %c0_i32_0 = arith.constant 0 : i32
    %c0_i32_1 = arith.constant 0 : i32
    return %c0_i32, %c0_i32_0 : i32, i32
  }
  func.func @transform_5(%arg0: i32) -> (i32, i32) {
    %c0_i32 = arith.constant 0 : i32
    %c0_i32_0 = arith.constant 0 : i32
    %c0_i32_1 = arith.constant 0 : i32
    return %c0_i32, %c0_i32_0 : i32, i32
  }
  func.func @transform_6(%arg0: i32) -> (i32, i32) {
    %c0_i32 = arith.constant 0 : i32
    %c0_i32_0 = arith.constant 0 : i32
    %c0_i32_1 = arith.constant 0 : i32
    return %c0_i32, %c0_i32_0 : i32, i32
  }
  func.func @transform_7(%arg0: i32) -> (i32, i32) {
    %c0_i32 = arith.constant 0 : i32
    %c0_i32_0 = arith.constant 0 : i32
    %c0_i32_1 = arith.constant 0 : i32
    return %c0_i32, %c0_i32_0 : i32, i32
  }
  func.func @transform_8(%arg0: i32) -> (i32, i32) {
    %c0_i32 = arith.constant 0 : i32
    %c0_i32_0 = arith.constant 0 : i32
    %c0_i32_1 = arith.constant 0 : i32
    return %c0_i32, %c0_i32_0 : i32, i32
  }
  func.func @transform_9(%arg0: i32) -> (i32, i32) {
    %c0_i32 = arith.constant 0 : i32
    %c0_i32_0 = arith.constant 0 : i32
    %c0_i32_1 = arith.constant 0 : i32
    return %c0_i32, %c0_i32_0 : i32, i32
  }
  func.func @transform_10(%arg0: i32) -> (i32, i32) {
    %c0_i32 = arith.constant 0 : i32
    %c0_i32_0 = arith.constant 0 : i32
    %c0_i32_1 = arith.constant 0 : i32
    return %c0_i32, %c0_i32_0 : i32, i32
  }
  func.func @transform_11(%arg0: i32) -> (i32, i32) {
    %c0_i32 = arith.constant 0 : i32
    %c0_i32_0 = arith.constant 0 : i32
    %c0_i32_1 = arith.constant 0 : i32
    return %c0_i32, %c0_i32_0 : i32, i32
  }
  func.func @transform_12(%arg0: i32) -> (i32, i32) {
    %c0_i32 = arith.constant 0 : i32
    %c0_i32_0 = arith.constant 0 : i32
    %c0_i32_1 = arith.constant 0 : i32
    return %c0_i32, %c0_i32_0 : i32, i32
  }
  func.func @transform_13(%arg0: i32) -> (i32, i32) {
    %c0_i32 = arith.constant 0 : i32
    %c0_i32_0 = arith.constant 0 : i32
    %c0_i32_1 = arith.constant 0 : i32
    return %c0_i32, %c0_i32_0 : i32, i32
  }
  func.func @transform_14(%arg0: i32) -> (i32, i32, i32) {
    %c0_i32 = arith.constant 0 : i32
    %c0_i32_0 = arith.constant 0 : i32
    %c0_i32_1 = arith.constant 0 : i32
    return %arg0, %c0_i32, %c0_i32_0 : i32, i32, i32
  }
}

module attributes {stable_mosaic.version = 11 : i64} {
  func.func @_final_kernel(%arg0: i32, %arg1: memref<2x8x128xbf16, #tpu.memory_space<vmem>>, %arg2: memref<1x128xf32, #tpu.memory_space<vmem>>, %arg3: memref<1x128xf32, #tpu.memory_space<vmem>>, %arg4: memref<128x128xbf16, #tpu.memory_space<vmem>>, %arg5: memref<1x128xf32, #tpu.memory_space<vmem>>, %arg6: memref<2x128xf32, #tpu.memory_space<vmem>>) attributes {dimension_semantics = [#tpu.dimension_semantics<parallel>], iteration_bounds = array<i64: 1>, scalar_prefetch = 0 : i64, scratch_operands = 0 : i64, tpu.core_type = #tpu.core_type<tc>, window_params = [{transform_indices = @transform_0, window_bounds = array<i64: 2, 8, 128>}, {pipeline_mode = #tpu.pipeline_mode<synchronous>, transform_indices = @transform_1, window_bounds = array<i64: 1, 128>}, {pipeline_mode = #tpu.pipeline_mode<synchronous>, transform_indices = @transform_2, window_bounds = array<i64: 1, 128>}, {pipeline_mode = #tpu.pipeline_mode<synchronous>, transform_indices = @transform_3, window_bounds = array<i64: 128, 128>}, {pipeline_mode = #tpu.pipeline_mode<synchronous>, transform_indices = @transform_4, window_bounds = array<i64: 1, 128>}, {transform_indices = @transform_5, window_bounds = array<i64: 2, 128>}]} {
    %c0 = arith.constant 0 : index
    %c0_0 = arith.constant 0 : index
    %c0_1 = arith.constant 0 : index
    %0 = vector.load %arg1[%c0, %c0_0, %c0_1] : memref<2x8x128xbf16, #tpu.memory_space<vmem>>, vector<2x8x128xbf16>
    %1 = arith.extf %0 : vector<2x8x128xbf16> to vector<2x8x128xf32>
    %c0_2 = arith.constant 0 : index
    %c0_3 = arith.constant 0 : index
    %2 = vector.load %arg2[%c0_2, %c0_3] : memref<1x128xf32, #tpu.memory_space<vmem>>, vector<1x128xf32>
    %c0_4 = arith.constant 0 : index
    %c0_5 = arith.constant 0 : index
    %3 = vector.load %arg3[%c0_4, %c0_5] : memref<1x128xf32, #tpu.memory_space<vmem>>, vector<1x128xf32>
    %cst = arith.constant dense<0.000000e+00> : vector<2x8xf32>
    %4 = vector.multi_reduction <add>, %1, %cst [2] : vector<2x8x128xf32> to vector<2x8xf32>
    %5 = vector.shape_cast %4 : vector<2x8xf32> to vector<2x8x1xf32>
    %cst_6 = arith.constant 1.280000e+02 : f32
    %6 = vector.broadcast %cst_6 : f32 to vector<2x8x1xf32>
    %7 = arith.divf %5, %6 : vector<2x8x1xf32>
    %8 = vector.broadcast %7 : vector<2x8x1xf32> to vector<2x8x128xf32>
    %9 = arith.subf %1, %8 : vector<2x8x128xf32>
    %10 = arith.mulf %9, %9 : vector<2x8x128xf32>
    %cst_7 = arith.constant dense<0.000000e+00> : vector<2x8xf32>
    %11 = vector.multi_reduction <add>, %10, %cst_7 [2] : vector<2x8x128xf32> to vector<2x8xf32>
    %12 = vector.shape_cast %11 : vector<2x8xf32> to vector<2x8x1xf32>
    %cst_8 = arith.constant 1.280000e+02 : f32
    %13 = vector.broadcast %cst_8 : f32 to vector<2x8x1xf32>
    %14 = arith.divf %12, %13 : vector<2x8x1xf32>
    %15 = vector.broadcast %7 : vector<2x8x1xf32> to vector<2x8x128xf32>
    %16 = arith.subf %1, %15 : vector<2x8x128xf32>
    %cst_9 = arith.constant 9.99999974E-6 : f32
    %17 = vector.broadcast %cst_9 : f32 to vector<2x8x1xf32>
    %18 = arith.addf %14, %17 : vector<2x8x1xf32>
    %19 = math.rsqrt %18 : vector<2x8x1xf32>
    %20 = vector.broadcast %19 : vector<2x8x1xf32> to vector<2x8x128xf32>
    %21 = arith.mulf %16, %20 : vector<2x8x128xf32>
    %22 = vector.shape_cast %2 : vector<1x128xf32> to vector<1x1x128xf32>
    %23 = vector.broadcast %22 : vector<1x1x128xf32> to vector<2x8x128xf32>
    %24 = arith.mulf %21, %23 : vector<2x8x128xf32>
    %25 = vector.shape_cast %3 : vector<1x128xf32> to vector<1x1x128xf32>
    %26 = vector.broadcast %25 : vector<1x1x128xf32> to vector<2x8x128xf32>
    %27 = arith.addf %24, %26 : vector<2x8x128xf32>
    %cst_10 = arith.constant dense<0.000000e+00> : vector<2x128xf32>
    %28 = vector.multi_reduction <add>, %27, %cst_10 [1] : vector<2x8x128xf32> to vector<2x128xf32>
    %cst_11 = arith.constant 8.000000e+00 : f32
    %29 = vector.broadcast %cst_11 : f32 to vector<2x128xf32>
    %30 = arith.divf %28, %29 : vector<2x128xf32>
    %c0_12 = arith.constant 0 : index
    %c0_13 = arith.constant 0 : index
    %31 = vector.load %arg4[%c0_12, %c0_13] : memref<128x128xbf16, #tpu.memory_space<vmem>>, vector<128x128xbf16>
    %32 = arith.truncf %30 : vector<2x128xf32> to vector<2x128xbf16>
    %cst_14 = arith.constant dense<0.000000e+00> : vector<2x128xf32>
    %33 = tpu.matmul %32, %31, %cst_14 {dimension_numbers = #tpu.dot_dimension_numbers<[1], [1], [0], [0], [0, 0, 1, 0], [], []>} : vector<2x128xbf16>, vector<128x128xbf16>, vector<2x128xf32> -> vector<2x128xf32>
    %c0_15 = arith.constant 0 : index
    %c0_16 = arith.constant 0 : index
    %34 = vector.load %arg5[%c0_15, %c0_16] : memref<1x128xf32, #tpu.memory_space<vmem>>, vector<1x128xf32>
    %35 = vector.broadcast %34 : vector<1x128xf32> to vector<2x128xf32>
    %36 = arith.addf %33, %35 : vector<2x128xf32>
    %c0_17 = arith.constant 0 : index
    %c0_18 = arith.constant 0 : index
    %37 = vector.load %arg6[%c0_17, %c0_18] : memref<2x128xf32, #tpu.memory_space<vmem>>, vector<2x128xf32>
    tpu.vector_store %arg6[%c0_17, %c0_18], %36 {strides = array<i32>} : memref<2x128xf32, #tpu.memory_space<vmem>>, vector<2x128xf32>,
    return
  }
  func.func @transform_0(%arg0: i32) -> (i32, i32, i32) {
    %c0_i32 = arith.constant 0 : i32
    %c0_i32_0 = arith.constant 0 : i32
    %c0_i32_1 = arith.constant 0 : i32
    return %arg0, %c0_i32, %c0_i32_0 : i32, i32, i32
  }
  func.func @transform_1(%arg0: i32) -> (i32, i32) {
    %c0_i32 = arith.constant 0 : i32
    %c0_i32_0 = arith.constant 0 : i32
    %c0_i32_1 = arith.constant 0 : i32
    return %c0_i32, %c0_i32_0 : i32, i32
  }
  func.func @transform_2(%arg0: i32) -> (i32, i32) {
    %c0_i32 = arith.constant 0 : i32
    %c0_i32_0 = arith.constant 0 : i32
    %c0_i32_1 = arith.constant 0 : i32
    return %c0_i32, %c0_i32_0 : i32, i32
  }
  func.func @transform_3(%arg0: i32) -> (i32, i32) {
    %c0_i32 = arith.constant 0 : i32
    %c0_i32_0 = arith.constant 0 : i32
    %c0_i32_1 = arith.constant 0 : i32
    return %c0_i32, %c0_i32_0 : i32, i32
  }
  func.func @transform_4(%arg0: i32) -> (i32, i32) {
    %c0_i32 = arith.constant 0 : i32
    %c0_i32_0 = arith.constant 0 : i32
    %c0_i32_1 = arith.constant 0 : i32
    return %c0_i32, %c0_i32_0 : i32, i32
  }
  func.func @transform_5(%arg0: i32) -> (i32, i32) {
    %c0_i32 = arith.constant 0 : i32
    %c0_i32_0 = arith.constant 0 : i32
    return %arg0, %c0_i32 : i32, i32
  }
}

</mosaic_0001>

<llo_original>
// kernel: text_classifier_forward.5
$region0: #{text_classifier_forward.5}
  #allocation0 [shape = 'u32[]', space=smem, size = 0x4, offset = 0x4, fixed_abs, tag = 'smem constant byte address 0x4 - core index']
  #allocation1 [shape = 'u32[144,128]{1,0:T(1,128)}', space=vmem, size = 0x12000, scoped, tag = 'internal scratch']
  %s0 = inlined_call_operand.vmem [shape: bf16[2,8,128], index: 0, kind: input, shape index: {}]
  %s1 = inlined_call_operand.vmem [shape: f32[1,128], index: 1, kind: input, shape index: {}]
  %s2 = inlined_call_operand.vmem [shape: f32[1,128], index: 2, kind: input, shape index: {}]
  %s3 = inlined_call_operand.vmem [shape: bf16[128,128], index: 3, kind: input, shape index: {}]
  %s4 = inlined_call_operand.vmem [shape: f32[1,128], index: 4, kind: input, shape index: {}]
  %s5 = inlined_call_operand.hbm [shape: f32[2,128], index: 5, kind: output, shape index: {}]
  %s6 = sld [smem:[#allocation0]]
  $region30: #{text_classifier_forward.5} parent=0
    _
  %s8 = ssub.s32 1, %s6
  %s9 = scalar_select 0, %s8, %s6
  $region1: #{text_classifier_forward.5} parent=0
    #allocation2 [shape = 'u8[1024]{0}', space=vmem, size = 0x400, scoped, tag = 'output window, operand 0, single buffered']
    #allocation3 [shape = 's32[1]{0}', space=sflag, size = 0x4, scoped, tag = 'scoped memory for text_classifier_forward.5']
    %10 = vsyncpa [#allocation3], 0
    // Predicated region
    $region2: #{text_classifier_forward.5} parent=1 // pred_check
      _
    $region3: #{text_classifier_forward.5} parent=1 // pred_check_branch
      %12 = sbr.rel (0) target = $region5
    $region4: #{text_classifier_forward.5} parent=1 // pred_region
      _
    $region5: #{text_classifier_forward.5} parent=1 // pred_fallthru
      _
    // Predicated region
    $region6: #{text_classifier_forward.5} parent=1 // pred_check
      _
    $region7: #{text_classifier_forward.5} parent=1 // pred_check_branch
      %14 = sbr.rel (0) target = $region9
    $region8: #{text_classifier_forward.5} parent=1 // pred_region
      _
    $region9: #{text_classifier_forward.5} parent=1 // pred_fallthru
      _
    // Predicated region
    $region10: #{text_classifier_forward.5} parent=1 // pred_check
      _
    $region11: #{text_classifier_forward.5} parent=1 // pred_check_branch
      %16 = sbr.rel (0) target = $region13
    $region12: #{text_classifier_forward.5} parent=1 // pred_region
      _
    $region13: #{text_classifier_forward.5} parent=1 // pred_fallthru
      _
    // Predicated region
    $region14: #{text_classifier_forward.5} parent=1 // pred_check
      _
    $region15: #{text_classifier_forward.5} parent=1 // pred_check_branch
      %18 = sbr.rel (0) target = $region17
    $region16: #{text_classifier_forward.5} parent=1 // pred_region
      _
    $region17: #{text_classifier_forward.5} parent=1 // pred_fallthru
      _
    // Predicated region
    $region18: #{text_classifier_forward.5} parent=1 // pred_check
      _
    $region19: #{text_classifier_forward.5} parent=1 // pred_check_branch
      %20 = sbr.rel (0) target = $region21
    $region20: #{text_classifier_forward.5} parent=1 // pred_region
      _
    $region21: #{text_classifier_forward.5} parent=1 // pred_fallthru
      _
    %v22 = vld [vmem:[%s0] sm:$0xf]
    %v23 = vld [vmem:[%s0 + $0x4] sm:$0xf]
    %v24 = vunpack.c.l.bf16 %v22
    %v25 = vunpack.c.l.bf16 %v23
    %v26 = vld [vmem:[%s1] sm:$0x1]
    %v27 = vld [vmem:[%s2] sm:$0x1]
    %28 = vadd.xlane.f32.xlu0 %v24
    %v29 = vpop.xlane.xlu0 %28
    %30 = vadd.xlane.f32.xlu0 %v25
    %v31 = vpop.xlane.xlu0 %30
    %v32 = vrcp.pop 128.0
    %v33 = vmul.f32 %v29, %v32
    %v34 = vmul.f32 %v31, %v32
    %v35 = vsub.f32 %v24, %v33
    %v36 = vsub.f32 %v25, %v34
    %v37 = vmul.f32 %v35, %v35
    %v38 = vmul.f32 %v36, %v36
    %39 = vadd.xlane.f32.xlu0 %v37
    %v40 = vpop.xlane.xlu0 %39
    %41 = vadd.xlane.f32.xlu0 %v38
    %v42 = vpop.xlane.xlu0 %41
    %v43 = vmul.f32 %v40, %v32
    %v44 = vmul.f32 %v42, %v32
    %v45 = vadd.f32 %v43, 1e-05
    %v46 = vadd.f32 %v44, 1e-05
    %v47 = vrsqrt.pop %v45
    %v48 = vrsqrt.pop %v46
    %v49 = vmul.f32 %v35, %v47
    %v50 = vmul.f32 %v36, %v48
    %v52 = vlaneseq
    %v53 = vshrl.u32 %v52, 7
    %v54 = vsub.s32 0, %v53
    %v55 = vrot.slane %v26, %v54
    %v57 = vmul.f32 %v49, %v55
    %v58 = vmul.f32 %v50, %v55
    %v60 = vlaneseq
    %v61 = vshrl.u32 %v60, 7
    %v62 = vsub.s32 0, %v61
    %v63 = vrot.slane %v27, %v62
    %v65 = vadd.f32 %v57, %v63
    %v66 = vadd.f32 %v58, %v63
    %v67 = vrot.slane %v65, 4
    %v68 = vadd.f32 %v65, %v67
    %v69 = vrot.slane %v68, 2
    %v70 = vadd.f32 %v68, %v69
    %v71 = vrot.slane %v70, 1
    %v72 = vadd.f32 %v70, %v71
    %v73 = vrot.slane %v66, 4
    %v74 = vadd.f32 %v66, %v73
    %v75 = vrot.slane %v74, 2
    %v76 = vadd.f32 %v74, %v75
    %v77 = vrot.slane %v76, 1
    %v78 = vadd.f32 %v76, %v77
    %v79 = vrcp.pop 8.0
    %v80 = vmul.f32 %v72, %v79
    %v81 = vmul.f32 %v78, %v79
    %v82 = vld [vmem:[%s3] sm:$0xf]
    %v83 = vld [vmem:[%s3 + $0x4] sm:$0xf]
    %v84 = vld [vmem:[%s3 + $0x8] sm:$0xf]
    %v85 = vld [vmem:[%s3 + $0xc] sm:$0xf]
    %v86 = vld [vmem:[%s3 + $0x10] sm:$0xf]
    %v87 = vld [vmem:[%s3 + $0x14] sm:$0xf]
    %v88 = vld [vmem:[%s3 + $0x18] sm:$0xf]
    %v89 = vld [vmem:[%s3 + $0x1c] sm:$0xf]
    %v90 = vld [vmem:[%s3 + $0x20] sm:$0xf]
    %v91 = vld [vmem:[%s3 + $0x24] sm:$0xf]
    %v92 = vld [vmem:[%s3 + $0x28] sm:$0xf]
    %v93 = vld [vmem:[%s3 + $0x2c] sm:$0xf]
    %v94 = vld [vmem:[%s3 + $0x30] sm:$0xf]
    %v95 = vld [vmem:[%s3 + $0x34] sm:$0xf]
    %v96 = vld [vmem:[%s3 + $0x38] sm:$0xf]
    %v97 = vld [vmem:[%s3 + $0x3c] sm:$0xf]
    %v98 = vpack.c.bf16 %v80, %v80
    %v99 = vpack.c.bf16 %v81, %v81
    %v100 = vld [vmem:[%s4] sm:$0x1]
    %v102 = vlaneseq
    %v103 = vshrl.u32 %v102, 7
    %v104 = vsub.s32 0, %v103
    %v105 = vrot.slane %v100, %v104
    %v109 = vunpack.c.l.b16 %v98
    %v110 = vunpack.c.l.b16 %v99
    %vm111 = vcmask 1041409
    %v112 = vsel %vm111, %v110, %v109
    %v113 = vpack.c.b16 %v112, %v112
    %v131 = vunpack.c.l.b16 %v82
    %v132 = vunpack.c.l.b16 %v83
    %v133 = vunpack.c.l.b16 %v84
    %v134 = vunpack.c.l.b16 %v85
    %v135 = vunpack.c.l.b16 %v86
    %v136 = vunpack.c.l.b16 %v87
    %v137 = vunpack.c.l.b16 %v88
    %v138 = vunpack.c.l.b16 %v89
    %v139 = vunpack.c.l.b16 %v90
    %v140 = vunpack.c.l.b16 %v91
    %v141 = vunpack.c.l.b16 %v92
    %v142 = vunpack.c.l.b16 %v93
    %v143 = vunpack.c.l.b16 %v94
    %v144 = vunpack.c.l.b16 %v95
    %v145 = vunpack.c.l.b16 %v96
    %v146 = vunpack.c.l.b16 %v97
    %v147 = vpack.c.b16 %v132, %v131
    %v148 = vpack.c.b16 %v134, %v133
    %v149 = vpack.c.b16 %v136, %v135
    %v150 = vpack.c.b16 %v138, %v137
    %v151 = vpack.c.b16 %v140, %v139
    %v152 = vpack.c.b16 %v142, %v141
    %v153 = vpack.c.b16 %v144, %v143
    %v154 = vpack.c.b16 %v146, %v145
    %163 = vmatprep.subr.bf16.mxu0 0
    %164 = vmatpush1.bf16.xpose.msra.mxu0 %v147
    %165 = vmatprep.subr.bf16.mxu0 0
    %166 = vmatpush1.bf16.xpose.msra.mxu0 %v148
    %167 = vmatprep.subr.bf16.mxu0 0
    %168 = vmatpush1.bf16.xpose.msra.mxu0 %v149
    %169 = vmatprep.subr.bf16.mxu0 0
    %170 = vmatpush1.bf16.xpose.msra.mxu0 %v150
    %171 = vmatprep.subr.bf16.mxu0 0
    %172 = vmatpush1.bf16.xpose.msra.mxu0 %v151
    %173 = vmatprep.subr.bf16.mxu0 0
    %174 = vmatpush1.bf16.xpose.msra.mxu0 %v152
    %175 = vmatprep.subr.bf16.mxu0 0
    %176 = vmatpush1.bf16.xpose.msra.mxu0 %v153
    %177 = vmatprep.subr.bf16.mxu0 0
    %178 = vmatpush1.bf16.xpose.msra.mxu0 %v154
    %179 = vmatprep.subr.bf16.mxu0 0
    %180 = vmatpush1.bf16.xpose.msra.mxu0 0
    %181 = vmatprep.subr.bf16.mxu0 0
    %182 = vmatpush1.bf16.xpose.msra.mxu0 0
    %183 = vmatprep.subr.bf16.mxu0 0
    %184 = vmatpush1.bf16.xpose.msra.mxu0 0
    %185 = vmatprep.subr.bf16.mxu0 0
    %186 = vmatpush1.bf16.xpose.msra.mxu0 0
    %187 = vmatprep.subr.bf16.mxu0 0
    %188 = vmatpush1.bf16.xpose.msra.mxu0 0
    %189 = vmatprep.subr.bf16.mxu0 0
    %190 = vmatpush1.bf16.xpose.msra.mxu0 0
    %191 = vmatprep.subr.bf16.mxu0 0
    %192 = vmatpush1.bf16.xpose.msra.mxu0 0
    %193 = vmatprep.subr.bf16.mxu0 0
    %194 = vmatpush1.bf16.xpose.msra.mxu0 0
    %195 = vmatprep.mubr.bf16.mxu0 0
    %196 = vmatmul.mubr.bf16.gmra.mrb[0].mxu0 %v113
    %v197 = vpop.f32.mrb[0].mxu0
    %v198 = vadd.f32 %v105, %v197
    %v199 = vpop.f32.mrb[0].mxu0
    %v200 = vpop.f32.mrb[0].mxu0
    %v201 = vpop.f32.mrb[0].mxu0
    %202 = vdwg.mxu0
    %203 = vst [vmem:[#allocation2] sm:$0x3] %v198
    // Predicated region
    $region22: #{text_classifier_forward.5} parent=1 // pred_check
      _
    $region23: #{text_classifier_forward.5} parent=1 // pred_check_branch
      %205 = sbr.rel (0) target = $region25
    $region24: #{text_classifier_forward.5} parent=1 // pred_region
      %s207 = ssub.s32 32, 32
      %208 = vsyncadd [#allocation3], %s207
      %s210 = sshll.u32 [#allocation2], 4
      %s211 = int_to_ptr.vmem [resolvable:$true] %s210
      %213 = dma.vmem_to_hbm [thread:$0]  %s211, 32, %s5, [#allocation3]
    $region25: #{text_classifier_forward.5} parent=1 // pred_fallthru
      _
    // Predicated region
    $region26: #{text_classifier_forward.5} parent=1 // pred_check
      _
    $region27: #{text_classifier_forward.5} parent=1 // pred_check_branch
      %215 = sbr.rel (0) target = $region29
    $region28: #{text_classifier_forward.5} parent=1 // pred_region
      %216 = dma.done [#allocation3], 32
    $region29: #{text_classifier_forward.5} parent=1 // pred_fallthru
      _
    %217 = vsyncpa [#allocation3], 1

// kernel: text_classifier_forward.3
$region0: #{text_classifier_forward.3}
  #allocation0 [shape = 'u32[]', space=smem, size = 0x4, offset = 0x4, fixed_abs, tag = 'smem constant byte address 0x4 - core index']
  #allocation1 [shape = 'u32[144,128]{1,0:T(1,128)}', space=vmem, size = 0x12000, scoped, tag = 'internal scratch']
  %s0 = inlined_call_operand.vmem [shape: s32[2,8], index: 0, kind: input, shape index: {}]
  %s1 = inlined_call_operand.vmem [shape: bf16[2,8,128], index: 1, kind: input, shape index: {}]
  %s2 = inlined_call_operand.vmem [shape: bf16[384,128], index: 2, kind: input, shape index: {}]
  %s3 = inlined_call_operand.hbm [shape: f32[1,384], index: 3, kind: input, shape index: {}]
  %s4 = inlined_call_operand.vmem [shape: bf16[128,128], index: 4, kind: input, shape index: {}]
  %s5 = inlined_call_operand.hbm [shape: f32[1,128], index: 5, kind: input, shape index: {}]
  %s6 = inlined_call_operand.hbm [shape: f32[1,128], index: 6, kind: input, shape index: {}]
  %s7 = inlined_call_operand.hbm [shape: f32[1,128], index: 7, kind: input, shape index: {}]
  %s8 = inlined_call_operand.hbm [shape: bf16[256,128], index: 8, kind: input, shape index: {}]
  %s9 = inlined_call_operand.vmem [shape: f32[1,256], index: 9, kind: input, shape index: {}]
  %s10 = inlined_call_operand.hbm [shape: bf16[128,256], index: 10, kind: input, shape index: {}]
  %s11 = inlined_call_operand.hbm [shape: f32[1,128], index: 11, kind: input, shape index: {}]
  %s12 = inlined_call_operand.hbm [shape: f32[1,128], index: 12, kind: input, shape index: {}]
  %s13 = inlined_call_operand.hbm [shape: f32[1,128], index: 13, kind: input, shape index: {}]
  %s14 = inlined_call_operand.vmem [shape: bf16[2,8,128], index: 14, kind: output, shape index: {}]
  %s15 = sld [smem:[#allocation0]]
  $region102: #{text_classifier_forward.3} parent=0
    _
  %s17 = ssub.s32 1, %s15
  %s18 = scalar_select 0, %s17, %s15
  $region1: #{text_classifier_forward.3} parent=0
    #allocation2 [shape = 'u8[1536]{0}', space=vmem, size = 0x800, scoped, tag = 'input window, operand 3, single buffered']
    #allocation3 [shape = 's32[1]{0}', space=sflag, size = 0x4, scoped, tag = 'scoped memory for text_classifier_forward.3']
    #allocation4 [shape = 'u8[512]{0}', space=vmem, size = 0x400, scoped, tag = 'input window, operand 5, single buffered']
    #allocation5 [shape = 's32[1]{0}', space=sflag, size = 0x4, scoped, tag = 'scoped memory for text_classifier_forward.3']
    #allocation6 [shape = 'u8[512]{0}', space=vmem, size = 0x400, scoped, tag = 'input window, operand 6, single buffered']
    #allocation7 [shape = 'u8[512]{0}', space=vmem, size = 0x400, scoped, tag = 'input window, operand 7, single buffered']
    #allocation8 [shape = 's32[1]{0}', space=sflag, size = 0x4, scoped, tag = 'scoped memory for text_classifier_forward.3']
    #allocation9 [shape = 'u8[65536]{0}', space=vmem, size = 0x10000, scoped, tag = 'input window, operand 8, single buffered']
    #allocation10 [shape = 'u8[65536]{0}', space=vmem, size = 0x10000, scoped, tag = 'input window, operand 10, single buffered']
    #allocation11 [shape = 's32[1]{0}', space=sflag, size = 0x4, scoped, tag = 'scoped memory for text_classifier_forward.3']
    #allocation12 [shape = 'u8[512]{0}', space=vmem, size = 0x400, scoped, tag = 'input window, operand 11, single buffered']
    #allocation13 [shape = 'u8[512]{0}', space=vmem, size = 0x400, scoped, tag = 'input window, operand 12, single buffered']
    #allocation14 [shape = 's32[1]{0}', space=sflag, size = 0x4, scoped, tag = 'scoped memory for text_classifier_forward.3']
    #allocation15 [shape = 'u8[512]{0}', space=vmem, size = 0x400, scoped, tag = 'input window, operand 13, single buffered']
    %19 = vsyncpa [#allocation3], 0
    %20 = vsyncpa [#allocation5], 0
    %21 = vsyncpa [#allocation8], 0
    %22 = vsyncpa [#allocation11], 0
    %23 = vsyncpa [#allocation14], 0
    // Predicated region
    $region2: #{text_classifier_forward.3} parent=1 // pred_check
      _
    $region3: #{text_classifier_forward.3} parent=1 // pred_check_branch
      %25 = sbr.rel (0) target = $region5
    $region4: #{text_classifier_forward.3} parent=1 // pred_region
      _
    $region5: #{text_classifier_forward.3} parent=1 // pred_fallthru
      _
    // Predicated region
    $region6: #{text_classifier_forward.3} parent=1 // pred_check
      _
    $region7: #{text_classifier_forward.3} parent=1 // pred_check_branch
      %27 = sbr.rel (0) target = $region9
    $region8: #{text_classifier_forward.3} parent=1 // pred_region
      _
    $region9: #{text_classifier_forward.3} parent=1 // pred_fallthru
      _
    // Predicated region
    $region10: #{text_classifier_forward.3} parent=1 // pred_check
      _
    $region11: #{text_classifier_forward.3} parent=1 // pred_check_branch
      %29 = sbr.rel (0) target = $region13
    $region12: #{text_classifier_forward.3} parent=1 // pred_region
      _
    $region13: #{text_classifier_forward.3} parent=1 // pred_fallthru
      _
    // Predicated region
    $region14: #{text_classifier_forward.3} parent=1 // pred_check
      _
    $region15: #{text_classifier_forward.3} parent=1 // pred_check_branch
      %31 = sbr.rel (0) target = $region17
    $region16: #{text_classifier_forward.3} parent=1 // pred_region
      %s33 = ssub.s32 48, 48
      %34 = vsyncadd [#allocation3], %s33
      %s36 = sshll.u32 [#allocation2], 4
      %s37 = int_to_ptr.vmem [resolvable:$true] %s36
      %39 = dma.hbm_to_vmem [thread:$0]  %s3, 48, %s37, [#allocation3]
    $region17: #{text_classifier_forward.3} parent=1 // pred_fallthru
      _
    // Predicated region
    $region18: #{text_classifier_forward.3} parent=1 // pred_check
      _
    $region19: #{text_classifier_forward.3} parent=1 // pred_check_branch
      %41 = sbr.rel (0) target = $region21
    $region20: #{text_classifier_forward.3} parent=1 // pred_region
      _
    $region21: #{text_classifier_forward.3} parent=1 // pred_fallthru
      _
    // Predicated region
    $region22: #{text_classifier_forward.3} parent=1 // pred_check
      _
    $region23: #{text_classifier_forward.3} parent=1 // pred_check_branch
      %43 = sbr.rel (0) target = $region25
    $region24: #{text_classifier_forward.3} parent=1 // pred_region
      %s45 = ssub.s32 16, 16
      %46 = vsyncadd [#allocation5], %s45
      %s48 = sshll.u32 [#allocation4], 4
      %s49 = int_to_ptr.vmem [resolvable:$true] %s48
      %51 = dma.hbm_to_vmem [thread:$0]  %s5, 16, %s49, [#allocation5]
    $region25: #{text_classifier_forward.3} parent=1 // pred_fallthru
      _
    // Predicated region
    $region26: #{text_classifier_forward.3} parent=1 // pred_check
      _
    $region27: #{text_classifier_forward.3} parent=1 // pred_check_branch
      %53 = sbr.rel (0) target = $region29
    $region28: #{text_classifier_forward.3} parent=1 // pred_region
      %s55 = ssub.s32 16, 16
      %56 = vsyncadd [#allocation5], %s55
      %s58 = sshll.u32 [#allocation6], 4
      %s59 = int_to_ptr.vmem [resolvable:$true] %s58
      %61 = dma.hbm_to_vmem [thread:$0]  %s6, 16, %s59, [#allocation5]
    $region29: #{text_classifier_forward.3} parent=1 // pred_fallthru
      _
    // Predicated region
    $region30: #{text_classifier_forward.3} parent=1 // pred_check
      _
    $region31: #{text_classifier_forward.3} parent=1 // pred_check_branch
      %63 = sbr.rel (0) target = $region33
    $region32: #{text_classifier_forward.3} parent=1 // pred_region
      %s65 = ssub.s32 16, 16
      %66 = vsyncadd [#allocation8], %s65
      %s68 = sshll.u32 [#allocation7], 4
      %s69 = int_to_ptr.vmem [resolvable:$true] %s68
      %71 = dma.hbm_to_vmem [thread:$0]  %s7, 16, %s69, [#allocation8]
    $region33: #{text_classifier_forward.3} parent=1 // pred_fallthru
      _
    // Predicated region
    $region34: #{text_classifier_forward.3} parent=1 // pred_check
      _
    $region35: #{text_classifier_forward.3} parent=1 // pred_check_branch
      %73 = sbr.rel (0) target = $region37
    $region36: #{text_classifier_forward.3} parent=1 // pred_region
      %s75 = ssub.s32 2048, 2048
      %76 = vsyncadd [#allocation8], %s75
      %s77 = sshll.u32 [#allocation9], 4
      %s78 = int_to_ptr.vmem [resolvable:$true] %s77
      %83 = dma.hbm_to_vmem [thread:$0]  %s8, 2048, %s78, [#allocation8], 64, 64, 4
    $region37: #{text_classifier_forward.3} parent=1 // pred_fallthru
      _
    // Predicated region
    $region38: #{text_classifier_forward.3} parent=1 // pred_check
      _
    $region39: #{text_classifier_forward.3} parent=1 // pred_check_branch
      %85 = sbr.rel (0) target = $region41
    $region40: #{text_classifier_forward.3} parent=1 // pred_region
      _
    $region41: #{text_classifier_forward.3} parent=1 // pred_fallthru
      _
    // Predicated region
    $region42: #{text_classifier_forward.3} parent=1 // pred_check
      _
    $region43: #{text_classifier_forward.3} parent=1 // pred_check_branch
      %87 = sbr.rel (0) target = $region45
    $region44: #{text_classifier_forward.3} parent=1 // pred_region
      %s89 = ssub.s32 2048, 2048
      %90 = vsyncadd [#allocation11], %s89
      %s91 = sshll.u32 [#allocation10], 4
      %s92 = int_to_ptr.vmem [resolvable:$true] %s91
      %97 = dma.hbm_to_vmem [thread:$0]  %s10, 2048, %s92, [#allocation11], 128, 128, 8
    $region45: #{text_classifier_forward.3} parent=1 // pred_fallthru
      _
    // Predicated region
    $region46: #{text_classifier_forward.3} parent=1 // pred_check
      _
    $region47: #{text_classifier_forward.3} parent=1 // pred_check_branch
      %99 = sbr.rel (0) target = $region49
    $region48: #{text_classifier_forward.3} parent=1 // pred_region
      %s101 = ssub.s32 16, 16
      %102 = vsyncadd [#allocation11], %s101
      %s104 = sshll.u32 [#allocation12], 4
      %s105 = int_to_ptr.vmem [resolvable:$true] %s104
      %107 = dma.hbm_to_vmem [thread:$0]  %s11, 16, %s105, [#allocation11]
    $region49: #{text_classifier_forward.3} parent=1 // pred_fallthru
      _
    // Predicated region
    $region50: #{text_classifier_forward.3} parent=1 // pred_check
      _
    $region51: #{text_classifier_forward.3} parent=1 // pred_check_branch
      %109 = sbr.rel (0) target = $region53
    $region52: #{text_classifier_forward.3} parent=1 // pred_region
      %s111 = ssub.s32 16, 16
      %112 = vsyncadd [#allocation14], %s111
      %s114 = sshll.u32 [#allocation13], 4
      %s115 = int_to_ptr.vmem [resolvable:$true] %s114
      %117 = dma.hbm_to_vmem [thread:$0]  %s12, 16, %s115, [#allocation14]
    $region53: #{text_classifier_forward.3} parent=1 // pred_fallthru
      _
    // Predicated region
    $region54: #{text_classifier_forward.3} parent=1 // pred_check
      _
    $region55: #{text_classifier_forward.3} parent=1 // pred_check_branch
      %119 = sbr.rel (0) target = $region57
    $region56: #{text_classifier_forward.3} parent=1 // pred_region
      %s121 = ssub.s32 16, 16
      %122 = vsyncadd [#allocation14], %s121
      %s124 = sshll.u32 [#allocation15], 4
      %s125 = int_to_ptr.vmem [resolvable:$true] %s124
      %127 = dma.hbm_to_vmem [thread:$0]  %s13, 16, %s125, [#allocation14]
    $region57: #{text_classifier_forward.3} parent=1 // pred_fallthru
      _
    // Predicated region
    $region58: #{text_classifier_forward.3} parent=1 // pred_check
      _
    $region59: #{text_classifier_forward.3} parent=1 // pred_check_branch
      %129 = sbr.rel (0) target = $region61
    $region60: #{text_classifier_forward.3} parent=1 // pred_region
      %130 = dma.done [#allocation3], 48
    $region61: #{text_classifier_forward.3} parent=1 // pred_fallthru
      _
    // Predicated region
    $region62: #{text_classifier_forward.3} parent=1 // pred_check
      _
    $region63: #{text_classifier_forward.3} parent=1 // pred_check_branch
      %132 = sbr.rel (0) target = $region65
    $region64: #{text_classifier_forward.3} parent=1 // pred_region
      %133 = dma.done [#allocation5], 16
    $region65: #{text_classifier_forward.3} parent=1 // pred_fallthru
      _
    // Predicated region
    $region66: #{text_classifier_forward.3} parent=1 // pred_check
      _
    $region67: #{text_classifier_forward.3} parent=1 // pred_check_branch
      %135 = sbr.rel (0) target = $region69
    $region68: #{text_classifier_forward.3} parent=1 // pred_region
      %136 = dma.done [#allocation5], 16
    $region69: #{text_classifier_forward.3} parent=1 // pred_fallthru
      _
    // Predicated region
    $region70: #{text_classifier_forward.3} parent=1 // pred_check
      _
    $region71: #{text_classifier_forward.3} parent=1 // pred_check_branch
      %138 = sbr.rel (0) target = $region73
    $region72: #{text_classifier_forward.3} parent=1 // pred_region
      %139 = dma.done [#allocation8], 16
    $region73: #{text_classifier_forward.3} parent=1 // pred_fallthru
      _
    // Predicated region
    $region74: #{text_classifier_forward.3} parent=1 // pred_check
      _
    $region75: #{text_classifier_forward.3} parent=1 // pred_check_branch
      %141 = sbr.rel (0) target = $region77
    $region76: #{text_classifier_forward.3} parent=1 // pred_region
      %142 = dma.done [#allocation8], 2048
    $region77: #{text_classifier_forward.3} parent=1 // pred_fallthru
      _
    // Predicated region
    $region78: #{text_classifier_forward.3} parent=1 // pred_check
      _
    $region79: #{text_classifier_forward.3} parent=1 // pred_check_branch
      %144 = sbr.rel (0) target = $region81
    $region80: #{text_classifier_forward.3} parent=1 // pred_region
      %145 = dma.done [#allocation11], 2048
    $region81: #{text_classifier_forward.3} parent=1 // pred_fallthru
      _
    // Predicated region
    $region82: #{text_classifier_forward.3} parent=1 // pred_check
      _
    $region83: #{text_classifier_forward.3} parent=1 // pred_check_branch
      %147 = sbr.rel (0) target = $region85
    $region84: #{text_classifier_forward.3} parent=1 // pred_region
      %148 = dma.done [#allocation11], 16
    $region85: #{text_classifier_forward.3} parent=1 // pred_fallthru
      _
    // Predicated region
    $region86: #{text_classifier_forward.3} parent=1 // pred_check
      _
    $region87: #{text_classifier_forward.3} parent=1 // pred_check_branch
      %150 = sbr.rel (0) target = $region89
    $region88: #{text_classifier_forward.3} parent=1 // pred_region
      %151 = dma.done [#allocation14], 16
    $region89: #{text_classifier_forward.3} parent=1 // pred_fallthru
      _
    // Predicated region
    $region90: #{text_classifier_forward.3} parent=1 // pred_check
      _
    $region91: #{text_classifier_forward.3} parent=1 // pred_check_branch
      %153 = sbr.rel (0) target = $region93
    $region92: #{text_classifier_forward.3} parent=1 // pred_region
      %154 = dma.done [#allocation14], 16
    $region93: #{text_classifier_forward.3} parent=1 // pred_fallthru
      _
    %v156 = vld [vmem:[%s1] sm:$0xf]
    %v157 = vld [vmem:[%s1 + $0x4] sm:$0xf]
    %v158 = vunpack.c.l.bf16 %v156
    %v159 = vunpack.c.l.bf16 %v157
    %v160 = vld [vmem:[%s2] sm:$0xf]
    %v161 = vld [vmem:[%s2 + $0x4] sm:$0xf]
    %v162 = vld [vmem:[%s2 + $0x8] sm:$0xf]
    %v163 = vld [vmem:[%s2 + $0xc] sm:$0xf]
    %v164 = vld [vmem:[%s2 + $0x10] sm:$0xf]
    %v165 = vld [vmem:[%s2 + $0x14] sm:$0xf]
    %v166 = vld [vmem:[%s2 + $0x18] sm:$0xf]
    %v167 = vld [vmem:[%s2 + $0x1c] sm:$0xf]
    %v168 = vld [vmem:[%s2 + $0x20] sm:$0xf]
    %v169 = vld [vmem:[%s2 + $0x24] sm:$0xf]
    %v170 = vld [vmem:[%s2 + $0x28] sm:$0xf]
    %v171 = vld [vmem:[%s2 + $0x2c] sm:$0xf]
    %v172 = vld [vmem:[%s2 + $0x30] sm:$0xf]
    %v173 = vld [vmem:[%s2 + $0x34] sm:$0xf]
    %v174 = vld [vmem:[%s2 + $0x38] sm:$0xf]
    %v175 = vld [vmem:[%s2 + $0x3c] sm:$0xf]
    %v176 = vld [vmem:[%s2 + $0x40] sm:$0xf]
    %v177 = vld [vmem:[%s2 + $0x44] sm:$0xf]
    %v178 = vld [vmem:[%s2 + $0x48] sm:$0xf]
    %v179 = vld [vmem:[%s2 + $0x4c] sm:$0xf]
    %v180 = vld [vmem:[%s2 + $0x50] sm:$0xf]
    %v181 = vld [vmem:[%s2 + $0x54] sm:$0xf]
    %v182 = vld [vmem:[%s2 + $0x58] sm:$0xf]
    %v183 = vld [vmem:[%s2 + $0x5c] sm:$0xf]
    %v184 = vld [vmem:[%s2 + $0x60] sm:$0xf]
    %v185 = vld [vmem:[%s2 + $0x64] sm:$0xf]
    %v186 = vld [vmem:[%s2 + $0x68] sm:$0xf]
    %v187 = vld [vmem:[%s2 + $0x6c] sm:$0xf]
    %v188 = vld [vmem:[%s2 + $0x70] sm:$0xf]
    %v189 = vld [vmem:[%s2 + $0x74] sm:$0xf]
    %v190 = vld [vmem:[%s2 + $0x78] sm:$0xf]
    %v191 = vld [vmem:[%s2 + $0x7c] sm:$0xf]
    %v192 = vld [vmem:[%s2 + $0x80] sm:$0xf]
    %v193 = vld [vmem:[%s2 + $0x84] sm:$0xf]
    %v194 = vld [vmem:[%s2 + $0x88] sm:$0xf]
    %v195 = vld [vmem:[%s2 + $0x8c] sm:$0xf]
    %v196 = vld [vmem:[%s2 + $0x90] sm:$0xf]
    %v197 = vld [vmem:[%s2 + $0x94] sm:$0xf]
    %v198 = vld [vmem:[%s2 + $0x98] sm:$0xf]
    %v199 = vld [vmem:[%s2 + $0x9c] sm:$0xf]
    %v200 = vld [vmem:[%s2 + $0xa0] sm:$0xf]
    %v201 = vld [vmem:[%s2 + $0xa4] sm:$0xf]
    %v202 = vld [vmem:[%s2 + $0xa8] sm:$0xf]
    %v203 = vld [vmem:[%s2 + $0xac] sm:$0xf]
    %v204 = vld [vmem:[%s2 + $0xb0] sm:$0xf]
    %v205 = vld [vmem:[%s2 + $0xb4] sm:$0xf]
    %v206 = vld [vmem:[%s2 + $0xb8] sm:$0xf]
    %v207 = vld [vmem:[%s2 + $0xbc] sm:$0xf]
    %v208 = vpack.c.bf16 %v159, %v158
    %v209 = vld [vmem:[#allocation2] sm:$0x7]
    %v211 = vlaneseq
    %v212 = vshrl.u32 %v211, 7
    %v213 = vsub.s32 0, %v212
    %v214 = vrot.slane %v209, %v213
    %v215 = vlaneseq
    %v216 = vshrl.u32 %v215, 7
    %v217 = vsub.s32 1, %v216
    %v218 = vrot.slane %v209, %v217
    %v219 = vlaneseq
    %v220 = vshrl.u32 %v219, 7
    %v221 = vsub.s32 2, %v220
    %v222 = vrot.slane %v209, %v221
    %v274 = vunpack.c.l.b16 %v160
    %v275 = vunpack.c.l.b16 %v161
    %v276 = vunpack.c.l.b16 %v162
    %v277 = vunpack.c.l.b16 %v163
    %v278 = vunpack.c.l.b16 %v164
    %v279 = vunpack.c.l.b16 %v165
    %v280 = vunpack.c.l.b16 %v166
    %v281 = vunpack.c.l.b16 %v167
    %v282 = vunpack.c.l.b16 %v168
    %v283 = vunpack.c.l.b16 %v169
    %v284 = vunpack.c.l.b16 %v170
    %v285 = vunpack.c.l.b16 %v171
    %v286 = vunpack.c.l.b16 %v172
    %v287 = vunpack.c.l.b16 %v173
    %v288 = vunpack.c.l.b16 %v174
    %v289 = vunpack.c.l.b16 %v175
    %v290 = vunpack.c.l.b16 %v176
    %v291 = vunpack.c.l.b16 %v177
    %v292 = vunpack.c.l.b16 %v178
    %v293 = vunpack.c.l.b16 %v179
    %v294 = vunpack.c.l.b16 %v180
    %v295 = vunpack.c.l.b16 %v181
    %v296 = vunpack.c.l.b16 %v182
    %v297 = vunpack.c.l.b16 %v183
    %v298 = vunpack.c.l.b16 %v184
    %v299 = vunpack.c.l.b16 %v185
    %v300 = vunpack.c.l.b16 %v186
    %v301 = vunpack.c.l.b16 %v187
    %v302 = vunpack.c.l.b16 %v188
    %v303 = vunpack.c.l.b16 %v189
    %v304 = vunpack.c.l.b16 %v190
    %v305 = vunpack.c.l.b16 %v191
    %v306 = vunpack.c.l.b16 %v192
    %v307 = vunpack.c.l.b16 %v193
    %v308 = vunpack.c.l.b16 %v194
    %v309 = vunpack.c.l.b16 %v195
    %v310 = vunpack.c.l.b16 %v196
    %v311 = vunpack.c.l.b16 %v197
    %v312 = vunpack.c.l.b16 %v198
    %v313 = vunpack.c.l.b16 %v199
    %v314 = vunpack.c.l.b16 %v200
    %v315 = vunpack.c.l.b16 %v201
    %v316 = vunpack.c.l.b16 %v202
    %v317 = vunpack.c.l.b16 %v203
    %v318 = vunpack.c.l.b16 %v204
    %v319 = vunpack.c.l.b16 %v205
    %v320 = vunpack.c.l.b16 %v206
    %v321 = vunpack.c.l.b16 %v207
    %v322 = vpack.c.b16 %v275, %v274
    %v323 = vpack.c.b16 %v277, %v276
    %v324 = vpack.c.b16 %v279, %v278
    %v325 = vpack.c.b16 %v281, %v280
    %v326 = vpack.c.b16 %v283, %v282
    %v327 = vpack.c.b16 %v285, %v284
    %v328 = vpack.c.b16 %v287, %v286
    %v329 = vpack.c.b16 %v289, %v288
    %v330 = vpack.c.b16 %v291, %v290
    %v331 = vpack.c.b16 %v293, %v292
    %v332 = vpack.c.b16 %v295, %v294
    %v333 = vpack.c.b16 %v297, %v296
    %v334 = vpack.c.b16 %v299, %v298
    %v335 = vpack.c.b16 %v301, %v300
    %v336 = vpack.c.b16 %v303, %v302
    %v337 = vpack.c.b16 %v305, %v304
    %v338 = vpack.c.b16 %v307, %v306
    %v339 = vpack.c.b16 %v309, %v308
    %v340 = vpack.c.b16 %v311, %v310
    %v341 = vpack.c.b16 %v313, %v312
    %v342 = vpack.c.b16 %v315, %v314
    %v343 = vpack.c.b16 %v317, %v316
    %v344 = vpack.c.b16 %v319, %v318
    %v345 = vpack.c.b16 %v321, %v320
    %370 = vmatprep.subr.bf16.mxu0 0
    %371 = vmatpush1.bf16.xpose.msra.mxu0 %v322
    %372 = vmatprep.subr.bf16.mxu0 0
    %373 = vmatpush1.bf16.xpose.msra.mxu0 %v323
    %374 = vmatprep.subr.bf16.mxu0 0
    %375 = vmatpush1.bf16.xpose.msra.mxu0 %v324
    %376 = vmatprep.subr.bf16.mxu0 0
    %377 = vmatpush1.bf16.xpose.msra.mxu0 %v325
    %378 = vmatprep.subr.bf16.mxu0 0
    %379 = vmatpush1.bf16.xpose.msra.mxu0 %v326
    %380 = vmatprep.subr.bf16.mxu0 0
    %381 = vmatpush1.bf16.xpose.msra.mxu0 %v327
    %382 = vmatprep.subr.bf16.mxu0 0
    %383 = vmatpush1.bf16.xpose.msra.mxu0 %v328
    %384 = vmatprep.subr.bf16.mxu0 0
    %385 = vmatpush1.bf16.xpose.msra.mxu0 %v329
    %386 = vmatprep.subr.bf16.mxu0 0
    %387 = vmatpush1.bf16.xpose.msra.mxu0 %v330
    %388 = vmatprep.subr.bf16.mxu0 0
    %389 = vmatpush1.bf16.xpose.msra.mxu0 %v331
    %390 = vmatprep.subr.bf16.mxu0 0
    %391 = vmatpush1.bf16.xpose.msra.mxu0 %v332
    %392 = vmatprep.subr.bf16.mxu0 0
    %393 = vmatpush1.bf16.xpose.msra.mxu0 %v333
    %394 = vmatprep.subr.bf16.mxu0 0
    %395 = vmatpush1.bf16.xpose.msra.mxu0 %v334
    %396 = vmatprep.subr.bf16.mxu0 0
    %397 = vmatpush1.bf16.xpose.msra.mxu0 %v335
    %398 = vmatprep.subr.bf16.mxu0 0
    %399 = vmatpush1.bf16.xpose.msra.mxu0 %v336
    %400 = vmatprep.subr.bf16.mxu0 0
    %401 = vmatpush1.bf16.xpose.msra.mxu0 %v337
    %402 = vmatprep.mubr.bf16.mxu0 0
    %403 = vmatmul.mubr.bf16.gmra.mrb[0].mxu0 %v208
    %v404 = vpop.f32.mrb[0].mxu0
    %v405 = vadd.f32 %v214, %v404
    %v406 = vpop.f32.mrb[0].mxu0
    %v407 = vadd.f32 %v218, %v406
    %v408 = vpop.f32.mrb[0].mxu0
    %v409 = vadd.f32 %v214, %v408
    %v410 = vpop.f32.mrb[0].mxu0
    %v411 = vadd.f32 %v218, %v410
    %412 = vdwg.mxu0
    %413 = vmatprep.subr.bf16.mxu0 0
    %414 = vmatpush1.bf16.xpose.msra.mxu0 %v338
    %415 = vmatprep.subr.bf16.mxu0 0
    %416 = vmatpush1.bf16.xpose.msra.mxu0 %v339
    %417 = vmatprep.subr.bf16.mxu0 0
    %418 = vmatpush1.bf16.xpose.msra.mxu0 %v340
    %419 = vmatprep.subr.bf16.mxu0 0
    %420 = vmatpush1.bf16.xpose.msra.mxu0 %v341
    %421 = vmatprep.subr.bf16.mxu0 0
    %422 = vmatpush1.bf16.xpose.msra.mxu0 %v342
    %423 = vmatprep.subr.bf16.mxu0 0
    %424 = vmatpush1.bf16.xpose.msra.mxu0 %v343
    %425 = vmatprep.subr.bf16.mxu0 0
    %426 = vmatpush1.bf16.xpose.msra.mxu0 %v344
    %427 = vmatprep.subr.bf16.mxu0 0
    %428 = vmatpush1.bf16.xpose.msra.mxu0 %v345
    %429 = vmatprep.subr.bf16.mxu0 0
    %430 = vmatpush1.bf16.xpose.msra.mxu0 0
    %431 = vmatprep.subr.bf16.mxu0 0
    %432 = vmatpush1.bf16.xpose.msra.mxu0 0
    %433 = vmatprep.subr.bf16.mxu0 0
    %434 = vmatpush1.bf16.xpose.msra.mxu0 0
    %435 = vmatprep.subr.bf16.mxu0 0
    %436 = vmatpush1.bf16.xpose.msra.mxu0 0
    %437 = vmatprep.subr.bf16.mxu0 0
    %438 = vmatpush1.bf16.xpose.msra.mxu0 0
    %439 = vmatprep.subr.bf16.mxu0 0
    %440 = vmatpush1.bf16.xpose.msra.mxu0 0
    %441 = vmatprep.subr.bf16.mxu0 0
    %442 = vmatpush1.bf16.xpose.msra.mxu0 0
    %443 = vmatprep.subr.bf16.mxu0 0
    %444 = vmatpush1.bf16.xpose.msra.mxu0 0
    %445 = vmatprep.mubr.bf16.mxu0 0
    %446 = vmatmul.mubr.bf16.gmra.mrb[0].mxu0 %v208
    %v447 = vpop.f32.mrb[0].mxu0
    %v448 = vadd.f32 %v222, %v447
    %v449 = vpop.f32.mrb[0].mxu0
    %v450 = vpop.f32.mrb[0].mxu0
    %v451 = vadd.f32 %v222, %v450
    %v452 = vpop.f32.mrb[0].mxu0
    %453 = vdwg.mxu0
    %v454 = vmul.f32 %v405, 0.17677669
    %v455 = vmul.f32 %v409, 0.17677669
    %v456 = vld [vmem:[%s0] sm:$0x3]
    %vm457 = vcmp.eq.s32.totalorder %v456, 0
    %v458 = vsel %vm457, -1e+09, 0.0
    %v461 = vunpack.c.l.s4 1966171168
    %v462 = vunpack.c.0.s8 %v461
    %v463 = vlaneseq
    %v464 = vshrl.u32 %v463, 7
    %v465 = vsub.s32 %v462, %v464
    %v466 = vrot.slane %v458, %v465
    %v467 = vcombine.high %v466, %v466
    %v469 = vunpack.c.l.s4 1966171168
    %v470 = vunpack.c.0.s8 %v469
    %v471 = vlaneseq
    %v472 = vshrl.u32 %v471, 7
    %v473 = vsub.s32 %v470, %v472
    %v474 = vrot.slane %v466, %v473
    %v476 = vunpack.c.l.s4 1966171168
    %v477 = vunpack.c.0.s8 %v476
    %v478 = vlaneseq
    %v479 = vshrl.u32 %v478, 7
    %v480 = vsub.s32 %v477, %v479
    %v481 = vrot.slane %v467, %v480
    %v482 = vpack.c.bf16 %v454, %v454
    %v483 = vpack.c.bf16 %v455, %v455
    %v484 = vpack.c.bf16 %v407, %v407
    %v485 = vpack.c.bf16 %v411, %v411
    %v486 = vlaneseq
    %v487 = vshrl.u32 %v486, 7
    %v488 = vsub.s32 0, %v487
    %v489 = vrot.slane %v474, %v488
    %v490 = vlaneseq
    %v491 = vshrl.u32 %v490, 7
    %v492 = vsub.s32 0, %v491
    %v493 = vrot.slane %v481, %v492
    %vm496 = vcmask 261120
    %v498 = vsel %vm496, %v482, 0
    %v501 = vsel %vm496, %v484, 0
    %503 = vmatprep.subr.bf16.mxu0 0
    %504 = vmatpush1.bf16.xpose.msra.mxu0 %v501
    %505 = vmatprep.subr.bf16.mxu0 0
    %506 = vmatpush1.bf16.xpose.msra.mxu0 0
    %507 = vmatprep.subr.bf16.mxu0 0
    %508 = vmatpush1.bf16.xpose.msra.mxu0 0
    %509 = vmatprep.subr.bf16.mxu0 0
    %510 = vmatpush1.bf16.xpose.msra.mxu0 0
    %511 = vmatprep.subr.bf16.mxu0 0
    %512 = vmatpush1.bf16.xpose.msra.mxu0 0
    %513 = vmatprep.subr.bf16.mxu0 0
    %514 = vmatpush1.bf16.xpose.msra.mxu0 0
    %515 = vmatprep.subr.bf16.mxu0 0
    %516 = vmatpush1.bf16.xpose.msra.mxu0 0
    %517 = vmatprep.subr.bf16.mxu0 0
    %518 = vmatpush1.bf16.xpose.msra.mxu0 0
    %519 = vmatprep.subr.bf16.mxu0 0
    %520 = vmatpush1.bf16.xpose.msra.mxu0 0
    %521 = vmatprep.subr.bf16.mxu0 0
    %522 = vmatpush1.bf16.xpose.msra.mxu0 0
    %523 = vmatprep.subr.bf16.mxu0 0
    %524 = vmatpush1.bf16.xpose.msra.mxu0 0
    %525 = vmatprep.subr.bf16.mxu0 0
    %526 = vmatpush1.bf16.xpose.msra.mxu0 0
    %527 = vmatprep.subr.bf16.mxu0 0
    %528 = vmatpush1.bf16.xpose.msra.mxu0 0
    %529 = vmatprep.subr.bf16.mxu0 0
    %530 = vmatpush1.bf16.xpose.msra.mxu0 0
    %531 = vmatprep.subr.bf16.mxu0 0
    %532 = vmatpush1.bf16.xpose.msra.mxu0 0
    %533 = vmatprep.subr.bf16.mxu0 0
    %534 = vmatpush1.bf16.xpose.msra.mxu0 0
    %535 = vmatprep.mubr.bf16.mxu0 0
    %536 = vmatmul.mubr.bf16.gmra.mrb[0].mxu0 %v498
    %v537 = vpop.f32.mrb[0].mxu0
    %v538 = vadd.f32 %v489, %v537
    %v539 = vpop.f32.mrb[0].mxu0
    %v540 = vpop.f32.mrb[0].mxu0
    %v541 = vpop.f32.mrb[0].mxu0
    %542 = vdwg.mxu0
    %v544 = vsel %vm496, %v483, 0
    %v547 = vsel %vm496, %v485, 0
    %549 = vmatprep.subr.bf16.mxu0 0
    %550 = vmatpush1.bf16.xpose.msra.mxu0 %v547
    %551 = vmatprep.subr.bf16.mxu0 0
    %552 = vmatpush1.bf16.xpose.msra.mxu0 0
    %553 = vmatprep.subr.bf16.mxu0 0
    %554 = vmatpush1.bf16.xpose.msra.mxu0 0
    %555 = vmatprep.subr.bf16.mxu0 0
    %556 = vmatpush1.bf16.xpose.msra.mxu0 0
    %557 = vmatprep.subr.bf16.mxu0 0
    %558 = vmatpush1.bf16.xpose.msra.mxu0 0
    %559 = vmatprep.subr.bf16.mxu0 0
    %560 = vmatpush1.bf16.xpose.msra.mxu0 0
    %561 = vmatprep.subr.bf16.mxu0 0
    %562 = vmatpush1.bf16.xpose.msra.mxu0 0
    %563 = vmatprep.subr.bf16.mxu0 0
    %564 = vmatpush1.bf16.xpose.msra.mxu0 0
    %565 = vmatprep.subr.bf16.mxu0 0
    %566 = vmatpush1.bf16.xpose.msra.mxu0 0
    %567 = vmatprep.subr.bf16.mxu0 0
    %568 = vmatpush1.bf16.xpose.msra.mxu0 0
    %569 = vmatprep.subr.bf16.mxu0 0
    %570 = vmatpush1.bf16.xpose.msra.mxu0 0
    %571 = vmatprep.subr.bf16.mxu0 0
    %572 = vmatpush1.bf16.xpose.msra.mxu0 0
    %573 = vmatprep.subr.bf16.mxu0 0
    %574 = vmatpush1.bf16.xpose.msra.mxu0 0
    %575 = vmatprep.subr.bf16.mxu0 0
    %576 = vmatpush1.bf16.xpose.msra.mxu0 0
    %577 = vmatprep.subr.bf16.mxu0 0
    %578 = vmatpush1.bf16.xpose.msra.mxu0 0
    %579 = vmatprep.subr.bf16.mxu0 0
    %580 = vmatpush1.bf16.xpose.msra.mxu0 0
    %581 = vmatprep.mubr.bf16.mxu0 0
    %582 = vmatmul.mubr.bf16.gmra.mrb[0].mxu0 %v544
    %v583 = vpop.f32.mrb[0].mxu0
    %v584 = vadd.f32 %v493, %v583
    %v585 = vpop.f32.mrb[0].mxu0
    %v586 = vpop.f32.mrb[0].mxu0
    %v587 = vpop.f32.mrb[0].mxu0
    %588 = vdwg.mxu0
    %vm589 = vcmask 64512
    %v590 = vsel %vm589, %v538, -inf
    %591 = vmax.xlane.f32.xlu0 %v590
    %v592 = vpop.xlane.xlu0 %591
    %v593 = vsel %vm589, %v584, -inf
    %594 = vmax.xlane.f32.xlu0 %v593
    %v595 = vpop.xlane.xlu0 %594
    %v596 = vsub.f32 %v538, %v592
    %v597 = vsub.f32 %v584, %v595
    %v598 = vmul.f32 %v596, 1.442695
    %v599 = vpow.pop %v598
    %v600 = vmul.f32 %v597, 1.442695
    %v601 = vpow.pop %v600
    %v602 = vsel %vm589, %v599, 0.0
    %603 = vadd.xlane.f32.xlu0 %v602
    %v604 = vpop.xlane.xlu0 %603
    %v605 = vsel %vm589, %v601, 0.0
    %606 = vadd.xlane.f32.xlu0 %v605
    %v607 = vpop.xlane.xlu0 %606
    %v608 = vrcp.pop %v604
    %v609 = vrcp.pop %v607
    %v610 = vmul.f32 %v599, %v608
    %v611 = vmul.f32 %v601, %v609
    %v612 = vpack.c.bf16 %v610, %v610
    %v613 = vpack.c.bf16 %v611, %v611
    %v614 = vpack.c.bf16 %v448, %v448
    %v615 = vpack.c.bf16 %v451, %v451
    %v617 = vsel %vm589, %v612, 0
    %vm619 = vcmask 1043456
    %v621 = vsel %vm619, %v614, 0
    %623 = vmatprep.subr.bf16.mxu0 0
    %624 = vmatpush1.bf16.msra.mxu0 %v621
    %625 = vmatprep.subr.bf16.mxu0 0
    %626 = vmatpush1.bf16.msra.mxu0 0
    %627 = vmatprep.subr.bf16.mxu0 0
    %628 = vmatpush1.bf16.msra.mxu0 0
    %629 = vmatprep.subr.bf16.mxu0 0
    %630 = vmatpush1.bf16.msra.mxu0 0
    %631 = vmatprep.subr.bf16.mxu0 0
    %632 = vmatpush1.bf16.msra.mxu0 0
    %633 = vmatprep.subr.bf16.mxu0 0
    %634 = vmatpush1.bf16.msra.mxu0 0
    %635 = vmatprep.subr.bf16.mxu0 0
    %636 = vmatpush1.bf16.msra.mxu0 0
    %637 = vmatprep.subr.bf16.mxu0 0
    %638 = vmatpush1.bf16.msra.mxu0 0
    %639 = vmatprep.subr.bf16.mxu0 0
    %640 = vmatpush1.bf16.msra.mxu0 0
    %641 = vmatprep.subr.bf16.mxu0 0
    %642 = vmatpush1.bf16.msra.mxu0 0
    %643 = vmatprep.subr.bf16.mxu0 0
    %644 = vmatpush1.bf16.msra.mxu0 0
    %645 = vmatprep.subr.bf16.mxu0 0
    %646 = vmatpush1.bf16.msra.mxu0 0
    %647 = vmatprep.subr.bf16.mxu0 0
    %648 = vmatpush1.bf16.msra.mxu0 0
    %649 = vmatprep.subr.bf16.mxu0 0
    %650 = vmatpush1.bf16.msra.mxu0 0
    %651 = vmatprep.subr.bf16.mxu0 0
    %652 = vmatpush1.bf16.msra.mxu0 0
    %653 = vmatprep.subr.bf16.mxu0 0
    %654 = vmatpush1.bf16.msra.mxu0 0
    %655 = vmatprep.mubr.bf16.mxu0 0
    %656 = vmatmul.mubr.bf16.gmra.mrb[0].mxu0 %v617
    %v657 = vpop.f32.mrb[0].mxu0
    %v658 = vadd.f32 0.0, %v657
    %v659 = vpop.f32.mrb[0].mxu0
    %v660 = vpop.f32.mrb[0].mxu0
    %v661 = vpop.f32.mrb[0].mxu0
    %662 = vdwg.mxu0
    %v664 = vsel %vm589, %v613, 0
    %v667 = vsel %vm619, %v615, 0
    %669 = vmatprep.subr.bf16.mxu0 0
    %670 = vmatpush1.bf16.msra.mxu0 %v667
    %671 = vmatprep.subr.bf16.mxu0 0
    %672 = vmatpush1.bf16.msra.mxu0 0
    %673 = vmatprep.subr.bf16.mxu0 0
    %674 = vmatpush1.bf16.msra.mxu0 0
    %675 = vmatprep.subr.bf16.mxu0 0
    %676 = vmatpush1.bf16.msra.mxu0 0
    %677 = vmatprep.subr.bf16.mxu0 0
    %678 = vmatpush1.bf16.msra.mxu0 0
    %679 = vmatprep.subr.bf16.mxu0 0
    %680 = vmatpush1.bf16.msra.mxu0 0
    %681 = vmatprep.subr.bf16.mxu0 0
    %682 = vmatpush1.bf16.msra.mxu0 0
    %683 = vmatprep.subr.bf16.mxu0 0
    %684 = vmatpush1.bf16.msra.mxu0 0
    %685 = vmatprep.subr.bf16.mxu0 0
    %686 = vmatpush1.bf16.msra.mxu0 0
    %687 = vmatprep.subr.bf16.mxu0 0
    %688 = vmatpush1.bf16.msra.mxu0 0
    %689 = vmatprep.subr.bf16.mxu0 0
    %690 = vmatpush1.bf16.msra.mxu0 0
    %691 = vmatprep.subr.bf16.mxu0 0
    %692 = vmatpush1.bf16.msra.mxu0 0
    %693 = vmatprep.subr.bf16.mxu0 0
    %694 = vmatpush1.bf16.msra.mxu0 0
    %695 = vmatprep.subr.bf16.mxu0 0
    %696 = vmatpush1.bf16.msra.mxu0 0
    %697 = vmatprep.subr.bf16.mxu0 0
    %698 = vmatpush1.bf16.msra.mxu0 0
    %699 = vmatprep.subr.bf16.mxu0 0
    %700 = vmatpush1.bf16.msra.mxu0 0
    %701 = vmatprep.mubr.bf16.mxu0 0
    %702 = vmatmul.mubr.bf16.gmra.mrb[0].mxu0 %v664
    %v703 = vpop.f32.mrb[0].mxu0
    %v704 = vadd.f32 0.0, %v703
    %v705 = vpop.f32.mrb[0].mxu0
    %v706 = vpop.f32.mrb[0].mxu0
    %v707 = vpop.f32.mrb[0].mxu0
    %708 = vdwg.mxu0
    %710 = vrot.lane.b32.xlu0 %v482, 96
    %v711 = vpop.permute.xlu0 %710
    %713 = vrot.lane.b32.xlu0 %v484, 96
    %v714 = vpop.permute.xlu0 %713
    %v716 = vsel %vm496, %v711, 0
    %v719 = vsel %vm496, %v714, 0
    %721 = vmatprep.subr.bf16.mxu0 0
    %722 = vmatpush1.bf16.xpose.msra.mxu0 %v719
    %723 = vmatprep.subr.bf16.mxu0 0
    %724 = vmatpush1.bf16.xpose.msra.mxu0 0
    %725 = vmatprep.subr.bf16.mxu0 0
    %726 = vmatpush1.bf16.xpose.msra.mxu0 0
    %727 = vmatprep.subr.bf16.mxu0 0
    %728 = vmatpush1.bf16.xpose.msra.mxu0 0
    %729 = vmatprep.subr.bf16.mxu0 0
    %730 = vmatpush1.bf16.xpose.msra.mxu0 0
    %731 = vmatprep.subr.bf16.mxu0 0
    %732 = vmatpush1.bf16.xpose.msra.mxu0 0
    %733 = vmatprep.subr.bf16.mxu0 0
    %734 = vmatpush1.bf16.xpose.msra.mxu0 0
    %735 = vmatprep.subr.bf16.mxu0 0
    %736 = vmatpush1.bf16.xpose.msra.mxu0 0
    %737 = vmatprep.subr.bf16.mxu0 0
    %738 = vmatpush1.bf16.xpose.msra.mxu0 0
    %739 = vmatprep.subr.bf16.mxu0 0
    %740 = vmatpush1.bf16.xpose.msra.mxu0 0
    %741 = vmatprep.subr.bf16.mxu0 0
    %742 = vmatpush1.bf16.xpose.msra.mxu0 0
    %743 = vmatprep.subr.bf16.mxu0 0
    %744 = vmatpush1.bf16.xpose.msra.mxu0 0
    %745 = vmatprep.subr.bf16.mxu0 0
    %746 = vmatpush1.bf16.xpose.msra.mxu0 0
    %747 = vmatprep.subr.bf16.mxu0 0
    %748 = vmatpush1.bf16.xpose.msra.mxu0 0
    %749 = vmatprep.subr.bf16.mxu0 0
    %750 = vmatpush1.bf16.xpose.msra.mxu0 0
    %751 = vmatprep.subr.bf16.mxu0 0
    %752 = vmatpush1.bf16.xpose.msra.mxu0 0
    %753 = vmatprep.mubr.bf16.mxu0 0
    %754 = vmatmul.mubr.bf16.gmra.mrb[0].mxu0 %v716
    %v755 = vpop.f32.mrb[0].mxu0
    %v756 = vadd.f32 %v489, %v755
    %v757 = vpop.f32.mrb[0].mxu0
    %v758 = vpop.f32.mrb[0].mxu0
    %v759 = vpop.f32.mrb[0].mxu0
    %760 = vdwg.mxu0
    %762 = vrot.lane.b32.xlu0 %v483, 96
    %v763 = vpop.permute.xlu0 %762
    %765 = vrot.lane.b32.xlu0 %v485, 96
    %v766 = vpop.permute.xlu0 %765
    %v768 = vsel %vm496, %v763, 0
    %v771 = vsel %vm496, %v766, 0
    %773 = vmatprep.subr.bf16.mxu0 0
    %774 = vmatpush1.bf16.xpose.msra.mxu0 %v771
    %775 = vmatprep.subr.bf16.mxu0 0
    %776 = vmatpush1.bf16.xpose.msra.mxu0 0
    %777 = vmatprep.subr.bf16.mxu0 0
    %778 = vmatpush1.bf16.xpose.msra.mxu0 0
    %779 = vmatprep.subr.bf16.mxu0 0
    %780 = vmatpush1.bf16.xpose.msra.mxu0 0
    %781 = vmatprep.subr.bf16.mxu0 0
    %782 = vmatpush1.bf16.xpose.msra.mxu0 0
    %783 = vmatprep.subr.bf16.mxu0 0
    %784 = vmatpush1.bf16.xpose.msra.mxu0 0
    %785 = vmatprep.subr.bf16.mxu0 0
    %786 = vmatpush1.bf16.xpose.msra.mxu0 0
    %787 = vmatprep.subr.bf16.mxu0 0
    %788 = vmatpush1.bf16.xpose.msra.mxu0 0
    %789 = vmatprep.subr.bf16.mxu0 0
    %790 = vmatpush1.bf16.xpose.msra.mxu0 0
    %791 = vmatprep.subr.bf16.mxu0 0
    %792 = vmatpush1.bf16.xpose.msra.mxu0 0
    %793 = vmatprep.subr.bf16.mxu0 0
    %794 = vmatpush1.bf16.xpose.msra.mxu0 0
    %795 = vmatprep.subr.bf16.mxu0 0
    %796 = vmatpush1.bf16.xpose.msra.mxu0 0
    %797 = vmatprep.subr.bf16.mxu0 0
    %798 = vmatpush1.bf16.xpose.msra.mxu0 0
    %799 = vmatprep.subr.bf16.mxu0 0
    %800 = vmatpush1.bf16.xpose.msra.mxu0 0
    %801 = vmatprep.subr.bf16.mxu0 0
    %802 = vmatpush1.bf16.xpose.msra.mxu0 0
    %803 = vmatprep.subr.bf16.mxu0 0
    %804 = vmatpush1.bf16.xpose.msra.mxu0 0
    %805 = vmatprep.mubr.bf16.mxu0 0
    %806 = vmatmul.mubr.bf16.gmra.mrb[0].mxu0 %v768
    %v807 = vpop.f32.mrb[0].mxu0
    %v808 = vadd.f32 %v493, %v807
    %v809 = vpop.f32.mrb[0].mxu0
    %v810 = vpop.f32.mrb[0].mxu0
    %v811 = vpop.f32.mrb[0].mxu0
    %812 = vdwg.mxu0
    %v813 = vsel %vm589, %v756, -inf
    %814 = vmax.xlane.f32.xlu0 %v813
    %v815 = vpop.xlane.xlu0 %814
    %v816 = vsel %vm589, %v808, -inf
    %817 = vmax.xlane.f32.xlu0 %v816
    %v818 = vpop.xlane.xlu0 %817
    %v819 = vsub.f32 %v756, %v815
    %v820 = vsub.f32 %v808, %v818
    %v821 = vmul.f32 %v819, 1.442695
    %v822 = vpow.pop %v821
    %v823 = vmul.f32 %v820, 1.442695
    %v824 = vpow.pop %v823
    %v825 = vsel %vm589, %v822, 0.0
    %826 = vadd.xlane.f32.xlu0 %v825
    %v827 = vpop.xlane.xlu0 %826
    %v828 = vsel %vm589, %v824, 0.0
    %829 = vadd.xlane.f32.xlu0 %v828
    %v830 = vpop.xlane.xlu0 %829
    %v831 = vrcp.pop %v827
    %v832 = vrcp.pop %v830
    %v833 = vmul.f32 %v822, %v831
    %v834 = vmul.f32 %v824, %v832
    %v835 = vpack.c.bf16 %v833, %v833
    %v836 = vpack.c.bf16 %v834, %v834
    %838 = vrot.lane.b32.xlu0 %v614, 96
    %v839 = vpop.permute.xlu0 %838
    %v841 = vsel %vm589, %v835, 0
    %v844 = vsel %vm619, %v839, 0
    %846 = vmatprep.subr.bf16.mxu0 0
    %847 = vmatpush1.bf16.msra.mxu0 %v844
    %848 = vmatprep.subr.bf16.mxu0 0
    %849 = vmatpush1.bf16.msra.mxu0 0
    %850 = vmatprep.subr.bf16.mxu0 0
    %851 = vmatpush1.bf16.msra.mxu0 0
    %852 = vmatprep.subr.bf16.mxu0 0
    %853 = vmatpush1.bf16.msra.mxu0 0
    %854 = vmatprep.subr.bf16.mxu0 0
    %855 = vmatpush1.bf16.msra.mxu0 0
    %856 = vmatprep.subr.bf16.mxu0 0
    %857 = vmatpush1.bf16.msra.mxu0 0
    %858 = vmatprep.subr.bf16.mxu0 0
    %859 = vmatpush1.bf16.msra.mxu0 0
    %860 = vmatprep.subr.bf16.mxu0 0
    %861 = vmatpush1.bf16.msra.mxu0 0
    %862 = vmatprep.subr.bf16.mxu0 0
    %863 = vmatpush1.bf16.msra.mxu0 0
    %864 = vmatprep.subr.bf16.mxu0 0
    %865 = vmatpush1.bf16.msra.mxu0 0
    %866 = vmatprep.subr.bf16.mxu0 0
    %867 = vmatpush1.bf16.msra.mxu0 0
    %868 = vmatprep.subr.bf16.mxu0 0
    %869 = vmatpush1.bf16.msra.mxu0 0
    %870 = vmatprep.subr.bf16.mxu0 0
    %871 = vmatpush1.bf16.msra.mxu0 0
    %872 = vmatprep.subr.bf16.mxu0 0
    %873 = vmatpush1.bf16.msra.mxu0 0
    %874 = vmatprep.subr.bf16.mxu0 0
    %875 = vmatpush1.bf16.msra.mxu0 0
    %876 = vmatprep.subr.bf16.mxu0 0
    %877 = vmatpush1.bf16.msra.mxu0 0
    %878 = vmatprep.mubr.bf16.mxu0 0
    %879 = vmatmul.mubr.bf16.gmra.mrb[0].mxu0 %v841
    %v880 = vpop.f32.mrb[0].mxu0
    %v881 = vadd.f32 0.0, %v880
    %v882 = vpop.f32.mrb[0].mxu0
    %v883 = vpop.f32.mrb[0].mxu0
    %v884 = vpop.f32.mrb[0].mxu0
    %885 = vdwg.mxu0
    %887 = vrot.lane.b32.xlu0 %v615, 96
    %v888 = vpop.permute.xlu0 %887
    %v890 = vsel %vm589, %v836, 0
    %v893 = vsel %vm619, %v888, 0
    %895 = vmatprep.subr.bf16.mxu0 0
    %896 = vmatpush1.bf16.msra.mxu0 %v893
    %897 = vmatprep.subr.bf16.mxu0 0
    %898 = vmatpush1.bf16.msra.mxu0 0
    %899 = vmatprep.subr.bf16.mxu0 0
    %900 = vmatpush1.bf16.msra.mxu0 0
    %901 = vmatprep.subr.bf16.mxu0 0
    %902 = vmatpush1.bf16.msra.mxu0 0
    %903 = vmatprep.subr.bf16.mxu0 0
    %904 = vmatpush1.bf16.msra.mxu0 0
    %905 = vmatprep.subr.bf16.mxu0 0
    %906 = vmatpush1.bf16.msra.mxu0 0
    %907 = vmatprep.subr.bf16.mxu0 0
    %908 = vmatpush1.bf16.msra.mxu0 0
    %909 = vmatprep.subr.bf16.mxu0 0
    %910 = vmatpush1.bf16.msra.mxu0 0
    %911 = vmatprep.subr.bf16.mxu0 0
    %912 = vmatpush1.bf16.msra.mxu0 0
    %913 = vmatprep.subr.bf16.mxu0 0
    %914 = vmatpush1.bf16.msra.mxu0 0
    %915 = vmatprep.subr.bf16.mxu0 0
    %916 = vmatpush1.bf16.msra.mxu0 0
    %917 = vmatprep.subr.bf16.mxu0 0
    %918 = vmatpush1.bf16.msra.mxu0 0
    %919 = vmatprep.subr.bf16.mxu0 0
    %920 = vmatpush1.bf16.msra.mxu0 0
    %921 = vmatprep.subr.bf16.mxu0 0
    %922 = vmatpush1.bf16.msra.mxu0 0
    %923 = vmatprep.subr.bf16.mxu0 0
    %924 = vmatpush1.bf16.msra.mxu0 0
    %925 = vmatprep.subr.bf16.mxu0 0
    %926 = vmatpush1.bf16.msra.mxu0 0
    %927 = vmatprep.mubr.bf16.mxu0 0
    %928 = vmatmul.mubr.bf16.gmra.mrb[0].mxu0 %v890
    %v929 = vpop.f32.mrb[0].mxu0
    %v930 = vadd.f32 0.0, %v929
    %v931 = vpop.f32.mrb[0].mxu0
    %v932 = vpop.f32.mrb[0].mxu0
    %v933 = vpop.f32.mrb[0].mxu0
    %934 = vdwg.mxu0
    %935 = vrot.lane.b32.xlu0 %v482, 64
    %v936 = vpop.permute.xlu0 %935
    %937 = vrot.lane.b32.xlu0 %v484, 64
    %v938 = vpop.permute.xlu0 %937
    %v940 = vsel %vm496, %v936, 0
    %v943 = vsel %vm496, %v938, 0
    %945 = vmatprep.subr.bf16.mxu0 0
    %946 = vmatpush1.bf16.xpose.msra.mxu0 %v943
    %947 = vmatprep.subr.bf16.mxu0 0
    %948 = vmatpush1.bf16.xpose.msra.mxu0 0
    %949 = vmatprep.subr.bf16.mxu0 0
    %950 = vmatpush1.bf16.xpose.msra.mxu0 0
    %951 = vmatprep.subr.bf16.mxu0 0
    %952 = vmatpush1.bf16.xpose.msra.mxu0 0
    %953 = vmatprep.subr.bf16.mxu0 0
    %954 = vmatpush1.bf16.xpose.msra.mxu0 0
    %955 = vmatprep.subr.bf16.mxu0 0
    %956 = vmatpush1.bf16.xpose.msra.mxu0 0
    %957 = vmatprep.subr.bf16.mxu0 0
    %958 = vmatpush1.bf16.xpose.msra.mxu0 0
    %959 = vmatprep.subr.bf16.mxu0 0
    %960 = vmatpush1.bf16.xpose.msra.mxu0 0
    %961 = vmatprep.subr.bf16.mxu0 0
    %962 = vmatpush1.bf16.xpose.msra.mxu0 0
    %963 = vmatprep.subr.bf16.mxu0 0
    %964 = vmatpush1.bf16.xpose.msra.mxu0 0
    %965 = vmatprep.subr.bf16.mxu0 0
    %966 = vmatpush1.bf16.xpose.msra.mxu0 0
    %967 = vmatprep.subr.bf16.mxu0 0
    %968 = vmatpush1.bf16.xpose.msra.mxu0 0
    %969 = vmatprep.subr.bf16.mxu0 0
    %970 = vmatpush1.bf16.xpose.msra.mxu0 0
    %971 = vmatprep.subr.bf16.mxu0 0
    %972 = vmatpush1.bf16.xpose.msra.mxu0 0
    %973 = vmatprep.subr.bf16.mxu0 0
    %974 = vmatpush1.bf16.xpose.msra.mxu0 0
    %975 = vmatprep.subr.bf16.mxu0 0
    %976 = vmatpush1.bf16.xpose.msra.mxu0 0
    %977 = vmatprep.mubr.bf16.mxu0 0
    %978 = vmatmul.mubr.bf16.gmra.mrb[0].mxu0 %v940
    %v979 = vpop.f32.mrb[0].mxu0
    %v980 = vadd.f32 %v489, %v979
    %v981 = vpop.f32.mrb[0].mxu0
    %v982 = vpop.f32.mrb[0].mxu0
    %v983 = vpop.f32.mrb[0].mxu0
    %984 = vdwg.mxu0
    %985 = vrot.lane.b32.xlu0 %v483, 64
    %v986 = vpop.permute.xlu0 %985
    %987 = vrot.lane.b32.xlu0 %v485, 64
    %v988 = vpop.permute.xlu0 %987
    %v990 = vsel %vm496, %v986, 0
    %v993 = vsel %vm496, %v988, 0
    %995 = vmatprep.subr.bf16.mxu0 0
    %996 = vmatpush1.bf16.xpose.msra.mxu0 %v993
    %997 = vmatprep.subr.bf16.mxu0 0
    %998 = vmatpush1.bf16.xpose.msra.mxu0 0
    %999 = vmatprep.subr.bf16.mxu0 0
    %1000 = vmatpush1.bf16.xpose.msra.mxu0 0
    %1001 = vmatprep.subr.bf16.mxu0 0
    %1002 = vmatpush1.bf16.xpose.msra.mxu0 0
    %1003 = vmatprep.subr.bf16.mxu0 0
    %1004 = vmatpush1.bf16.xpose.msra.mxu0 0
    %1005 = vmatprep.subr.bf16.mxu0 0
    %1006 = vmatpush1.bf16.xpose.msra.mxu0 0
    %1007 = vmatprep.subr.bf16.mxu0 0
    %1008 = vmatpush1.bf16.xpose.msra.mxu0 0
    %1009 = vmatprep.subr.bf16.mxu0 0
    %1010 = vmatpush1.bf16.xpose.msra.mxu0 0
    %1011 = vmatprep.subr.bf16.mxu0 0
    %1012 = vmatpush1.bf16.xpose.msra.mxu0 0
    %1013 = vmatprep.subr.bf16.mxu0 0
    %1014 = vmatpush1.bf16.xpose.msra.mxu0 0
    %1015 = vmatprep.subr.bf16.mxu0 0
    %1016 = vmatpush1.bf16.xpose.msra.mxu0 0
    %1017 = vmatprep.subr.bf16.mxu0 0
    %1018 = vmatpush1.bf16.xpose.msra.mxu0 0
    %1019 = vmatprep.subr.bf16.mxu0 0
    %1020 = vmatpush1.bf16.xpose.msra.mxu0 0
    %1021 = vmatprep.subr.bf16.mxu0 0
    %1022 = vmatpush1.bf16.xpose.msra.mxu0 0
    %1023 = vmatprep.subr.bf16.mxu0 0
    %1024 = vmatpush1.bf16.xpose.msra.mxu0 0
    %1025 = vmatprep.subr.bf16.mxu0 0
    %1026 = vmatpush1.bf16.xpose.msra.mxu0 0
    %1027 = vmatprep.mubr.bf16.mxu0 0
    %1028 = vmatmul.mubr.bf16.gmra.mrb[0].mxu0 %v990
    %v1029 = vpop.f32.mrb[0].mxu0
    %v1030 = vadd.f32 %v493, %v1029
    %v1031 = vpop.f32.mrb[0].mxu0
    %v1032 = vpop.f32.mrb[0].mxu0
    %v1033 = vpop.f32.mrb[0].mxu0
    %1034 = vdwg.mxu0
    %v1035 = vsel %vm589, %v980, -inf
    %1036 = vmax.xlane.f32.xlu0 %v1035
    %v1037 = vpop.xlane.xlu0 %1036
    %v1038 = vsel %vm589, %v1030, -inf
    %1039 = vmax.xlane.f32.xlu0 %v1038
    %v1040 = vpop.xlane.xlu0 %1039
    %v1041 = vsub.f32 %v980, %v1037
    %v1042 = vsub.f32 %v1030, %v1040
    %v1043 = vmul.f32 %v1041, 1.442695
    %v1044 = vpow.pop %v1043
    %v1045 = vmul.f32 %v1042, 1.442695
    %v1046 = vpow.pop %v1045
    %v1047 = vsel %vm589, %v1044, 0.0
    %1048 = vadd.xlane.f32.xlu0 %v1047
    %v1049 = vpop.xlane.xlu0 %1048
    %v1050 = vsel %vm589, %v1046, 0.0
    %1051 = vadd.xlane.f32.xlu0 %v1050
    %v1052 = vpop.xlane.xlu0 %1051
    %v1053 = vrcp.pop %v1049
    %v1054 = vrcp.pop %v1052
    %v1055 = vmul.f32 %v1044, %v1053
    %v1056 = vmul.f32 %v1046, %v1054
    %v1057 = vpack.c.bf16 %v1055, %v1055
    %v1058 = vpack.c.bf16 %v1056, %v1056
    %1059 = vrot.lane.b32.xlu0 %v614, 64
    %v1060 = vpop.permute.xlu0 %1059
    %v1062 = vsel %vm589, %v1057, 0
    %v1065 = vsel %vm619, %v1060, 0
    %1067 = vmatprep.subr.bf16.mxu0 0
    %1068 = vmatpush1.bf16.msra.mxu0 %v1065
    %1069 = vmatprep.subr.bf16.mxu0 0
    %1070 = vmatpush1.bf16.msra.mxu0 0
    %1071 = vmatprep.subr.bf16.mxu0 0
    %1072 = vmatpush1.bf16.msra.mxu0 0
    %1073 = vmatprep.subr.bf16.mxu0 0
    %1074 = vmatpush1.bf16.msra.mxu0 0
    %1075 = vmatprep.subr.bf16.mxu0 0
    %1076 = vmatpush1.bf16.msra.mxu0 0
    %1077 = vmatprep.subr.bf16.mxu0 0
    %1078 = vmatpush1.bf16.msra.mxu0 0
    %1079 = vmatprep.subr.bf16.mxu0 0
    %1080 = vmatpush1.bf16.msra.mxu0 0
    %1081 = vmatprep.subr.bf16.mxu0 0
    %1082 = vmatpush1.bf16.msra.mxu0 0
    %1083 = vmatprep.subr.bf16.mxu0 0
    %1084 = vmatpush1.bf16.msra.mxu0 0
    %1085 = vmatprep.subr.bf16.mxu0 0
    %1086 = vmatpush1.bf16.msra.mxu0 0
    %1087 = vmatprep.subr.bf16.mxu0 0
    %1088 = vmatpush1.bf16.msra.mxu0 0
    %1089 = vmatprep.subr.bf16.mxu0 0
    %1090 = vmatpush1.bf16.msra.mxu0 0
    %1091 = vmatprep.subr.bf16.mxu0 0
    %1092 = vmatpush1.bf16.msra.mxu0 0
    %1093 = vmatprep.subr.bf16.mxu0 0
    %1094 = vmatpush1.bf16.msra.mxu0 0
    %1095 = vmatprep.subr.bf16.mxu0 0
    %1096 = vmatpush1.bf16.msra.mxu0 0
    %1097 = vmatprep.subr.bf16.mxu0 0
    %1098 = vmatpush1.bf16.msra.mxu0 0
    %1099 = vmatprep.mubr.bf16.mxu0 0
    %1100 = vmatmul.mubr.bf16.gmra.mrb[0].mxu0 %v1062
    %v1101 = vpop.f32.mrb[0].mxu0
    %v1102 = vadd.f32 0.0, %v1101
    %v1103 = vpop.f32.mrb[0].mxu0
    %v1104 = vpop.f32.mrb[0].mxu0
    %v1105 = vpop.f32.mrb[0].mxu0
    %1106 = vdwg.mxu0
    %1107 = vrot.lane.b32.xlu0 %v615, 64
    %v1108 = vpop.permute.xlu0 %1107
    %v1110 = vsel %vm589, %v1058, 0
    %v1113 = vsel %vm619, %v1108, 0
    %1115 = vmatprep.subr.bf16.mxu0 0
    %1116 = vmatpush1.bf16.msra.mxu0 %v1113
    %1117 = vmatprep.subr.bf16.mxu0 0
    %1118 = vmatpush1.bf16.msra.mxu0 0
    %1119 = vmatprep.subr.bf16.mxu0 0
    %1120 = vmatpush1.bf16.msra.mxu0 0
    %1121 = vmatprep.subr.bf16.mxu0 0
    %1122 = vmatpush1.bf16.msra.mxu0 0
    %1123 = vmatprep.subr.bf16.mxu0 0
    %1124 = vmatpush1.bf16.msra.mxu0 0
    %1125 = vmatprep.subr.bf16.mxu0 0
    %1126 = vmatpush1.bf16.msra.mxu0 0
    %1127 = vmatprep.subr.bf16.mxu0 0
    %1128 = vmatpush1.bf16.msra.mxu0 0
    %1129 = vmatprep.subr.bf16.mxu0 0
    %1130 = vmatpush1.bf16.msra.mxu0 0
    %1131 = vmatprep.subr.bf16.mxu0 0
    %1132 = vmatpush1.bf16.msra.mxu0 0
    %1133 = vmatprep.subr.bf16.mxu0 0
    %1134 = vmatpush1.bf16.msra.mxu0 0
    %1135 = vmatprep.subr.bf16.mxu0 0
    %1136 = vmatpush1.bf16.msra.mxu0 0
    %1137 = vmatprep.subr.bf16.mxu0 0
    %1138 = vmatpush1.bf16.msra.mxu0 0
    %1139 = vmatprep.subr.bf16.mxu0 0
    %1140 = vmatpush1.bf16.msra.mxu0 0
    %1141 = vmatprep.subr.bf16.mxu0 0
    %1142 = vmatpush1.bf16.msra.mxu0 0
    %1143 = vmatprep.subr.bf16.mxu0 0
    %1144 = vmatpush1.bf16.msra.mxu0 0
    %1145 = vmatprep.subr.bf16.mxu0 0
    %1146 = vmatpush1.bf16.msra.mxu0 0
    %1147 = vmatprep.mubr.bf16.mxu0 0
    %1148 = vmatmul.mubr.bf16.gmra.mrb[0].mxu0 %v1110
    %v1149 = vpop.f32.mrb[0].mxu0
    %v1150 = vadd.f32 0.0, %v1149
    %v1151 = vpop.f32.mrb[0].mxu0
    %v1152 = vpop.f32.mrb[0].mxu0
    %v1153 = vpop.f32.mrb[0].mxu0
    %1154 = vdwg.mxu0
    %1155 = vrot.lane.b32.xlu0 %v482, 32
    %v1156 = vpop.permute.xlu0 %1155
    %1157 = vrot.lane.b32.xlu0 %v484, 32
    %v1158 = vpop.permute.xlu0 %1157
    %v1160 = vsel %vm496, %v1156, 0
    %v1163 = vsel %vm496, %v1158, 0
    %1165 = vmatprep.subr.bf16.mxu0 0
    %1166 = vmatpush1.bf16.xpose.msra.mxu0 %v1163
    %1167 = vmatprep.subr.bf16.mxu0 0
    %1168 = vmatpush1.bf16.xpose.msra.mxu0 0
    %1169 = vmatprep.subr.bf16.mxu0 0
    %1170 = vmatpush1.bf16.xpose.msra.mxu0 0
    %1171 = vmatprep.subr.bf16.mxu0 0
    %1172 = vmatpush1.bf16.xpose.msra.mxu0 0
    %1173 = vmatprep.subr.bf16.mxu0 0
    %1174 = vmatpush1.bf16.xpose.msra.mxu0 0
    %1175 = vmatprep.subr.bf16.mxu0 0
    %1176 = vmatpush1.bf16.xpose.msra.mxu0 0
    %1177 = vmatprep.subr.bf16.mxu0 0
    %1178 = vmatpush1.bf16.xpose.msra.mxu0 0
    %1179 = vmatprep.subr.bf16.mxu0 0
    %1180 = vmatpush1.bf16.xpose.msra.mxu0 0
    %1181 = vmatprep.subr.bf16.mxu0 0
    %1182 = vmatpush1.bf16.xpose.msra.mxu0 0
    %1183 = vmatprep.subr.bf16.mxu0 0
    %1184 = vmatpush1.bf16.xpose.msra.mxu0 0
    %1185 = vmatprep.subr.bf16.mxu0 0
    %1186 = vmatpush1.bf16.xpose.msra.mxu0 0
    %1187 = vmatprep.subr.bf16.mxu0 0
    %1188 = vmatpush1.bf16.xpose.msra.mxu0 0
    %1189 = vmatprep.subr.bf16.mxu0 0
    %1190 = vmatpush1.bf16.xpose.msra.mxu0 0
    %1191 = vmatprep.subr.bf16.mxu0 0
    %1192 = vmatpush1.bf16.xpose.msra.mxu0 0
    %1193 = vmatprep.subr.bf16.mxu0 0
    %1194 = vmatpush1.bf16.xpose.msra.mxu0 0
    %1195 = vmatprep.subr.bf16.mxu0 0
    %1196 = vmatpush1.bf16.xpose.msra.mxu0 0
    %1197 = vmatprep.mubr.bf16.mxu0 0
    %1198 = vmatmul.mubr.bf16.gmra.mrb[0].mxu0 %v1160
    %v1199 = vpop.f32.mrb[0].mxu0
    %v1200 = vadd.f32 %v489, %v1199
    %v1201 = vpop.f32.mrb[0].mxu0
    %v1202 = vpop.f32.mrb[0].mxu0
    %v1203 = vpop.f32.mrb[0].mxu0
    %1204 = vdwg.mxu0
    %1205 = vrot.lane.b32.xlu0 %v483, 32
    %v1206 = vpop.permute.xlu0 %1205
    %1207 = vrot.lane.b32.xlu0 %v485, 32
    %v1208 = vpop.permute.xlu0 %1207
    %v1210 = vsel %vm496, %v1206, 0
    %v1213 = vsel %vm496, %v1208, 0
    %1215 = vmatprep.subr.bf16.mxu0 0
    %1216 = vmatpush1.bf16.xpose.msra.mxu0 %v1213
    %1217 = vmatprep.subr.bf16.mxu0 0
    %1218 = vmatpush1.bf16.xpose.msra.mxu0 0
    %1219 = vmatprep.subr.bf16.mxu0 0
    %1220 = vmatpush1.bf16.xpose.msra.mxu0 0
    %1221 = vmatprep.subr.bf16.mxu0 0
    %1222 = vmatpush1.bf16.xpose.msra.mxu0 0
    %1223 = vmatprep.subr.bf16.mxu0 0
    %1224 = vmatpush1.bf16.xpose.msra.mxu0 0
    %1225 = vmatprep.subr.bf16.mxu0 0
    %1226 = vmatpush1.bf16.xpose.msra.mxu0 0
    %1227 = vmatprep.subr.bf16.mxu0 0
    %1228 = vmatpush1.bf16.xpose.msra.mxu0 0
    %1229 = vmatprep.subr.bf16.mxu0 0
    %1230 = vmatpush1.bf16.xpose.msra.mxu0 0
    %1231 = vmatprep.subr.bf16.mxu0 0
    %1232 = vmatpush1.bf16.xpose.msra.mxu0 0
    %1233 = vmatprep.subr.bf16.mxu0 0
    %1234 = vmatpush1.bf16.xpose.msra.mxu0 0
    %1235 = vmatprep.subr.bf16.mxu0 0
    %1236 = vmatpush1.bf16.xpose.msra.mxu0 0
    %1237 = vmatprep.subr.bf16.mxu0 0
    %1238 = vmatpush1.bf16.xpose.msra.mxu0 0
    %1239 = vmatprep.subr.bf16.mxu0 0
    %1240 = vmatpush1.bf16.xpose.msra.mxu0 0
    %1241 = vmatprep.subr.bf16.mxu0 0
    %1242 = vmatpush1.bf16.xpose.msra.mxu0 0
    %1243 = vmatprep.subr.bf16.mxu0 0
    %1244 = vmatpush1.bf16.xpose.msra.mxu0 0
    %1245 = vmatprep.subr.bf16.mxu0 0
    %1246 = vmatpush1.bf16.xpose.msra.mxu0 0
    %1247 = vmatprep.mubr.bf16.mxu0 0
    %1248 = vmatmul.mubr.bf16.gmra.mrb[0].mxu0 %v1210
    %v1249 = vpop.f32.mrb[0].mxu0
    %v1250 = vadd.f32 %v493, %v1249
    %v1251 = vpop.f32.mrb[0].mxu0
    %v1252 = vpop.f32.mrb[0].mxu0
    %v1253 = vpop.f32.mrb[0].mxu0
    %1254 = vdwg.mxu0
    %v1255 = vsel %vm589, %v1200, -inf
    %1256 = vmax.xlane.f32.xlu0 %v1255
    %v1257 = vpop.xlane.xlu0 %1256
    %v1258 = vsel %vm589, %v1250, -inf
    %1259 = vmax.xlane.f32.xlu0 %v1258
    %v1260 = vpop.xlane.xlu0 %1259
    %v1261 = vsub.f32 %v1200, %v1257
    %v1262 = vsub.f32 %v1250, %v1260
    %v1263 = vmul.f32 %v1261, 1.442695
    %v1264 = vpow.pop %v1263
    %v1265 = vmul.f32 %v1262, 1.442695
    %v1266 = vpow.pop %v1265
    %v1267 = vsel %vm589, %v1264, 0.0
    %1268 = vadd.xlane.f32.xlu0 %v1267
    %v1269 = vpop.xlane.xlu0 %1268
    %v1270 = vsel %vm589, %v1266, 0.0
    %1271 = vadd.xlane.f32.xlu0 %v1270
    %v1272 = vpop.xlane.xlu0 %1271
    %v1273 = vrcp.pop %v1269
    %v1274 = vrcp.pop %v1272
    %v1275 = vmul.f32 %v1264, %v1273
    %v1276 = vmul.f32 %v1266, %v1274
    %v1277 = vpack.c.bf16 %v1275, %v1275
    %v1278 = vpack.c.bf16 %v1276, %v1276
    %1279 = vrot.lane.b32.xlu0 %v614, 32
    %v1280 = vpop.permute.xlu0 %1279
    %v1282 = vsel %vm589, %v1277, 0
    %v1285 = vsel %vm619, %v1280, 0
    %1287 = vmatprep.subr.bf16.mxu0 0
    %1288 = vmatpush1.bf16.msra.mxu0 %v1285
    %1289 = vmatprep.subr.bf16.mxu0 0
    %1290 = vmatpush1.bf16.msra.mxu0 0
    %1291 = vmatprep.subr.bf16.mxu0 0
    %1292 = vmatpush1.bf16.msra.mxu0 0
    %1293 = vmatprep.subr.bf16.mxu0 0
    %1294 = vmatpush1.bf16.msra.mxu0 0
    %1295 = vmatprep.subr.bf16.mxu0 0
    %1296 = vmatpush1.bf16.msra.mxu0 0
    %1297 = vmatprep.subr.bf16.mxu0 0
    %1298 = vmatpush1.bf16.msra.mxu0 0
    %1299 = vmatprep.subr.bf16.mxu0 0
    %1300 = vmatpush1.bf16.msra.mxu0 0
    %1301 = vmatprep.subr.bf16.mxu0 0
    %1302 = vmatpush1.bf16.msra.mxu0 0
    %1303 = vmatprep.subr.bf16.mxu0 0
    %1304 = vmatpush1.bf16.msra.mxu0 0
    %1305 = vmatprep.subr.bf16.mxu0 0
    %1306 = vmatpush1.bf16.msra.mxu0 0
    %1307 = vmatprep.subr.bf16.mxu0 0
    %1308 = vmatpush1.bf16.msra.mxu0 0
    %1309 = vmatprep.subr.bf16.mxu0 0
    %1310 = vmatpush1.bf16.msra.mxu0 0
    %1311 = vmatprep.subr.bf16.mxu0 0
    %1312 = vmatpush1.bf16.msra.mxu0 0
    %1313 = vmatprep.subr.bf16.mxu0 0
    %1314 = vmatpush1.bf16.msra.mxu0 0
    %1315 = vmatprep.subr.bf16.mxu0 0
    %1316 = vmatpush1.bf16.msra.mxu0 0
    %1317 = vmatprep.subr.bf16.mxu0 0
    %1318 = vmatpush1.bf16.msra.mxu0 0
    %1319 = vmatprep.mubr.bf16.mxu0 0
    %1320 = vmatmul.mubr.bf16.gmra.mrb[0].mxu0 %v1282
    %v1321 = vpop.f32.mrb[0].mxu0
    %v1322 = vadd.f32 0.0, %v1321
    %v1323 = vpop.f32.mrb[0].mxu0
    %v1324 = vpop.f32.mrb[0].mxu0
    %v1325 = vpop.f32.mrb[0].mxu0
    %1326 = vdwg.mxu0
    %1327 = vrot.lane.b32.xlu0 %v615, 32
    %v1328 = vpop.permute.xlu0 %1327
    %v1330 = vsel %vm589, %v1278, 0
    %v1333 = vsel %vm619, %v1328, 0
    %1335 = vmatprep.subr.bf16.mxu0 0
    %1336 = vmatpush1.bf16.msra.mxu0 %v1333
    %1337 = vmatprep.subr.bf16.mxu0 0
    %1338 = vmatpush1.bf16.msra.mxu0 0
    %1339 = vmatprep.subr.bf16.mxu0 0
    %1340 = vmatpush1.bf16.msra.mxu0 0
    %1341 = vmatprep.subr.bf16.mxu0 0
    %1342 = vmatpush1.bf16.msra.mxu0 0
    %1343 = vmatprep.subr.bf16.mxu0 0
    %1344 = vmatpush1.bf16.msra.mxu0 0
    %1345 = vmatprep.subr.bf16.mxu0 0
    %1346 = vmatpush1.bf16.msra.mxu0 0
    %1347 = vmatprep.subr.bf16.mxu0 0
    %1348 = vmatpush1.bf16.msra.mxu0 0
    %1349 = vmatprep.subr.bf16.mxu0 0
    %1350 = vmatpush1.bf16.msra.mxu0 0
    %1351 = vmatprep.subr.bf16.mxu0 0
    %1352 = vmatpush1.bf16.msra.mxu0 0
    %1353 = vmatprep.subr.bf16.mxu0 0
    %1354 = vmatpush1.bf16.msra.mxu0 0
    %1355 = vmatprep.subr.bf16.mxu0 0
    %1356 = vmatpush1.bf16.msra.mxu0 0
    %1357 = vmatprep.subr.bf16.mxu0 0
    %1358 = vmatpush1.bf16.msra.mxu0 0
    %1359 = vmatprep.subr.bf16.mxu0 0
    %1360 = vmatpush1.bf16.msra.mxu0 0
    %1361 = vmatprep.subr.bf16.mxu0 0
    %1362 = vmatpush1.bf16.msra.mxu0 0
    %1363 = vmatprep.subr.bf16.mxu0 0
    %1364 = vmatpush1.bf16.msra.mxu0 0
    %1365 = vmatprep.subr.bf16.mxu0 0
    %1366 = vmatpush1.bf16.msra.mxu0 0
    %1367 = vmatprep.mubr.bf16.mxu0 0
    %1368 = vmatmul.mubr.bf16.gmra.mrb[0].mxu0 %v1330
    %v1369 = vpop.f32.mrb[0].mxu0
    %v1370 = vadd.f32 0.0, %v1369
    %v1371 = vpop.f32.mrb[0].mxu0
    %v1372 = vpop.f32.mrb[0].mxu0
    %v1373 = vpop.f32.mrb[0].mxu0
    %1374 = vdwg.mxu0
    %1377 = vrot.lane.b32.xlu0 %v881, 32
    %v1378 = vpop.permute.xlu0 %1377
    %1379 = vrot.lane.b32.xlu0 %v930, 32
    %v1380 = vpop.permute.xlu0 %1379
    %1385 = vrot.lane.b32.xlu0 %v1102, 64
    %v1386 = vpop.permute.xlu0 %1385
    %1387 = vrot.lane.b32.xlu0 %v1150, 64
    %v1388 = vpop.permute.xlu0 %1387
    %1393 = vrot.lane.b32.xlu0 %v1322, 96
    %v1394 = vpop.permute.xlu0 %1393
    %1395 = vrot.lane.b32.xlu0 %v1370, 96
    %v1396 = vpop.permute.xlu0 %1395
    %v1399 = vsel %vm496, %v658, %v1378
    %v1400 = vsel %vm496, %v704, %v1380
    %vm1401 = vcmask 523264
    %v1402 = vsel %vm1401, %v1399, %v1386
    %v1403 = vsel %vm1401, %v1400, %v1388
    %vm1404 = vcmask 785408
    %v1405 = vsel %vm1404, %v1402, %v1394
    %v1406 = vsel %vm1404, %v1403, %v1396
    %v1407 = vld [vmem:[%s4] sm:$0xf]
    %v1408 = vld [vmem:[%s4 + $0x4] sm:$0xf]
    %v1409 = vld [vmem:[%s4 + $0x8] sm:$0xf]
    %v1410 = vld [vmem:[%s4 + $0xc] sm:$0xf]
    %v1411 = vld [vmem:[%s4 + $0x10] sm:$0xf]
    %v1412 = vld [vmem:[%s4 + $0x14] sm:$0xf]
    %v1413 = vld [vmem:[%s4 + $0x18] sm:$0xf]
    %v1414 = vld [vmem:[%s4 + $0x1c] sm:$0xf]
    %v1415 = vld [vmem:[%s4 + $0x20] sm:$0xf]
    %v1416 = vld [vmem:[%s4 + $0x24] sm:$0xf]
    %v1417 = vld [vmem:[%s4 + $0x28] sm:$0xf]
    %v1418 = vld [vmem:[%s4 + $0x2c] sm:$0xf]
    %v1419 = vld [vmem:[%s4 + $0x30] sm:$0xf]
    %v1420 = vld [vmem:[%s4 + $0x34] sm:$0xf]
    %v1421 = vld [vmem:[%s4 + $0x38] sm:$0xf]
    %v1422 = vld [vmem:[%s4 + $0x3c] sm:$0xf]
    %v1423 = vpack.c.bf16 %v1406, %v1405
    %v1424 = vld [vmem:[#allocation4] sm:$0x1]
    %v1426 = vlaneseq
    %v1427 = vshrl.u32 %v1426, 7
    %v1428 = vsub.s32 0, %v1427
    %v1429 = vrot.slane %v1424, %v1428
    %v1447 = vunpack.c.l.b16 %v1407
    %v1448 = vunpack.c.l.b16 %v1408
    %v1449 = vunpack.c.l.b16 %v1409
    %v1450 = vunpack.c.l.b16 %v1410
    %v1451 = vunpack.c.l.b16 %v1411
    %v1452 = vunpack.c.l.b16 %v1412
    %v1453 = vunpack.c.l.b16 %v1413
    %v1454 = vunpack.c.l.b16 %v1414
    %v1455 = vunpack.c.l.b16 %v1415
    %v1456 = vunpack.c.l.b16 %v1416
    %v1457 = vunpack.c.l.b16 %v1417
    %v1458 = vunpack.c.l.b16 %v1418
    %v1459 = vunpack.c.l.b16 %v1419
    %v1460 = vunpack.c.l.b16 %v1420
    %v1461 = vunpack.c.l.b16 %v1421
    %v1462 = vunpack.c.l.b16 %v1422
    %v1463 = vpack.c.b16 %v1448, %v1447
    %v1464 = vpack.c.b16 %v1450, %v1449
    %v1465 = vpack.c.b16 %v1452, %v1451
    %v1466 = vpack.c.b16 %v1454, %v1453
    %v1467 = vpack.c.b16 %v1456, %v1455
    %v1468 = vpack.c.b16 %v1458, %v1457
    %v1469 = vpack.c.b16 %v1460, %v1459
    %v1470 = vpack.c.b16 %v1462, %v1461
    %1479 = vmatprep.subr.bf16.mxu0 0
    %1480 = vmatpush1.bf16.xpose.msra.mxu0 %v1463
    %1481 = vmatprep.subr.bf16.mxu0 0
    %1482 = vmatpush1.bf16.xpose.msra.mxu0 %v1464
    %1483 = vmatprep.subr.bf16.mxu0 0
    %1484 = vmatpush1.bf16.xpose.msra.mxu0 %v1465
    %1485 = vmatprep.subr.bf16.mxu0 0
    %1486 = vmatpush1.bf16.xpose.msra.mxu0 %v1466
    %1487 = vmatprep.subr.bf16.mxu0 0
    %1488 = vmatpush1.bf16.xpose.msra.mxu0 %v1467
    %1489 = vmatprep.subr.bf16.mxu0 0
    %1490 = vmatpush1.bf16.xpose.msra.mxu0 %v1468
    %1491 = vmatprep.subr.bf16.mxu0 0
    %1492 = vmatpush1.bf16.xpose.msra.mxu0 %v1469
    %1493 = vmatprep.subr.bf16.mxu0 0
    %1494 = vmatpush1.bf16.xpose.msra.mxu0 %v1470
    %1495 = vmatprep.subr.bf16.mxu0 0
    %1496 = vmatpush1.bf16.xpose.msra.mxu0 0
    %1497 = vmatprep.subr.bf16.mxu0 0
    %1498 = vmatpush1.bf16.xpose.msra.mxu0 0
    %1499 = vmatprep.subr.bf16.mxu0 0
    %1500 = vmatpush1.bf16.xpose.msra.mxu0 0
    %1501 = vmatprep.subr.bf16.mxu0 0
    %1502 = vmatpush1.bf16.xpose.msra.mxu0 0
    %1503 = vmatprep.subr.bf16.mxu0 0
    %1504 = vmatpush1.bf16.xpose.msra.mxu0 0
    %1505 = vmatprep.subr.bf16.mxu0 0
    %1506 = vmatpush1.bf16.xpose.msra.mxu0 0
    %1507 = vmatprep.subr.bf16.mxu0 0
    %1508 = vmatpush1.bf16.xpose.msra.mxu0 0
    %1509 = vmatprep.subr.bf16.mxu0 0
    %1510 = vmatpush1.bf16.xpose.msra.mxu0 0
    %1511 = vmatprep.mubr.bf16.mxu0 0
    %1512 = vmatmul.mubr.bf16.gmra.mrb[0].mxu0 %v1423
    %v1513 = vpop.f32.mrb[0].mxu0
    %v1514 = vadd.f32 %v1429, %v1513
    %v1515 = vpop.f32.mrb[0].mxu0
    %v1516 = vpop.f32.mrb[0].mxu0
    %v1517 = vadd.f32 %v1429, %v1516
    %v1518 = vpop.f32.mrb[0].mxu0
    %1519 = vdwg.mxu0
    %v1520 = vadd.f32 %v158, %v1514
    %v1521 = vadd.f32 %v159, %v1517
    %v1522 = vld [vmem:[#allocation6] sm:$0x1]
    %v1523 = vld [vmem:[#allocation7] sm:$0x1]
    %1524 = vadd.xlane.f32.xlu0 %v1520
    %v1525 = vpop.xlane.xlu0 %1524
    %1526 = vadd.xlane.f32.xlu0 %v1521
    %v1527 = vpop.xlane.xlu0 %1526
    %v1528 = vrcp.pop 128.0
    %v1529 = vmul.f32 %v1525, %v1528
    %v1530 = vmul.f32 %v1527, %v1528
    %v1531 = vsub.f32 %v1520, %v1529
    %v1532 = vsub.f32 %v1521, %v1530
    %v1533 = vmul.f32 %v1531, %v1531
    %v1534 = vmul.f32 %v1532, %v1532
    %1535 = vadd.xlane.f32.xlu0 %v1533
    %v1536 = vpop.xlane.xlu0 %1535
    %1537 = vadd.xlane.f32.xlu0 %v1534
    %v1538 = vpop.xlane.xlu0 %1537
    %v1539 = vmul.f32 %v1536, %v1528
    %v1540 = vmul.f32 %v1538, %v1528
    %v1541 = vadd.f32 %v1539, 1e-05
    %v1542 = vadd.f32 %v1540, 1e-05
    %v1543 = vrsqrt.pop %v1541
    %v1544 = vrsqrt.pop %v1542
    %v1545 = vmul.f32 %v1531, %v1543
    %v1546 = vmul.f32 %v1532, %v1544
    %v1548 = vlaneseq
    %v1549 = vshrl.u32 %v1548, 7
    %v1550 = vsub.s32 0, %v1549
    %v1551 = vrot.slane %v1522, %v1550
    %v1553 = vmul.f32 %v1545, %v1551
    %v1554 = vmul.f32 %v1546, %v1551
    %v1556 = vlaneseq
    %v1557 = vshrl.u32 %v1556, 7
    %v1558 = vsub.s32 0, %v1557
    %v1559 = vrot.slane %v1523, %v1558
    %v1561 = vadd.f32 %v1553, %v1559
    %v1562 = vadd.f32 %v1554, %v1559
    %v1563 = vld [vmem:[#allocation9] sm:$0xf]
    %v1564 = vld [vmem:[#allocation9 + $0x4] sm:$0xf]
    %v1565 = vld [vmem:[#allocation9 + $0x8] sm:$0xf]
    %v1566 = vld [vmem:[#allocation9 + $0xc] sm:$0xf]
    %v1567 = vld [vmem:[#allocation9 + $0x10] sm:$0xf]
    %v1568 = vld [vmem:[#allocation9 + $0x14] sm:$0xf]
    %v1569 = vld [vmem:[#allocation9 + $0x18] sm:$0xf]
    %v1570 = vld [vmem:[#allocation9 + $0x1c] sm:$0xf]
    %v1571 = vld [vmem:[#allocation9 + $0x20] sm:$0xf]
    %v1572 = vld [vmem:[#allocation9 + $0x24] sm:$0xf]
    %v1573 = vld [vmem:[#allocation9 + $0x28] sm:$0xf]
    %v1574 = vld [vmem:[#allocation9 + $0x2c] sm:$0xf]
    %v1575 = vld [vmem:[#allocation9 + $0x30] sm:$0xf]
    %v1576 = vld [vmem:[#allocation9 + $0x34] sm:$0xf]
    %v1577 = vld [vmem:[#allocation9 + $0x38] sm:$0xf]
    %v1578 = vld [vmem:[#allocation9 + $0x3c] sm:$0xf]
    %v1579 = vld [vmem:[#allocation9 + $0x40] sm:$0xf]
    %v1580 = vld [vmem:[#allocation9 + $0x44] sm:$0xf]
    %v1581 = vld [vmem:[#allocation9 + $0x48] sm:$0xf]
    %v1582 = vld [vmem:[#allocation9 + $0x4c] sm:$0xf]
    %v1583 = vld [vmem:[#allocation9 + $0x50] sm:$0xf]
    %v1584 = vld [vmem:[#allocation9 + $0x54] sm:$0xf]
    %v1585 = vld [vmem:[#allocation9 + $0x58] sm:$0xf]
    %v1586 = vld [vmem:[#allocation9 + $0x5c] sm:$0xf]
    %v1587 = vld [vmem:[#allocation9 + $0x60] sm:$0xf]
    %v1588 = vld [vmem:[#allocation9 + $0x64] sm:$0xf]
    %v1589 = vld [vmem:[#allocation9 + $0x68] sm:$0xf]
    %v1590 = vld [vmem:[#allocation9 + $0x6c] sm:$0xf]
    %v1591 = vld [vmem:[#allocation9 + $0x70] sm:$0xf]
    %v1592 = vld [vmem:[#allocation9 + $0x74] sm:$0xf]
    %v1593 = vld [vmem:[#allocation9 + $0x78] sm:$0xf]
    %v1594 = vld [vmem:[#allocation9 + $0x7c] sm:$0xf]
    %v1595 = vpack.c.bf16 %v1562, %v1561
    %v1596 = vld [vmem:[%s9] sm:$0x3]
    %v1598 = vlaneseq
    %v1599 = vshrl.u32 %v1598, 7
    %v1600 = vsub.s32 0, %v1599
    %v1601 = vrot.slane %v1596, %v1600
    %v1602 = vlaneseq
    %v1603 = vshrl.u32 %v1602, 7
    %v1604 = vsub.s32 1, %v1603
    %v1605 = vrot.slane %v1596, %v1604
    %v1640 = vunpack.c.l.b16 %v1563
    %v1641 = vunpack.c.l.b16 %v1564
    %v1642 = vunpack.c.l.b16 %v1565
    %v1643 = vunpack.c.l.b16 %v1566
    %v1644 = vunpack.c.l.b16 %v1567
    %v1645 = vunpack.c.l.b16 %v1568
    %v1646 = vunpack.c.l.b16 %v1569
    %v1647 = vunpack.c.l.b16 %v1570
    %v1648 = vunpack.c.l.b16 %v1571
    %v1649 = vunpack.c.l.b16 %v1572
    %v1650 = vunpack.c.l.b16 %v1573
    %v1651 = vunpack.c.l.b16 %v1574
    %v1652 = vunpack.c.l.b16 %v1575
    %v1653 = vunpack.c.l.b16 %v1576
    %v1654 = vunpack.c.l.b16 %v1577
    %v1655 = vunpack.c.l.b16 %v1578
    %v1656 = vunpack.c.l.b16 %v1579
    %v1657 = vunpack.c.l.b16 %v1580
    %v1658 = vunpack.c.l.b16 %v1581
    %v1659 = vunpack.c.l.b16 %v1582
    %v1660 = vunpack.c.l.b16 %v1583
    %v1661 = vunpack.c.l.b16 %v1584
    %v1662 = vunpack.c.l.b16 %v1585
    %v1663 = vunpack.c.l.b16 %v1586
    %v1664 = vunpack.c.l.b16 %v1587
    %v1665 = vunpack.c.l.b16 %v1588
    %v1666 = vunpack.c.l.b16 %v1589
    %v1667 = vunpack.c.l.b16 %v1590
    %v1668 = vunpack.c.l.b16 %v1591
    %v1669 = vunpack.c.l.b16 %v1592
    %v1670 = vunpack.c.l.b16 %v1593
    %v1671 = vunpack.c.l.b16 %v1594
    %v1672 = vpack.c.b16 %v1641, %v1640
    %v1673 = vpack.c.b16 %v1643, %v1642
    %v1674 = vpack.c.b16 %v1645, %v1644
    %v1675 = vpack.c.b16 %v1647, %v1646
    %v1676 = vpack.c.b16 %v1649, %v1648
    %v1677 = vpack.c.b16 %v1651, %v1650
    %v1678 = vpack.c.b16 %v1653, %v1652
    %v1679 = vpack.c.b16 %v1655, %v1654
    %v1680 = vpack.c.b16 %v1657, %v1656
    %v1681 = vpack.c.b16 %v1659, %v1658
    %v1682 = vpack.c.b16 %v1661, %v1660
    %v1683 = vpack.c.b16 %v1663, %v1662
    %v1684 = vpack.c.b16 %v1665, %v1664
    %v1685 = vpack.c.b16 %v1667, %v1666
    %v1686 = vpack.c.b16 %v1669, %v1668
    %v1687 = vpack.c.b16 %v1671, %v1670
    %1704 = vmatprep.subr.bf16.mxu0 0
    %1705 = vmatpush1.bf16.xpose.msra.mxu0 %v1672
    %1706 = vmatprep.subr.bf16.mxu0 0
    %1707 = vmatpush1.bf16.xpose.msra.mxu0 %v1673
    %1708 = vmatprep.subr.bf16.mxu0 0
    %1709 = vmatpush1.bf16.xpose.msra.mxu0 %v1674
    %1710 = vmatprep.subr.bf16.mxu0 0
    %1711 = vmatpush1.bf16.xpose.msra.mxu0 %v1675
    %1712 = vmatprep.subr.bf16.mxu0 0
    %1713 = vmatpush1.bf16.xpose.msra.mxu0 %v1676
    %1714 = vmatprep.subr.bf16.mxu0 0
    %1715 = vmatpush1.bf16.xpose.msra.mxu0 %v1677
    %1716 = vmatprep.subr.bf16.mxu0 0
    %1717 = vmatpush1.bf16.xpose.msra.mxu0 %v1678
    %1718 = vmatprep.subr.bf16.mxu0 0
    %1719 = vmatpush1.bf16.xpose.msra.mxu0 %v1679
    %1720 = vmatprep.subr.bf16.mxu0 0
    %1721 = vmatpush1.bf16.xpose.msra.mxu0 %v1680
    %1722 = vmatprep.subr.bf16.mxu0 0
    %1723 = vmatpush1.bf16.xpose.msra.mxu0 %v1681
    %1724 = vmatprep.subr.bf16.mxu0 0
    %1725 = vmatpush1.bf16.xpose.msra.mxu0 %v1682
    %1726 = vmatprep.subr.bf16.mxu0 0
    %1727 = vmatpush1.bf16.xpose.msra.mxu0 %v1683
    %1728 = vmatprep.subr.bf16.mxu0 0
    %1729 = vmatpush1.bf16.xpose.msra.mxu0 %v1684
    %1730 = vmatprep.subr.bf16.mxu0 0
    %1731 = vmatpush1.bf16.xpose.msra.mxu0 %v1685
    %1732 = vmatprep.subr.bf16.mxu0 0
    %1733 = vmatpush1.bf16.xpose.msra.mxu0 %v1686
    %1734 = vmatprep.subr.bf16.mxu0 0
    %1735 = vmatpush1.bf16.xpose.msra.mxu0 %v1687
    %1736 = vmatprep.mubr.bf16.mxu0 0
    %1737 = vmatmul.mubr.bf16.gmra.mrb[0].mxu0 %v1595
    %v1738 = vpop.f32.mrb[0].mxu0
    %v1739 = vadd.f32 %v1601, %v1738
    %v1740 = vpop.f32.mrb[0].mxu0
    %v1741 = vadd.f32 %v1605, %v1740
    %v1742 = vpop.f32.mrb[0].mxu0
    %v1743 = vadd.f32 %v1601, %v1742
    %v1744 = vpop.f32.mrb[0].mxu0
    %v1745 = vadd.f32 %v1605, %v1744
    %1746 = vdwg.mxu0
    %v1747 = vmax.f32 %v1739, 0.0
    %v1748 = vmax.f32 %v1741, 0.0
    %v1749 = vmax.f32 %v1743, 0.0
    %v1750 = vmax.f32 %v1745, 0.0
    %v1751 = vld [vmem:[#allocation10] sm:$0xff]
    %v1752 = vld [vmem:[#allocation10 + $0x8] sm:$0xff]
    %v1753 = vld [vmem:[#allocation10 + $0x10] sm:$0xff]
    %v1754 = vld [vmem:[#allocation10 + $0x18] sm:$0xff]
    %v1755 = vld [vmem:[#allocation10 + $0x20] sm:$0xff]
    %v1756 = vld [vmem:[#allocation10 + $0x28] sm:$0xff]
    %v1757 = vld [vmem:[#allocation10 + $0x30] sm:$0xff]
    %v1758 = vld [vmem:[#allocation10 + $0x38] sm:$0xff]
    %v1759 = vld [vmem:[#allocation10 + $0x40] sm:$0xff]
    %v1760 = vld [vmem:[#allocation10 + $0x48] sm:$0xff]
    %v1761 = vld [vmem:[#allocation10 + $0x50] sm:$0xff]
    %v1762 = vld [vmem:[#allocation10 + $0x58] sm:$0xff]
    %v1763 = vld [vmem:[#allocation10 + $0x60] sm:$0xff]
    %v1764 = vld [vmem:[#allocation10 + $0x68] sm:$0xff]
    %v1765 = vld [vmem:[#allocation10 + $0x70] sm:$0xff]
    %v1766 = vld [vmem:[#allocation10 + $0x78] sm:$0xff]
    %v1767 = vpack.c.bf16 %v1749, %v1747
    %v1768 = vpack.c.bf16 %v1750, %v1748
    %v1769 = vld [vmem:[#allocation12] sm:$0x1]
    %v1771 = vlaneseq
    %v1772 = vshrl.u32 %v1771, 7
    %v1773 = vsub.s32 0, %v1772
    %v1774 = vrot.slane %v1769, %v1773
    %v1792 = vunpack.c.l.b16 %v1751
    %v1793 = vunpack.c.h.b16 %v1751
    %v1794 = vunpack.c.l.b16 %v1752
    %v1795 = vunpack.c.h.b16 %v1752
    %v1796 = vunpack.c.l.b16 %v1753
    %v1797 = vunpack.c.h.b16 %v1753
    %v1798 = vunpack.c.l.b16 %v1754
    %v1799 = vunpack.c.h.b16 %v1754
    %v1800 = vunpack.c.l.b16 %v1755
    %v1801 = vunpack.c.h.b16 %v1755
    %v1802 = vunpack.c.l.b16 %v1756
    %v1803 = vunpack.c.h.b16 %v1756
    %v1804 = vunpack.c.l.b16 %v1757
    %v1805 = vunpack.c.h.b16 %v1757
    %v1806 = vunpack.c.l.b16 %v1758
    %v1807 = vunpack.c.h.b16 %v1758
    %v1808 = vunpack.c.l.b16 %v1759
    %v1809 = vunpack.c.h.b16 %v1759
    %v1810 = vunpack.c.l.b16 %v1760
    %v1811 = vunpack.c.h.b16 %v1760
    %v1812 = vunpack.c.l.b16 %v1761
    %v1813 = vunpack.c.h.b16 %v1761
    %v1814 = vunpack.c.l.b16 %v1762
    %v1815 = vunpack.c.h.b16 %v1762
    %v1816 = vunpack.c.l.b16 %v1763
    %v1817 = vunpack.c.h.b16 %v1763
    %v1818 = vunpack.c.l.b16 %v1764
    %v1819 = vunpack.c.h.b16 %v1764
    %v1820 = vunpack.c.l.b16 %v1765
    %v1821 = vunpack.c.h.b16 %v1765
    %v1822 = vunpack.c.l.b16 %v1766
    %v1823 = vunpack.c.h.b16 %v1766
    %v1824 = vpack.c.b16 %v1794, %v1792
    %v1825 = vpack.c.b16 %v1795, %v1793
    %v1826 = vpack.c.b16 %v1798, %v1796
    %v1827 = vpack.c.b16 %v1799, %v1797
    %v1828 = vpack.c.b16 %v1802, %v1800
    %v1829 = vpack.c.b16 %v1803, %v1801
    %v1830 = vpack.c.b16 %v1806, %v1804
    %v1831 = vpack.c.b16 %v1807, %v1805
    %v1832 = vpack.c.b16 %v1810, %v1808
    %v1833 = vpack.c.b16 %v1811, %v1809
    %v1834 = vpack.c.b16 %v1814, %v1812
    %v1835 = vpack.c.b16 %v1815, %v1813
    %v1836 = vpack.c.b16 %v1818, %v1816
    %v1837 = vpack.c.b16 %v1819, %v1817
    %v1838 = vpack.c.b16 %v1822, %v1820
    %v1839 = vpack.c.b16 %v1823, %v1821
    %1856 = vmatprep.subr.bf16.mxu0 %v1825
    %1857 = vmatpush1.bf16.xpose.msra.mxu0 %v1824
    %1858 = vmatprep.subr.bf16.mxu0 %v1827
    %1859 = vmatpush1.bf16.xpose.msra.mxu0 %v1826
    %1860 = vmatprep.subr.bf16.mxu0 %v1829
    %1861 = vmatpush1.bf16.xpose.msra.mxu0 %v1828
    %1862 = vmatprep.subr.bf16.mxu0 %v1831
    %1863 = vmatpush1.bf16.xpose.msra.mxu0 %v1830
    %1864 = vmatprep.subr.bf16.mxu0 %v1833
    %1865 = vmatpush1.bf16.xpose.msra.mxu0 %v1832
    %1866 = vmatprep.subr.bf16.mxu0 %v1835
    %1867 = vmatpush1.bf16.xpose.msra.mxu0 %v1834
    %1868 = vmatprep.subr.bf16.mxu0 %v1837
    %1869 = vmatpush1.bf16.xpose.msra.mxu0 %v1836
    %1870 = vmatprep.subr.bf16.mxu0 %v1839
    %1871 = vmatpush1.bf16.xpose.msra.mxu0 %v1838
    %1872 = vmatprep.subr.bf16.mxu0 0
    %1873 = vmatpush1.bf16.xpose.msra.mxu0 0
    %1874 = vmatprep.subr.bf16.mxu0 0
    %1875 = vmatpush1.bf16.xpose.msra.mxu0 0
    %1876 = vmatprep.subr.bf16.mxu0 0
    %1877 = vmatpush1.bf16.xpose.msra.mxu0 0
    %1878 = vmatprep.subr.bf16.mxu0 0
    %1879 = vmatpush1.bf16.xpose.msra.mxu0 0
    %1880 = vmatprep.subr.bf16.mxu0 0
    %1881 = vmatpush1.bf16.xpose.msra.mxu0 0
    %1882 = vmatprep.subr.bf16.mxu0 0
    %1883 = vmatpush1.bf16.xpose.msra.mxu0 0
    %1884 = vmatprep.subr.bf16.mxu0 0
    %1885 = vmatpush1.bf16.xpose.msra.mxu0 0
    %1886 = vmatprep.subr.bf16.mxu0 0
    %1887 = vmatpush1.bf16.xpose.msra.mxu0 0
    %1888 = vmatprep.mubr.bf16.mxu0 %v1768
    %1889 = vmatmul.mubr.bf16.gmra.mrb[0].mxu0 %v1767
    %v1890 = vpop.f32.mrb[0].mxu0
    %v1891 = vadd.f32 %v1774, %v1890
    %v1892 = vpop.f32.mrb[0].mxu0
    %v1893 = vpop.f32.mrb[0].mxu0
    %v1894 = vadd.f32 %v1774, %v1893
    %v1895 = vpop.f32.mrb[0].mxu0
    %1896 = vdwg.mxu0
    %v1897 = vadd.f32 %v1561, %v1891
    %v1898 = vadd.f32 %v1562, %v1894
    %v1899 = vld [vmem:[#allocation13] sm:$0x1]
    %v1900 = vld [vmem:[#allocation15] sm:$0x1]
    %1901 = vadd.xlane.f32.xlu0 %v1897
    %v1902 = vpop.xlane.xlu0 %1901
    %1903 = vadd.xlane.f32.xlu0 %v1898
    %v1904 = vpop.xlane.xlu0 %1903
    %v1905 = vmul.f32 %v1902, %v1528
    %v1906 = vmul.f32 %v1904, %v1528
    %v1907 = vsub.f32 %v1897, %v1905
    %v1908 = vsub.f32 %v1898, %v1906
    %v1909 = vmul.f32 %v1907, %v1907
    %v1910 = vmul.f32 %v1908, %v1908
    %1911 = vadd.xlane.f32.xlu0 %v1909
    %v1912 = vpop.xlane.xlu0 %1911
    %1913 = vadd.xlane.f32.xlu0 %v1910
    %v1914 = vpop.xlane.xlu0 %1913
    %v1915 = vmul.f32 %v1912, %v1528
    %v1916 = vmul.f32 %v1914, %v1528
    %v1917 = vadd.f32 %v1915, 1e-05
    %v1918 = vadd.f32 %v1916, 1e-05
    %v1919 = vrsqrt.pop %v1917
    %v1920 = vrsqrt.pop %v1918
    %v1921 = vmul.f32 %v1907, %v1919
    %v1922 = vmul.f32 %v1908, %v1920
    %v1924 = vlaneseq
    %v1925 = vshrl.u32 %v1924, 7
    %v1926 = vsub.s32 0, %v1925
    %v1927 = vrot.slane %v1899, %v1926
    %v1929 = vmul.f32 %v1921, %v1927
    %v1930 = vmul.f32 %v1922, %v1927
    %v1932 = vlaneseq
    %v1933 = vshrl.u32 %v1932, 7
    %v1934 = vsub.s32 0, %v1933
    %v1935 = vrot.slane %v1900, %v1934
    %v1937 = vadd.f32 %v1929, %v1935
    %v1938 = vadd.f32 %v1930, %v1935
    %v1939 = vpack.c.bf16 %v1937, %v1937
    %v1940 = vpack.c.bf16 %v1938, %v1938
    %1941 = vst [vmem:[%s14] sm:$0xf] %v1939
    %1942 = vst [vmem:[%s14 + $0x4] sm:$0xf] %v1940
    // Predicated region
    $region94: #{text_classifier_forward.3} parent=1 // pred_check
      _
    $region95: #{text_classifier_forward.3} parent=1 // pred_check_branch
      %1944 = sbr.rel (0) target = $region97
    $region96: #{text_classifier_forward.3} parent=1 // pred_region
      _
    $region97: #{text_classifier_forward.3} parent=1 // pred_fallthru
      _
    // Predicated region
    $region98: #{text_classifier_forward.3} parent=1 // pred_check
      _
    $region99: #{text_classifier_forward.3} parent=1 // pred_check_branch
      %1946 = sbr.rel (0) target = $region101
    $region100: #{text_classifier_forward.3} parent=1 // pred_region
      _
    $region101: #{text_classifier_forward.3} parent=1 // pred_fallthru
      _
    %1947 = vsyncpa [#allocation3], 1
    %1948 = vsyncpa [#allocation5], 1
    %1949 = vsyncpa [#allocation8], 1
    %1950 = vsyncpa [#allocation11], 1
    %1951 = vsyncpa [#allocation14], 1

// kernel: text_classifier_forward.4
$region0: #{text_classifier_forward.4}
  #allocation0 [shape = 'u32[]', space=smem, size = 0x4, offset = 0x4, fixed_abs, tag = 'smem constant byte address 0x4 - core index']
  #allocation1 [shape = 'u32[144,128]{1,0:T(1,128)}', space=vmem, size = 0x12000, scoped, tag = 'internal scratch']
  %s0 = inlined_call_operand.vmem [shape: s32[2,8], index: 0, kind: input, shape index: {}]
  %s1 = inlined_call_operand.vmem [shape: bf16[2,8,128], index: 1, kind: input, shape index: {}]
  %s2 = inlined_call_operand.vmem [shape: bf16[384,128], index: 2, kind: input, shape index: {}]
  %s3 = inlined_call_operand.vmem [shape: f32[1,384], index: 3, kind: input, shape index: {}]
  %s4 = inlined_call_operand.vmem [shape: bf16[128,128], index: 4, kind: input, shape index: {}]
  %s5 = inlined_call_operand.vmem [shape: f32[1,128], index: 5, kind: input, shape index: {}]
  %s6 = inlined_call_operand.vmem [shape: f32[1,128], index: 6, kind: input, shape index: {}]
  %s7 = inlined_call_operand.vmem [shape: f32[1,128], index: 7, kind: input, shape index: {}]
  %s8 = inlined_call_operand.vmem [shape: bf16[256,128], index: 8, kind: input, shape index: {}]
  %s9 = inlined_call_operand.vmem [shape: f32[1,256], index: 9, kind: input, shape index: {}]
  %s10 = inlined_call_operand.vmem [shape: bf16[128,256], index: 10, kind: input, shape index: {}]
  %s11 = inlined_call_operand.vmem [shape: f32[1,128], index: 11, kind: input, shape index: {}]
  %s12 = inlined_call_operand.vmem [shape: f32[1,128], index: 12, kind: input, shape index: {}]
  %s13 = inlined_call_operand.vmem [shape: f32[1,128], index: 13, kind: input, shape index: {}]
  %s14 = inlined_call_operand.vmem [shape: bf16[2,8,128], index: 14, kind: output, shape index: {}]
  %s15 = sld [smem:[#allocation0]]
  $region66: #{text_classifier_forward.4} parent=0
    _
  %s17 = ssub.s32 1, %s15
  %s18 = scalar_select 0, %s17, %s15
  // Predicated region
  $region2: #{text_classifier_forward.4} parent=0 // pred_check
    _
  $region3: #{text_classifier_forward.4} parent=0 // pred_check_branch
    %20 = sbr.rel (0) target = $region5
  $region4: #{text_classifier_forward.4} parent=0 // pred_region
    _
  $region5: #{text_classifier_forward.4} parent=0 // pred_fallthru
    _
  // Predicated region
  $region6: #{text_classifier_forward.4} parent=0 // pred_check
    _
  $region7: #{text_classifier_forward.4} parent=0 // pred_check_branch
    %22 = sbr.rel (0) target = $region9
  $region8: #{text_classifier_forward.4} parent=0 // pred_region
    _
  $region9: #{text_classifier_forward.4} parent=0 // pred_fallthru
    _
  // Predicated region
  $region10: #{text_classifier_forward.4} parent=0 // pred_check
    _
  $region11: #{text_classifier_forward.4} parent=0 // pred_check_branch
    %24 = sbr.rel (0) target = $region13
  $region12: #{text_classifier_forward.4} parent=0 // pred_region
    _
  $region13: #{text_classifier_forward.4} parent=0 // pred_fallthru
    _
  // Predicated region
  $region14: #{text_classifier_forward.4} parent=0 // pred_check
    _
  $region15: #{text_classifier_forward.4} parent=0 // pred_check_branch
    %26 = sbr.rel (0) target = $region17
  $region16: #{text_classifier_forward.4} parent=0 // pred_region
    _
  $region17: #{text_classifier_forward.4} parent=0 // pred_fallthru
    _
  // Predicated region
  $region18: #{text_classifier_forward.4} parent=0 // pred_check
    _
  $region19: #{text_classifier_forward.4} parent=0 // pred_check_branch
    %28 = sbr.rel (0) target = $region21
  $region20: #{text_classifier_forward.4} parent=0 // pred_region
    _
  $region21: #{text_classifier_forward.4} parent=0 // pred_fallthru
    _
  // Predicated region
  $region22: #{text_classifier_forward.4} parent=0 // pred_check
    _
  $region23: #{text_classifier_forward.4} parent=0 // pred_check_branch
    %30 = sbr.rel (0) target = $region25
  $region24: #{text_classifier_forward.4} parent=0 // pred_region
    _
  $region25: #{text_classifier_forward.4} parent=0 // pred_fallthru
    _
  // Predicated region
  $region26: #{text_classifier_forward.4} parent=0 // pred_check
    _
  $region27: #{text_classifier_forward.4} parent=0 // pred_check_branch
    %32 = sbr.rel (0) target = $region29
  $region28: #{text_classifier_forward.4} parent=0 // pred_region
    _
  $region29: #{text_classifier_forward.4} parent=0 // pred_fallthru
    _
  // Predicated region
  $region30: #{text_classifier_forward.4} parent=0 // pred_check
    _
  $region31: #{text_classifier_forward.4} parent=0 // pred_check_branch
    %34 = sbr.rel (0) target = $region33
  $region32: #{text_classifier_forward.4} parent=0 // pred_region
    _
  $region33: #{text_classifier_forward.4} parent=0 // pred_fallthru
    _
  // Predicated region
  $region34: #{text_classifier_forward.4} parent=0 // pred_check
    _
  $region35: #{text_classifier_forward.4} parent=0 // pred_check_branch
    %36 = sbr.rel (0) target = $region37
  $region36: #{text_classifier_forward.4} parent=0 // pred_region
    _
  $region37: #{text_classifier_forward.4} parent=0 // pred_fallthru
    _
  // Predicated region
  $region38: #{text_classifier_forward.4} parent=0 // pred_check
    _
  $region39: #{text_classifier_forward.4} parent=0 // pred_check_branch
    %38 = sbr.rel (0) target = $region41
  $region40: #{text_classifier_forward.4} parent=0 // pred_region
    _
  $region41: #{text_classifier_forward.4} parent=0 // pred_fallthru
    _
  // Predicated region
  $region42: #{text_classifier_forward.4} parent=0 // pred_check
    _
  $region43: #{text_classifier_forward.4} parent=0 // pred_check_branch
    %40 = sbr.rel (0) target = $region45
  $region44: #{text_classifier_forward.4} parent=0 // pred_region
    _
  $region45: #{text_classifier_forward.4} parent=0 // pred_fallthru
    _
  // Predicated region
  $region46: #{text_classifier_forward.4} parent=0 // pred_check
    _
  $region47: #{text_classifier_forward.4} parent=0 // pred_check_branch
    %42 = sbr.rel (0) target = $region49
  $region48: #{text_classifier_forward.4} parent=0 // pred_region
    _
  $region49: #{text_classifier_forward.4} parent=0 // pred_fallthru
    _
  // Predicated region
  $region50: #{text_classifier_forward.4} parent=0 // pred_check
    _
  $region51: #{text_classifier_forward.4} parent=0 // pred_check_branch
    %44 = sbr.rel (0) target = $region53
  $region52: #{text_classifier_forward.4} parent=0 // pred_region
    _
  $region53: #{text_classifier_forward.4} parent=0 // pred_fallthru
    _
  // Predicated region
  $region54: #{text_classifier_forward.4} parent=0 // pred_check
    _
  $region55: #{text_classifier_forward.4} parent=0 // pred_check_branch
    %46 = sbr.rel (0) target = $region57
  $region56: #{text_classifier_forward.4} parent=0 // pred_region
    _
  $region57: #{text_classifier_forward.4} parent=0 // pred_fallthru
    _
  %v48 = vld [vmem:[%s1] sm:$0xf]
  %v49 = vld [vmem:[%s1 + $0x4] sm:$0xf]
  %v50 = vunpack.c.l.bf16 %v48
  %v51 = vunpack.c.l.bf16 %v49
  %v52 = vld [vmem:[%s2] sm:$0xf]
  %v53 = vld [vmem:[%s2 + $0x4] sm:$0xf]
  %v54 = vld [vmem:[%s2 + $0x8] sm:$0xf]
  %v55 = vld [vmem:[%s2 + $0xc] sm:$0xf]
  %v56 = vld [vmem:[%s2 + $0x10] sm:$0xf]
  %v57 = vld [vmem:[%s2 + $0x14] sm:$0xf]
  %v58 = vld [vmem:[%s2 + $0x18] sm:$0xf]
  %v59 = vld [vmem:[%s2 + $0x1c] sm:$0xf]
  %v60 = vld [vmem:[%s2 + $0x20] sm:$0xf]
  %v61 = vld [vmem:[%s2 + $0x24] sm:$0xf]
  %v62 = vld [vmem:[%s2 + $0x28] sm:$0xf]
  %v63 = vld [vmem:[%s2 + $0x2c] sm:$0xf]
  %v64 = vld [vmem:[%s2 + $0x30] sm:$0xf]
  %v65 = vld [vmem:[%s2 + $0x34] sm:$0xf]
  %v66 = vld [vmem:[%s2 + $0x38] sm:$0xf]
  %v67 = vld [vmem:[%s2 + $0x3c] sm:$0xf]
  %v68 = vld [vmem:[%s2 + $0x40] sm:$0xf]
  %v69 = vld [vmem:[%s2 + $0x44] sm:$0xf]
  %v70 = vld [vmem:[%s2 + $0x48] sm:$0xf]
  %v71 = vld [vmem:[%s2 + $0x4c] sm:$0xf]
  %v72 = vld [vmem:[%s2 + $0x50] sm:$0xf]
  %v73 = vld [vmem:[%s2 + $0x54] sm:$0xf]
  %v74 = vld [vmem:[%s2 + $0x58] sm:$0xf]
  %v75 = vld [vmem:[%s2 + $0x5c] sm:$0xf]
  %v76 = vld [vmem:[%s2 + $0x60] sm:$0xf]
  %v77 = vld [vmem:[%s2 + $0x64] sm:$0xf]
  %v78 = vld [vmem:[%s2 + $0x68] sm:$0xf]
  %v79 = vld [vmem:[%s2 + $0x6c] sm:$0xf]
  %v80 = vld [vmem:[%s2 + $0x70] sm:$0xf]
  %v81 = vld [vmem:[%s2 + $0x74] sm:$0xf]
  %v82 = vld [vmem:[%s2 + $0x78] sm:$0xf]
  %v83 = vld [vmem:[%s2 + $0x7c] sm:$0xf]
  %v84 = vld [vmem:[%s2 + $0x80] sm:$0xf]
  %v85 = vld [vmem:[%s2 + $0x84] sm:$0xf]
  %v86 = vld [vmem:[%s2 + $0x88] sm:$0xf]
  %v87 = vld [vmem:[%s2 + $0x8c] sm:$0xf]
  %v88 = vld [vmem:[%s2 + $0x90] sm:$0xf]
  %v89 = vld [vmem:[%s2 + $0x94] sm:$0xf]
  %v90 = vld [vmem:[%s2 + $0x98] sm:$0xf]
  %v91 = vld [vmem:[%s2 + $0x9c] sm:$0xf]
  %v92 = vld [vmem:[%s2 + $0xa0] sm:$0xf]
  %v93 = vld [vmem:[%s2 + $0xa4] sm:$0xf]
  %v94 = vld [vmem:[%s2 + $0xa8] sm:$0xf]
  %v95 = vld [vmem:[%s2 + $0xac] sm:$0xf]
  %v96 = vld [vmem:[%s2 + $0xb0] sm:$0xf]
  %v97 = vld [vmem:[%s2 + $0xb4] sm:$0xf]
  %v98 = vld [vmem:[%s2 + $0xb8] sm:$0xf]
  %v99 = vld [vmem:[%s2 + $0xbc] sm:$0xf]
  %v100 = vpack.c.bf16 %v51, %v50
  %v101 = vld [vmem:[%s3] sm:$0x7]
  %v103 = vlaneseq
  %v104 = vshrl.u32 %v103, 7
  %v105 = vsub.s32 0, %v104
  %v106 = vrot.slane %v101, %v105
  %v107 = vlaneseq
  %v108 = vshrl.u32 %v107, 7
  %v109 = vsub.s32 1, %v108
  %v110 = vrot.slane %v101, %v109
  %v111 = vlaneseq
  %v112 = vshrl.u32 %v111, 7
  %v113 = vsub.s32 2, %v112
  %v114 = vrot.slane %v101, %v113
  %v166 = vunpack.c.l.b16 %v52
  %v167 = vunpack.c.l.b16 %v53
  %v168 = vunpack.c.l.b16 %v54
  %v169 = vunpack.c.l.b16 %v55
  %v170 = vunpack.c.l.b16 %v56
  %v171 = vunpack.c.l.b16 %v57
  %v172 = vunpack.c.l.b16 %v58
  %v173 = vunpack.c.l.b16 %v59
  %v174 = vunpack.c.l.b16 %v60
  %v175 = vunpack.c.l.b16 %v61
  %v176 = vunpack.c.l.b16 %v62
  %v177 = vunpack.c.l.b16 %v63
  %v178 = vunpack.c.l.b16 %v64
  %v179 = vunpack.c.l.b16 %v65
  %v180 = vunpack.c.l.b16 %v66
  %v181 = vunpack.c.l.b16 %v67
  %v182 = vunpack.c.l.b16 %v68
  %v183 = vunpack.c.l.b16 %v69
  %v184 = vunpack.c.l.b16 %v70
  %v185 = vunpack.c.l.b16 %v71
  %v186 = vunpack.c.l.b16 %v72
  %v187 = vunpack.c.l.b16 %v73
  %v188 = vunpack.c.l.b16 %v74
  %v189 = vunpack.c.l.b16 %v75
  %v190 = vunpack.c.l.b16 %v76
  %v191 = vunpack.c.l.b16 %v77
  %v192 = vunpack.c.l.b16 %v78
  %v193 = vunpack.c.l.b16 %v79
  %v194 = vunpack.c.l.b16 %v80
  %v195 = vunpack.c.l.b16 %v81
  %v196 = vunpack.c.l.b16 %v82
  %v197 = vunpack.c.l.b16 %v83
  %v198 = vunpack.c.l.b16 %v84
  %v199 = vunpack.c.l.b16 %v85
  %v200 = vunpack.c.l.b16 %v86
  %v201 = vunpack.c.l.b16 %v87
  %v202 = vunpack.c.l.b16 %v88
  %v203 = vunpack.c.l.b16 %v89
  %v204 = vunpack.c.l.b16 %v90
  %v205 = vunpack.c.l.b16 %v91
  %v206 = vunpack.c.l.b16 %v92
  %v207 = vunpack.c.l.b16 %v93
  %v208 = vunpack.c.l.b16 %v94
  %v209 = vunpack.c.l.b16 %v95
  %v210 = vunpack.c.l.b16 %v96
  %v211 = vunpack.c.l.b16 %v97
  %v212 = vunpack.c.l.b16 %v98
  %v213 = vunpack.c.l.b16 %v99
  %v214 = vpack.c.b16 %v167, %v166
  %v215 = vpack.c.b16 %v169, %v168
  %v216 = vpack.c.b16 %v171, %v170
  %v217 = vpack.c.b16 %v173, %v172
  %v218 = vpack.c.b16 %v175, %v174
  %v219 = vpack.c.b16 %v177, %v176
  %v220 = vpack.c.b16 %v179, %v178
  %v221 = vpack.c.b16 %v181, %v180
  %v222 = vpack.c.b16 %v183, %v182
  %v223 = vpack.c.b16 %v185, %v184
  %v224 = vpack.c.b16 %v187, %v186
  %v225 = vpack.c.b16 %v189, %v188
  %v226 = vpack.c.b16 %v191, %v190
  %v227 = vpack.c.b16 %v193, %v192
  %v228 = vpack.c.b16 %v195, %v194
  %v229 = vpack.c.b16 %v197, %v196
  %v230 = vpack.c.b16 %v199, %v198
  %v231 = vpack.c.b16 %v201, %v200
  %v232 = vpack.c.b16 %v203, %v202
  %v233 = vpack.c.b16 %v205, %v204
  %v234 = vpack.c.b16 %v207, %v206
  %v235 = vpack.c.b16 %v209, %v208
  %v236 = vpack.c.b16 %v211, %v210
  %v237 = vpack.c.b16 %v213, %v212
  %262 = vmatprep.subr.bf16.mxu0 0
  %263 = vmatpush1.bf16.xpose.msra.mxu0 %v214
  %264 = vmatprep.subr.bf16.mxu0 0
  %265 = vmatpush1.bf16.xpose.msra.mxu0 %v215
  %266 = vmatprep.subr.bf16.mxu0 0
  %267 = vmatpush1.bf16.xpose.msra.mxu0 %v216
  %268 = vmatprep.subr.bf16.mxu0 0
  %269 = vmatpush1.bf16.xpose.msra.mxu0 %v217
  %270 = vmatprep.subr.bf16.mxu0 0
  %271 = vmatpush1.bf16.xpose.msra.mxu0 %v218
  %272 = vmatprep.subr.bf16.mxu0 0
  %273 = vmatpush1.bf16.xpose.msra.mxu0 %v219
  %274 = vmatprep.subr.bf16.mxu0 0
  %275 = vmatpush1.bf16.xpose.msra.mxu0 %v220
  %276 = vmatprep.subr.bf16.mxu0 0
  %277 = vmatpush1.bf16.xpose.msra.mxu0 %v221
  %278 = vmatprep.subr.bf16.mxu0 0
  %279 = vmatpush1.bf16.xpose.msra.mxu0 %v222
  %280 = vmatprep.subr.bf16.mxu0 0
  %281 = vmatpush1.bf16.xpose.msra.mxu0 %v223
  %282 = vmatprep.subr.bf16.mxu0 0
  %283 = vmatpush1.bf16.xpose.msra.mxu0 %v224
  %284 = vmatprep.subr.bf16.mxu0 0
  %285 = vmatpush1.bf16.xpose.msra.mxu0 %v225
  %286 = vmatprep.subr.bf16.mxu0 0
  %287 = vmatpush1.bf16.xpose.msra.mxu0 %v226
  %288 = vmatprep.subr.bf16.mxu0 0
  %289 = vmatpush1.bf16.xpose.msra.mxu0 %v227
  %290 = vmatprep.subr.bf16.mxu0 0
  %291 = vmatpush1.bf16.xpose.msra.mxu0 %v228
  %292 = vmatprep.subr.bf16.mxu0 0
  %293 = vmatpush1.bf16.xpose.msra.mxu0 %v229
  %294 = vmatprep.mubr.bf16.mxu0 0
  %295 = vmatmul.mubr.bf16.gmra.mrb[0].mxu0 %v100
  %v296 = vpop.f32.mrb[0].mxu0
  %v297 = vadd.f32 %v106, %v296
  %v298 = vpop.f32.mrb[0].mxu0
  %v299 = vadd.f32 %v110, %v298
  %v300 = vpop.f32.mrb[0].mxu0
  %v301 = vadd.f32 %v106, %v300
  %v302 = vpop.f32.mrb[0].mxu0
  %v303 = vadd.f32 %v110, %v302
  %304 = vdwg.mxu0
  %305 = vmatprep.subr.bf16.mxu0 0
  %306 = vmatpush1.bf16.xpose.msra.mxu0 %v230
  %307 = vmatprep.subr.bf16.mxu0 0
  %308 = vmatpush1.bf16.xpose.msra.mxu0 %v231
  %309 = vmatprep.subr.bf16.mxu0 0
  %310 = vmatpush1.bf16.xpose.msra.mxu0 %v232
  %311 = vmatprep.subr.bf16.mxu0 0
  %312 = vmatpush1.bf16.xpose.msra.mxu0 %v233
  %313 = vmatprep.subr.bf16.mxu0 0
  %314 = vmatpush1.bf16.xpose.msra.mxu0 %v234
  %315 = vmatprep.subr.bf16.mxu0 0
  %316 = vmatpush1.bf16.xpose.msra.mxu0 %v235
  %317 = vmatprep.subr.bf16.mxu0 0
  %318 = vmatpush1.bf16.xpose.msra.mxu0 %v236
  %319 = vmatprep.subr.bf16.mxu0 0
  %320 = vmatpush1.bf16.xpose.msra.mxu0 %v237
  %321 = vmatprep.subr.bf16.mxu0 0
  %322 = vmatpush1.bf16.xpose.msra.mxu0 0
  %323 = vmatprep.subr.bf16.mxu0 0
  %324 = vmatpush1.bf16.xpose.msra.mxu0 0
  %325 = vmatprep.subr.bf16.mxu0 0
  %326 = vmatpush1.bf16.xpose.msra.mxu0 0
  %327 = vmatprep.subr.bf16.mxu0 0
  %328 = vmatpush1.bf16.xpose.msra.mxu0 0
  %329 = vmatprep.subr.bf16.mxu0 0
  %330 = vmatpush1.bf16.xpose.msra.mxu0 0
  %331 = vmatprep.subr.bf16.mxu0 0
  %332 = vmatpush1.bf16.xpose.msra.mxu0 0
  %333 = vmatprep.subr.bf16.mxu0 0
  %334 = vmatpush1.bf16.xpose.msra.mxu0 0
  %335 = vmatprep.subr.bf16.mxu0 0
  %336 = vmatpush1.bf16.xpose.msra.mxu0 0
  %337 = vmatprep.mubr.bf16.mxu0 0
  %338 = vmatmul.mubr.bf16.gmra.mrb[0].mxu0 %v100
  %v339 = vpop.f32.mrb[0].mxu0
  %v340 = vadd.f32 %v114, %v339
  %v341 = vpop.f32.mrb[0].mxu0
  %v342 = vpop.f32.mrb[0].mxu0
  %v343 = vadd.f32 %v114, %v342
  %v344 = vpop.f32.mrb[0].mxu0
  %345 = vdwg.mxu0
  %v346 = vmul.f32 %v297, 0.17677669
  %v347 = vmul.f32 %v301, 0.17677669
  %v348 = vld [vmem:[%s0] sm:$0x3]
  %vm349 = vcmp.eq.s32.totalorder %v348, 0
  %v350 = vsel %vm349, -1e+09, 0.0
  %v353 = vunpack.c.l.s4 1966171168
  %v354 = vunpack.c.0.s8 %v353
  %v355 = vlaneseq
  %v356 = vshrl.u32 %v355, 7
  %v357 = vsub.s32 %v354, %v356
  %v358 = vrot.slane %v350, %v357
  %v359 = vcombine.high %v358, %v358
  %v361 = vunpack.c.l.s4 1966171168
  %v362 = vunpack.c.0.s8 %v361
  %v363 = vlaneseq
  %v364 = vshrl.u32 %v363, 7
  %v365 = vsub.s32 %v362, %v364
  %v366 = vrot.slane %v358, %v365
  %v368 = vunpack.c.l.s4 1966171168
  %v369 = vunpack.c.0.s8 %v368
  %v370 = vlaneseq
  %v371 = vshrl.u32 %v370, 7
  %v372 = vsub.s32 %v369, %v371
  %v373 = vrot.slane %v359, %v372
  %v374 = vpack.c.bf16 %v346, %v346
  %v375 = vpack.c.bf16 %v347, %v347
  %v376 = vpack.c.bf16 %v299, %v299
  %v377 = vpack.c.bf16 %v303, %v303
  %v378 = vlaneseq
  %v379 = vshrl.u32 %v378, 7
  %v380 = vsub.s32 0, %v379
  %v381 = vrot.slane %v366, %v380
  %v382 = vlaneseq
  %v383 = vshrl.u32 %v382, 7
  %v384 = vsub.s32 0, %v383
  %v385 = vrot.slane %v373, %v384
  %vm388 = vcmask 261120
  %v390 = vsel %vm388, %v374, 0
  %v393 = vsel %vm388, %v376, 0
  %395 = vmatprep.subr.bf16.mxu0 0
  %396 = vmatpush1.bf16.xpose.msra.mxu0 %v393
  %397 = vmatprep.subr.bf16.mxu0 0
  %398 = vmatpush1.bf16.xpose.msra.mxu0 0
  %399 = vmatprep.subr.bf16.mxu0 0
  %400 = vmatpush1.bf16.xpose.msra.mxu0 0
  %401 = vmatprep.subr.bf16.mxu0 0
  %402 = vmatpush1.bf16.xpose.msra.mxu0 0
  %403 = vmatprep.subr.bf16.mxu0 0
  %404 = vmatpush1.bf16.xpose.msra.mxu0 0
  %405 = vmatprep.subr.bf16.mxu0 0
  %406 = vmatpush1.bf16.xpose.msra.mxu0 0
  %407 = vmatprep.subr.bf16.mxu0 0
  %408 = vmatpush1.bf16.xpose.msra.mxu0 0
  %409 = vmatprep.subr.bf16.mxu0 0
  %410 = vmatpush1.bf16.xpose.msra.mxu0 0
  %411 = vmatprep.subr.bf16.mxu0 0
  %412 = vmatpush1.bf16.xpose.msra.mxu0 0
  %413 = vmatprep.subr.bf16.mxu0 0
  %414 = vmatpush1.bf16.xpose.msra.mxu0 0
  %415 = vmatprep.subr.bf16.mxu0 0
  %416 = vmatpush1.bf16.xpose.msra.mxu0 0
  %417 = vmatprep.subr.bf16.mxu0 0
  %418 = vmatpush1.bf16.xpose.msra.mxu0 0
  %419 = vmatprep.subr.bf16.mxu0 0
  %420 = vmatpush1.bf16.xpose.msra.mxu0 0
  %421 = vmatprep.subr.bf16.mxu0 0
  %422 = vmatpush1.bf16.xpose.msra.mxu0 0
  %423 = vmatprep.subr.bf16.mxu0 0
  %424 = vmatpush1.bf16.xpose.msra.mxu0 0
  %425 = vmatprep.subr.bf16.mxu0 0
  %426 = vmatpush1.bf16.xpose.msra.mxu0 0
  %427 = vmatprep.mubr.bf16.mxu0 0
  %428 = vmatmul.mubr.bf16.gmra.mrb[0].mxu0 %v390
  %v429 = vpop.f32.mrb[0].mxu0
  %v430 = vadd.f32 %v381, %v429
  %v431 = vpop.f32.mrb[0].mxu0
  %v432 = vpop.f32.mrb[0].mxu0
  %v433 = vpop.f32.mrb[0].mxu0
  %434 = vdwg.mxu0
  %v436 = vsel %vm388, %v375, 0
  %v439 = vsel %vm388, %v377, 0
  %441 = vmatprep.subr.bf16.mxu0 0
  %442 = vmatpush1.bf16.xpose.msra.mxu0 %v439
  %443 = vmatprep.subr.bf16.mxu0 0
  %444 = vmatpush1.bf16.xpose.msra.mxu0 0
  %445 = vmatprep.subr.bf16.mxu0 0
  %446 = vmatpush1.bf16.xpose.msra.mxu0 0
  %447 = vmatprep.subr.bf16.mxu0 0
  %448 = vmatpush1.bf16.xpose.msra.mxu0 0
  %449 = vmatprep.subr.bf16.mxu0 0
  %450 = vmatpush1.bf16.xpose.msra.mxu0 0
  %451 = vmatprep.subr.bf16.mxu0 0
  %452 = vmatpush1.bf16.xpose.msra.mxu0 0
  %453 = vmatprep.subr.bf16.mxu0 0
  %454 = vmatpush1.bf16.xpose.msra.mxu0 0
  %455 = vmatprep.subr.bf16.mxu0 0
  %456 = vmatpush1.bf16.xpose.msra.mxu0 0
  %457 = vmatprep.subr.bf16.mxu0 0
  %458 = vmatpush1.bf16.xpose.msra.mxu0 0
  %459 = vmatprep.subr.bf16.mxu0 0
  %460 = vmatpush1.bf16.xpose.msra.mxu0 0
  %461 = vmatprep.subr.bf16.mxu0 0
  %462 = vmatpush1.bf16.xpose.msra.mxu0 0
  %463 = vmatprep.subr.bf16.mxu0 0
  %464 = vmatpush1.bf16.xpose.msra.mxu0 0
  %465 = vmatprep.subr.bf16.mxu0 0
  %466 = vmatpush1.bf16.xpose.msra.mxu0 0
  %467 = vmatprep.subr.bf16.mxu0 0
  %468 = vmatpush1.bf16.xpose.msra.mxu0 0
  %469 = vmatprep.subr.bf16.mxu0 0
  %470 = vmatpush1.bf16.xpose.msra.mxu0 0
  %471 = vmatprep.subr.bf16.mxu0 0
  %472 = vmatpush1.bf16.xpose.msra.mxu0 0
  %473 = vmatprep.mubr.bf16.mxu0 0
  %474 = vmatmul.mubr.bf16.gmra.mrb[0].mxu0 %v436
  %v475 = vpop.f32.mrb[0].mxu0
  %v476 = vadd.f32 %v385, %v475
  %v477 = vpop.f32.mrb[0].mxu0
  %v478 = vpop.f32.mrb[0].mxu0
  %v479 = vpop.f32.mrb[0].mxu0
  %480 = vdwg.mxu0
  %vm481 = vcmask 64512
  %v482 = vsel %vm481, %v430, -inf
  %483 = vmax.xlane.f32.xlu0 %v482
  %v484 = vpop.xlane.xlu0 %483
  %v485 = vsel %vm481, %v476, -inf
  %486 = vmax.xlane.f32.xlu0 %v485
  %v487 = vpop.xlane.xlu0 %486
  %v488 = vsub.f32 %v430, %v484
  %v489 = vsub.f32 %v476, %v487
  %v490 = vmul.f32 %v488, 1.442695
  %v491 = vpow.pop %v490
  %v492 = vmul.f32 %v489, 1.442695
  %v493 = vpow.pop %v492
  %v494 = vsel %vm481, %v491, 0.0
  %495 = vadd.xlane.f32.xlu0 %v494
  %v496 = vpop.xlane.xlu0 %495
  %v497 = vsel %vm481, %v493, 0.0
  %498 = vadd.xlane.f32.xlu0 %v497
  %v499 = vpop.xlane.xlu0 %498
  %v500 = vrcp.pop %v496
  %v501 = vrcp.pop %v499
  %v502 = vmul.f32 %v491, %v500
  %v503 = vmul.f32 %v493, %v501
  %v504 = vpack.c.bf16 %v502, %v502
  %v505 = vpack.c.bf16 %v503, %v503
  %v506 = vpack.c.bf16 %v340, %v340
  %v507 = vpack.c.bf16 %v343, %v343
  %v509 = vsel %vm481, %v504, 0
  %vm511 = vcmask 1043456
  %v513 = vsel %vm511, %v506, 0
  %515 = vmatprep.subr.bf16.mxu0 0
  %516 = vmatpush1.bf16.msra.mxu0 %v513
  %517 = vmatprep.subr.bf16.mxu0 0
  %518 = vmatpush1.bf16.msra.mxu0 0
  %519 = vmatprep.subr.bf16.mxu0 0
  %520 = vmatpush1.bf16.msra.mxu0 0
  %521 = vmatprep.subr.bf16.mxu0 0
  %522 = vmatpush1.bf16.msra.mxu0 0
  %523 = vmatprep.subr.bf16.mxu0 0
  %524 = vmatpush1.bf16.msra.mxu0 0
  %525 = vmatprep.subr.bf16.mxu0 0
  %526 = vmatpush1.bf16.msra.mxu0 0
  %527 = vmatprep.subr.bf16.mxu0 0
  %528 = vmatpush1.bf16.msra.mxu0 0
  %529 = vmatprep.subr.bf16.mxu0 0
  %530 = vmatpush1.bf16.msra.mxu0 0
  %531 = vmatprep.subr.bf16.mxu0 0
  %532 = vmatpush1.bf16.msra.mxu0 0
  %533 = vmatprep.subr.bf16.mxu0 0
  %534 = vmatpush1.bf16.msra.mxu0 0
  %535 = vmatprep.subr.bf16.mxu0 0
  %536 = vmatpush1.bf16.msra.mxu0 0
  %537 = vmatprep.subr.bf16.mxu0 0
  %538 = vmatpush1.bf16.msra.mxu0 0
  %539 = vmatprep.subr.bf16.mxu0 0
  %540 = vmatpush1.bf16.msra.mxu0 0
  %541 = vmatprep.subr.bf16.mxu0 0
  %542 = vmatpush1.bf16.msra.mxu0 0
  %543 = vmatprep.subr.bf16.mxu0 0
  %544 = vmatpush1.bf16.msra.mxu0 0
  %545 = vmatprep.subr.bf16.mxu0 0
  %546 = vmatpush1.bf16.msra.mxu0 0
  %547 = vmatprep.mubr.bf16.mxu0 0
  %548 = vmatmul.mubr.bf16.gmra.mrb[0].mxu0 %v509
  %v549 = vpop.f32.mrb[0].mxu0
  %v550 = vadd.f32 0.0, %v549
  %v551 = vpop.f32.mrb[0].mxu0
  %v552 = vpop.f32.mrb[0].mxu0
  %v553 = vpop.f32.mrb[0].mxu0
  %554 = vdwg.mxu0
  %v556 = vsel %vm481, %v505, 0
  %v559 = vsel %vm511, %v507, 0
  %561 = vmatprep.subr.bf16.mxu0 0
  %562 = vmatpush1.bf16.msra.mxu0 %v559
  %563 = vmatprep.subr.bf16.mxu0 0
  %564 = vmatpush1.bf16.msra.mxu0 0
  %565 = vmatprep.subr.bf16.mxu0 0
  %566 = vmatpush1.bf16.msra.mxu0 0
  %567 = vmatprep.subr.bf16.mxu0 0
  %568 = vmatpush1.bf16.msra.mxu0 0
  %569 = vmatprep.subr.bf16.mxu0 0
  %570 = vmatpush1.bf16.msra.mxu0 0
  %571 = vmatprep.subr.bf16.mxu0 0
  %572 = vmatpush1.bf16.msra.mxu0 0
  %573 = vmatprep.subr.bf16.mxu0 0
  %574 = vmatpush1.bf16.msra.mxu0 0
  %575 = vmatprep.subr.bf16.mxu0 0
  %576 = vmatpush1.bf16.msra.mxu0 0
  %577 = vmatprep.subr.bf16.mxu0 0
  %578 = vmatpush1.bf16.msra.mxu0 0
  %579 = vmatprep.subr.bf16.mxu0 0
  %580 = vmatpush1.bf16.msra.mxu0 0
  %581 = vmatprep.subr.bf16.mxu0 0
  %582 = vmatpush1.bf16.msra.mxu0 0
  %583 = vmatprep.subr.bf16.mxu0 0
  %584 = vmatpush1.bf16.msra.mxu0 0
  %585 = vmatprep.subr.bf16.mxu0 0
  %586 = vmatpush1.bf16.msra.mxu0 0
  %587 = vmatprep.subr.bf16.mxu0 0
  %588 = vmatpush1.bf16.msra.mxu0 0
  %589 = vmatprep.subr.bf16.mxu0 0
  %590 = vmatpush1.bf16.msra.mxu0 0
  %591 = vmatprep.subr.bf16.mxu0 0
  %592 = vmatpush1.bf16.msra.mxu0 0
  %593 = vmatprep.mubr.bf16.mxu0 0
  %594 = vmatmul.mubr.bf16.gmra.mrb[0].mxu0 %v556
  %v595 = vpop.f32.mrb[0].mxu0
  %v596 = vadd.f32 0.0, %v595
  %v597 = vpop.f32.mrb[0].mxu0
  %v598 = vpop.f32.mrb[0].mxu0
  %v599 = vpop.f32.mrb[0].mxu0
  %600 = vdwg.mxu0
  %602 = vrot.lane.b32.xlu0 %v374, 96
  %v603 = vpop.permute.xlu0 %602
  %605 = vrot.lane.b32.xlu0 %v376, 96
  %v606 = vpop.permute.xlu0 %605
  %v608 = vsel %vm388, %v603, 0
  %v611 = vsel %vm388, %v606, 0
  %613 = vmatprep.subr.bf16.mxu0 0
  %614 = vmatpush1.bf16.xpose.msra.mxu0 %v611
  %615 = vmatprep.subr.bf16.mxu0 0
  %616 = vmatpush1.bf16.xpose.msra.mxu0 0
  %617 = vmatprep.subr.bf16.mxu0 0
  %618 = vmatpush1.bf16.xpose.msra.mxu0 0
  %619 = vmatprep.subr.bf16.mxu0 0
  %620 = vmatpush1.bf16.xpose.msra.mxu0 0
  %621 = vmatprep.subr.bf16.mxu0 0
  %622 = vmatpush1.bf16.xpose.msra.mxu0 0
  %623 = vmatprep.subr.bf16.mxu0 0
  %624 = vmatpush1.bf16.xpose.msra.mxu0 0
  %625 = vmatprep.subr.bf16.mxu0 0
  %626 = vmatpush1.bf16.xpose.msra.mxu0 0
  %627 = vmatprep.subr.bf16.mxu0 0
  %628 = vmatpush1.bf16.xpose.msra.mxu0 0
  %629 = vmatprep.subr.bf16.mxu0 0
  %630 = vmatpush1.bf16.xpose.msra.mxu0 0
  %631 = vmatprep.subr.bf16.mxu0 0
  %632 = vmatpush1.bf16.xpose.msra.mxu0 0
  %633 = vmatprep.subr.bf16.mxu0 0
  %634 = vmatpush1.bf16.xpose.msra.mxu0 0
  %635 = vmatprep.subr.bf16.mxu0 0
  %636 = vmatpush1.bf16.xpose.msra.mxu0 0
  %637 = vmatprep.subr.bf16.mxu0 0
  %638 = vmatpush1.bf16.xpose.msra.mxu0 0
  %639 = vmatprep.subr.bf16.mxu0 0
  %640 = vmatpush1.bf16.xpose.msra.mxu0 0
  %641 = vmatprep.subr.bf16.mxu0 0
  %642 = vmatpush1.bf16.xpose.msra.mxu0 0
  %643 = vmatprep.subr.bf16.mxu0 0
  %644 = vmatpush1.bf16.xpose.msra.mxu0 0
  %645 = vmatprep.mubr.bf16.mxu0 0
  %646 = vmatmul.mubr.bf16.gmra.mrb[0].mxu0 %v608
  %v647 = vpop.f32.mrb[0].mxu0
  %v648 = vadd.f32 %v381, %v647
  %v649 = vpop.f32.mrb[0].mxu0
  %v650 = vpop.f32.mrb[0].mxu0
  %v651 = vpop.f32.mrb[0].mxu0
  %652 = vdwg.mxu0
  %654 = vrot.lane.b32.xlu0 %v375, 96
  %v655 = vpop.permute.xlu0 %654
  %657 = vrot.lane.b32.xlu0 %v377, 96
  %v658 = vpop.permute.xlu0 %657
  %v660 = vsel %vm388, %v655, 0
  %v663 = vsel %vm388, %v658, 0
  %665 = vmatprep.subr.bf16.mxu0 0
  %666 = vmatpush1.bf16.xpose.msra.mxu0 %v663
  %667 = vmatprep.subr.bf16.mxu0 0
  %668 = vmatpush1.bf16.xpose.msra.mxu0 0
  %669 = vmatprep.subr.bf16.mxu0 0
  %670 = vmatpush1.bf16.xpose.msra.mxu0 0
  %671 = vmatprep.subr.bf16.mxu0 0
  %672 = vmatpush1.bf16.xpose.msra.mxu0 0
  %673 = vmatprep.subr.bf16.mxu0 0
  %674 = vmatpush1.bf16.xpose.msra.mxu0 0
  %675 = vmatprep.subr.bf16.mxu0 0
  %676 = vmatpush1.bf16.xpose.msra.mxu0 0
  %677 = vmatprep.subr.bf16.mxu0 0
  %678 = vmatpush1.bf16.xpose.msra.mxu0 0
  %679 = vmatprep.subr.bf16.mxu0 0
  %680 = vmatpush1.bf16.xpose.msra.mxu0 0
  %681 = vmatprep.subr.bf16.mxu0 0
  %682 = vmatpush1.bf16.xpose.msra.mxu0 0
  %683 = vmatprep.subr.bf16.mxu0 0
  %684 = vmatpush1.bf16.xpose.msra.mxu0 0
  %685 = vmatprep.subr.bf16.mxu0 0
  %686 = vmatpush1.bf16.xpose.msra.mxu0 0
  %687 = vmatprep.subr.bf16.mxu0 0
  %688 = vmatpush1.bf16.xpose.msra.mxu0 0
  %689 = vmatprep.subr.bf16.mxu0 0
  %690 = vmatpush1.bf16.xpose.msra.mxu0 0
  %691 = vmatprep.subr.bf16.mxu0 0
  %692 = vmatpush1.bf16.xpose.msra.mxu0 0
  %693 = vmatprep.subr.bf16.mxu0 0
  %694 = vmatpush1.bf16.xpose.msra.mxu0 0
  %695 = vmatprep.subr.bf16.mxu0 0
  %696 = vmatpush1.bf16.xpose.msra.mxu0 0
  %697 = vmatprep.mubr.bf16.mxu0 0
  %698 = vmatmul.mubr.bf16.gmra.mrb[0].mxu0 %v660
  %v699 = vpop.f32.mrb[0].mxu0
  %v700 = vadd.f32 %v385, %v699
  %v701 = vpop.f32.mrb[0].mxu0
  %v702 = vpop.f32.mrb[0].mxu0
  %v703 = vpop.f32.mrb[0].mxu0
  %704 = vdwg.mxu0
  %v705 = vsel %vm481, %v648, -inf
  %706 = vmax.xlane.f32.xlu0 %v705
  %v707 = vpop.xlane.xlu0 %706
  %v708 = vsel %vm481, %v700, -inf
  %709 = vmax.xlane.f32.xlu0 %v708
  %v710 = vpop.xlane.xlu0 %709
  %v711 = vsub.f32 %v648, %v707
  %v712 = vsub.f32 %v700, %v710
  %v713 = vmul.f32 %v711, 1.442695
  %v714 = vpow.pop %v713
  %v715 = vmul.f32 %v712, 1.442695
  %v716 = vpow.pop %v715
  %v717 = vsel %vm481, %v714, 0.0
  %718 = vadd.xlane.f32.xlu0 %v717
  %v719 = vpop.xlane.xlu0 %718
  %v720 = vsel %vm481, %v716, 0.0
  %721 = vadd.xlane.f32.xlu0 %v720
  %v722 = vpop.xlane.xlu0 %721
  %v723 = vrcp.pop %v719
  %v724 = vrcp.pop %v722
  %v725 = vmul.f32 %v714, %v723
  %v726 = vmul.f32 %v716, %v724
  %v727 = vpack.c.bf16 %v725, %v725
  %v728 = vpack.c.bf16 %v726, %v726
  %730 = vrot.lane.b32.xlu0 %v506, 96
  %v731 = vpop.permute.xlu0 %730
  %v733 = vsel %vm481, %v727, 0
  %v736 = vsel %vm511, %v731, 0
  %738 = vmatprep.subr.bf16.mxu0 0
  %739 = vmatpush1.bf16.msra.mxu0 %v736
  %740 = vmatprep.subr.bf16.mxu0 0
  %741 = vmatpush1.bf16.msra.mxu0 0
  %742 = vmatprep.subr.bf16.mxu0 0
  %743 = vmatpush1.bf16.msra.mxu0 0
  %744 = vmatprep.subr.bf16.mxu0 0
  %745 = vmatpush1.bf16.msra.mxu0 0
  %746 = vmatprep.subr.bf16.mxu0 0
  %747 = vmatpush1.bf16.msra.mxu0 0
  %748 = vmatprep.subr.bf16.mxu0 0
  %749 = vmatpush1.bf16.msra.mxu0 0
  %750 = vmatprep.subr.bf16.mxu0 0
  %751 = vmatpush1.bf16.msra.mxu0 0
  %752 = vmatprep.subr.bf16.mxu0 0
  %753 = vmatpush1.bf16.msra.mxu0 0
  %754 = vmatprep.subr.bf16.mxu0 0
  %755 = vmatpush1.bf16.msra.mxu0 0
  %756 = vmatprep.subr.bf16.mxu0 0
  %757 = vmatpush1.bf16.msra.mxu0 0
  %758 = vmatprep.subr.bf16.mxu0 0
  %759 = vmatpush1.bf16.msra.mxu0 0
  %760 = vmatprep.subr.bf16.mxu0 0
  %761 = vmatpush1.bf16.msra.mxu0 0
  %762 = vmatprep.subr.bf16.mxu0 0
  %763 = vmatpush1.bf16.msra.mxu0 0
  %764 = vmatprep.subr.bf16.mxu0 0
  %765 = vmatpush1.bf16.msra.mxu0 0
  %766 = vmatprep.subr.bf16.mxu0 0
  %767 = vmatpush1.bf16.msra.mxu0 0
  %768 = vmatprep.subr.bf16.mxu0 0
  %769 = vmatpush1.bf16.msra.mxu0 0
  %770 = vmatprep.mubr.bf16.mxu0 0
  %771 = vmatmul.mubr.bf16.gmra.mrb[0].mxu0 %v733
  %v772 = vpop.f32.mrb[0].mxu0
  %v773 = vadd.f32 0.0, %v772
  %v774 = vpop.f32.mrb[0].mxu0
  %v775 = vpop.f32.mrb[0].mxu0
  %v776 = vpop.f32.mrb[0].mxu0
  %777 = vdwg.mxu0
  %779 = vrot.lane.b32.xlu0 %v507, 96
  %v780 = vpop.permute.xlu0 %779
  %v782 = vsel %vm481, %v728, 0
  %v785 = vsel %vm511, %v780, 0
  %787 = vmatprep.subr.bf16.mxu0 0
  %788 = vmatpush1.bf16.msra.mxu0 %v785
  %789 = vmatprep.subr.bf16.mxu0 0
  %790 = vmatpush1.bf16.msra.mxu0 0
  %791 = vmatprep.subr.bf16.mxu0 0
  %792 = vmatpush1.bf16.msra.mxu0 0
  %793 = vmatprep.subr.bf16.mxu0 0
  %794 = vmatpush1.bf16.msra.mxu0 0
  %795 = vmatprep.subr.bf16.mxu0 0
  %796 = vmatpush1.bf16.msra.mxu0 0
  %797 = vmatprep.subr.bf16.mxu0 0
  %798 = vmatpush1.bf16.msra.mxu0 0
  %799 = vmatprep.subr.bf16.mxu0 0
  %800 = vmatpush1.bf16.msra.mxu0 0
  %801 = vmatprep.subr.bf16.mxu0 0
  %802 = vmatpush1.bf16.msra.mxu0 0
  %803 = vmatprep.subr.bf16.mxu0 0
  %804 = vmatpush1.bf16.msra.mxu0 0
  %805 = vmatprep.subr.bf16.mxu0 0
  %806 = vmatpush1.bf16.msra.mxu0 0
  %807 = vmatprep.subr.bf16.mxu0 0
  %808 = vmatpush1.bf16.msra.mxu0 0
  %809 = vmatprep.subr.bf16.mxu0 0
  %810 = vmatpush1.bf16.msra.mxu0 0
  %811 = vmatprep.subr.bf16.mxu0 0
  %812 = vmatpush1.bf16.msra.mxu0 0
  %813 = vmatprep.subr.bf16.mxu0 0
  %814 = vmatpush1.bf16.msra.mxu0 0
  %815 = vmatprep.subr.bf16.mxu0 0
  %816 = vmatpush1.bf16.msra.mxu0 0
  %817 = vmatprep.subr.bf16.mxu0 0
  %818 = vmatpush1.bf16.msra.mxu0 0
  %819 = vmatprep.mubr.bf16.mxu0 0
  %820 = vmatmul.mubr.bf16.gmra.mrb[0].mxu0 %v782
  %v821 = vpop.f32.mrb[0].mxu0
  %v822 = vadd.f32 0.0, %v821
  %v823 = vpop.f32.mrb[0].mxu0
  %v824 = vpop.f32.mrb[0].mxu0
  %v825 = vpop.f32.mrb[0].mxu0
  %826 = vdwg.mxu0
  %827 = vrot.lane.b32.xlu0 %v374, 64
  %v828 = vpop.permute.xlu0 %827
  %829 = vrot.lane.b32.xlu0 %v376, 64
  %v830 = vpop.permute.xlu0 %829
  %v832 = vsel %vm388, %v828, 0
  %v835 = vsel %vm388, %v830, 0
  %837 = vmatprep.subr.bf16.mxu0 0
  %838 = vmatpush1.bf16.xpose.msra.mxu0 %v835
  %839 = vmatprep.subr.bf16.mxu0 0
  %840 = vmatpush1.bf16.xpose.msra.mxu0 0
  %841 = vmatprep.subr.bf16.mxu0 0
  %842 = vmatpush1.bf16.xpose.msra.mxu0 0
  %843 = vmatprep.subr.bf16.mxu0 0
  %844 = vmatpush1.bf16.xpose.msra.mxu0 0
  %845 = vmatprep.subr.bf16.mxu0 0
  %846 = vmatpush1.bf16.xpose.msra.mxu0 0
  %847 = vmatprep.subr.bf16.mxu0 0
  %848 = vmatpush1.bf16.xpose.msra.mxu0 0
  %849 = vmatprep.subr.bf16.mxu0 0
  %850 = vmatpush1.bf16.xpose.msra.mxu0 0
  %851 = vmatprep.subr.bf16.mxu0 0
  %852 = vmatpush1.bf16.xpose.msra.mxu0 0
  %853 = vmatprep.subr.bf16.mxu0 0
  %854 = vmatpush1.bf16.xpose.msra.mxu0 0
  %855 = vmatprep.subr.bf16.mxu0 0
  %856 = vmatpush1.bf16.xpose.msra.mxu0 0
  %857 = vmatprep.subr.bf16.mxu0 0
  %858 = vmatpush1.bf16.xpose.msra.mxu0 0
  %859 = vmatprep.subr.bf16.mxu0 0
  %860 = vmatpush1.bf16.xpose.msra.mxu0 0
  %861 = vmatprep.subr.bf16.mxu0 0
  %862 = vmatpush1.bf16.xpose.msra.mxu0 0
  %863 = vmatprep.subr.bf16.mxu0 0
  %864 = vmatpush1.bf16.xpose.msra.mxu0 0
  %865 = vmatprep.subr.bf16.mxu0 0
  %866 = vmatpush1.bf16.xpose.msra.mxu0 0
  %867 = vmatprep.subr.bf16.mxu0 0
  %868 = vmatpush1.bf16.xpose.msra.mxu0 0
  %869 = vmatprep.mubr.bf16.mxu0 0
  %870 = vmatmul.mubr.bf16.gmra.mrb[0].mxu0 %v832
  %v871 = vpop.f32.mrb[0].mxu0
  %v872 = vadd.f32 %v381, %v871
  %v873 = vpop.f32.mrb[0].mxu0
  %v874 = vpop.f32.mrb[0].mxu0
  %v875 = vpop.f32.mrb[0].mxu0
  %876 = vdwg.mxu0
  %877 = vrot.lane.b32.xlu0 %v375, 64
  %v878 = vpop.permute.xlu0 %877
  %879 = vrot.lane.b32.xlu0 %v377, 64
  %v880 = vpop.permute.xlu0 %879
  %v882 = vsel %vm388, %v878, 0
  %v885 = vsel %vm388, %v880, 0
  %887 = vmatprep.subr.bf16.mxu0 0
  %888 = vmatpush1.bf16.xpose.msra.mxu0 %v885
  %889 = vmatprep.subr.bf16.mxu0 0
  %890 = vmatpush1.bf16.xpose.msra.mxu0 0
  %891 = vmatprep.subr.bf16.mxu0 0
  %892 = vmatpush1.bf16.xpose.msra.mxu0 0
  %893 = vmatprep.subr.bf16.mxu0 0
  %894 = vmatpush1.bf16.xpose.msra.mxu0 0
  %895 = vmatprep.subr.bf16.mxu0 0
  %896 = vmatpush1.bf16.xpose.msra.mxu0 0
  %897 = vmatprep.subr.bf16.mxu0 0
  %898 = vmatpush1.bf16.xpose.msra.mxu0 0
  %899 = vmatprep.subr.bf16.mxu0 0
  %900 = vmatpush1.bf16.xpose.msra.mxu0 0
  %901 = vmatprep.subr.bf16.mxu0 0
  %902 = vmatpush1.bf16.xpose.msra.mxu0 0
  %903 = vmatprep.subr.bf16.mxu0 0
  %904 = vmatpush1.bf16.xpose.msra.mxu0 0
  %905 = vmatprep.subr.bf16.mxu0 0
  %906 = vmatpush1.bf16.xpose.msra.mxu0 0
  %907 = vmatprep.subr.bf16.mxu0 0
  %908 = vmatpush1.bf16.xpose.msra.mxu0 0
  %909 = vmatprep.subr.bf16.mxu0 0
  %910 = vmatpush1.bf16.xpose.msra.mxu0 0
  %911 = vmatprep.subr.bf16.mxu0 0
  %912 = vmatpush1.bf16.xpose.msra.mxu0 0
  %913 = vmatprep.subr.bf16.mxu0 0
  %914 = vmatpush1.bf16.xpose.msra.mxu0 0
  %915 = vmatprep.subr.bf16.mxu0 0
  %916 = vmatpush1.bf16.xpose.msra.mxu0 0
  %917 = vmatprep.subr.bf16.mxu0 0
  %918 = vmatpush1.bf16.xpose.msra.mxu0 0
  %919 = vmatprep.mubr.bf16.mxu0 0
  %920 = vmatmul.mubr.bf16.gmra.mrb[0].mxu0 %v882
  %v921 = vpop.f32.mrb[0].mxu0
  %v922 = vadd.f32 %v385, %v921
  %v923 = vpop.f32.mrb[0].mxu0
  %v924 = vpop.f32.mrb[0].mxu0
  %v925 = vpop.f32.mrb[0].mxu0
  %926 = vdwg.mxu0
  %v927 = vsel %vm481, %v872, -inf
  %928 = vmax.xlane.f32.xlu0 %v927
  %v929 = vpop.xlane.xlu0 %928
  %v930 = vsel %vm481, %v922, -inf
  %931 = vmax.xlane.f32.xlu0 %v930
  %v932 = vpop.xlane.xlu0 %931
  %v933 = vsub.f32 %v872, %v929
  %v934 = vsub.f32 %v922, %v932
  %v935 = vmul.f32 %v933, 1.442695
  %v936 = vpow.pop %v935
  %v937 = vmul.f32 %v934, 1.442695
  %v938 = vpow.pop %v937
  %v939 = vsel %vm481, %v936, 0.0
  %940 = vadd.xlane.f32.xlu0 %v939
  %v941 = vpop.xlane.xlu0 %940
  %v942 = vsel %vm481, %v938, 0.0
  %943 = vadd.xlane.f32.xlu0 %v942
  %v944 = vpop.xlane.xlu0 %943
  %v945 = vrcp.pop %v941
  %v946 = vrcp.pop %v944
  %v947 = vmul.f32 %v936, %v945
  %v948 = vmul.f32 %v938, %v946
  %v949 = vpack.c.bf16 %v947, %v947
  %v950 = vpack.c.bf16 %v948, %v948
  %951 = vrot.lane.b32.xlu0 %v506, 64
  %v952 = vpop.permute.xlu0 %951
  %v954 = vsel %vm481, %v949, 0
  %v957 = vsel %vm511, %v952, 0
  %959 = vmatprep.subr.bf16.mxu0 0
  %960 = vmatpush1.bf16.msra.mxu0 %v957
  %961 = vmatprep.subr.bf16.mxu0 0
  %962 = vmatpush1.bf16.msra.mxu0 0
  %963 = vmatprep.subr.bf16.mxu0 0
  %964 = vmatpush1.bf16.msra.mxu0 0
  %965 = vmatprep.subr.bf16.mxu0 0
  %966 = vmatpush1.bf16.msra.mxu0 0
  %967 = vmatprep.subr.bf16.mxu0 0
  %968 = vmatpush1.bf16.msra.mxu0 0
  %969 = vmatprep.subr.bf16.mxu0 0
  %970 = vmatpush1.bf16.msra.mxu0 0
  %971 = vmatprep.subr.bf16.mxu0 0
  %972 = vmatpush1.bf16.msra.mxu0 0
  %973 = vmatprep.subr.bf16.mxu0 0
  %974 = vmatpush1.bf16.msra.mxu0 0
  %975 = vmatprep.subr.bf16.mxu0 0
  %976 = vmatpush1.bf16.msra.mxu0 0
  %977 = vmatprep.subr.bf16.mxu0 0
  %978 = vmatpush1.bf16.msra.mxu0 0
  %979 = vmatprep.subr.bf16.mxu0 0
  %980 = vmatpush1.bf16.msra.mxu0 0
  %981 = vmatprep.subr.bf16.mxu0 0
  %982 = vmatpush1.bf16.msra.mxu0 0
  %983 = vmatprep.subr.bf16.mxu0 0
  %984 = vmatpush1.bf16.msra.mxu0 0
  %985 = vmatprep.subr.bf16.mxu0 0
  %986 = vmatpush1.bf16.msra.mxu0 0
  %987 = vmatprep.subr.bf16.mxu0 0
  %988 = vmatpush1.bf16.msra.mxu0 0
  %989 = vmatprep.subr.bf16.mxu0 0
  %990 = vmatpush1.bf16.msra.mxu0 0
  %991 = vmatprep.mubr.bf16.mxu0 0
  %992 = vmatmul.mubr.bf16.gmra.mrb[0].mxu0 %v954
  %v993 = vpop.f32.mrb[0].mxu0
  %v994 = vadd.f32 0.0, %v993
  %v995 = vpop.f32.mrb[0].mxu0
  %v996 = vpop.f32.mrb[0].mxu0
  %v997 = vpop.f32.mrb[0].mxu0
  %998 = vdwg.mxu0
  %999 = vrot.lane.b32.xlu0 %v507, 64
  %v1000 = vpop.permute.xlu0 %999
  %v1002 = vsel %vm481, %v950, 0
  %v1005 = vsel %vm511, %v1000, 0
  %1007 = vmatprep.subr.bf16.mxu0 0
  %1008 = vmatpush1.bf16.msra.mxu0 %v1005
  %1009 = vmatprep.subr.bf16.mxu0 0
  %1010 = vmatpush1.bf16.msra.mxu0 0
  %1011 = vmatprep.subr.bf16.mxu0 0
  %1012 = vmatpush1.bf16.msra.mxu0 0
  %1013 = vmatprep.subr.bf16.mxu0 0
  %1014 = vmatpush1.bf16.msra.mxu0 0
  %1015 = vmatprep.subr.bf16.mxu0 0
  %1016 = vmatpush1.bf16.msra.mxu0 0
  %1017 = vmatprep.subr.bf16.mxu0 0
  %1018 = vmatpush1.bf16.msra.mxu0 0
  %1019 = vmatprep.subr.bf16.mxu0 0
  %1020 = vmatpush1.bf16.msra.mxu0 0
  %1021 = vmatprep.subr.bf16.mxu0 0
  %1022 = vmatpush1.bf16.msra.mxu0 0
  %1023 = vmatprep.subr.bf16.mxu0 0
  %1024 = vmatpush1.bf16.msra.mxu0 0
  %1025 = vmatprep.subr.bf16.mxu0 0
  %1026 = vmatpush1.bf16.msra.mxu0 0
  %1027 = vmatprep.subr.bf16.mxu0 0
  %1028 = vmatpush1.bf16.msra.mxu0 0
  %1029 = vmatprep.subr.bf16.mxu0 0
  %1030 = vmatpush1.bf16.msra.mxu0 0
  %1031 = vmatprep.subr.bf16.mxu0 0
  %1032 = vmatpush1.bf16.msra.mxu0 0
  %1033 = vmatprep.subr.bf16.mxu0 0
  %1034 = vmatpush1.bf16.msra.mxu0 0
  %1035 = vmatprep.subr.bf16.mxu0 0
  %1036 = vmatpush1.bf16.msra.mxu0 0
  %1037 = vmatprep.subr.bf16.mxu0 0
  %1038 = vmatpush1.bf16.msra.mxu0 0
  %1039 = vmatprep.mubr.bf16.mxu0 0
  %1040 = vmatmul.mubr.bf16.gmra.mrb[0].mxu0 %v1002
  %v1041 = vpop.f32.mrb[0].mxu0
  %v1042 = vadd.f32 0.0, %v1041
  %v1043 = vpop.f32.mrb[0].mxu0
  %v1044 = vpop.f32.mrb[0].mxu0
  %v1045 = vpop.f32.mrb[0].mxu0
  %1046 = vdwg.mxu0
  %1047 = vrot.lane.b32.xlu0 %v374, 32
  %v1048 = vpop.permute.xlu0 %1047
  %1049 = vrot.lane.b32.xlu0 %v376, 32
  %v1050 = vpop.permute.xlu0 %1049
  %v1052 = vsel %vm388, %v1048, 0
  %v1055 = vsel %vm388, %v1050, 0
  %1057 = vmatprep.subr.bf16.mxu0 0
  %1058 = vmatpush1.bf16.xpose.msra.mxu0 %v1055
  %1059 = vmatprep.subr.bf16.mxu0 0
  %1060 = vmatpush1.bf16.xpose.msra.mxu0 0
  %1061 = vmatprep.subr.bf16.mxu0 0
  %1062 = vmatpush1.bf16.xpose.msra.mxu0 0
  %1063 = vmatprep.subr.bf16.mxu0 0
  %1064 = vmatpush1.bf16.xpose.msra.mxu0 0
  %1065 = vmatprep.subr.bf16.mxu0 0
  %1066 = vmatpush1.bf16.xpose.msra.mxu0 0
  %1067 = vmatprep.subr.bf16.mxu0 0
  %1068 = vmatpush1.bf16.xpose.msra.mxu0 0
  %1069 = vmatprep.subr.bf16.mxu0 0
  %1070 = vmatpush1.bf16.xpose.msra.mxu0 0
  %1071 = vmatprep.subr.bf16.mxu0 0
  %1072 = vmatpush1.bf16.xpose.msra.mxu0 0
  %1073 = vmatprep.subr.bf16.mxu0 0
  %1074 = vmatpush1.bf16.xpose.msra.mxu0 0
  %1075 = vmatprep.subr.bf16.mxu0 0
  %1076 = vmatpush1.bf16.xpose.msra.mxu0 0
  %1077 = vmatprep.subr.bf16.mxu0 0
  %1078 = vmatpush1.bf16.xpose.msra.mxu0 0
  %1079 = vmatprep.subr.bf16.mxu0 0
  %1080 = vmatpush1.bf16.xpose.msra.mxu0 0
  %1081 = vmatprep.subr.bf16.mxu0 0
  %1082 = vmatpush1.bf16.xpose.msra.mxu0 0
  %1083 = vmatprep.subr.bf16.mxu0 0
  %1084 = vmatpush1.bf16.xpose.msra.mxu0 0
  %1085 = vmatprep.subr.bf16.mxu0 0
  %1086 = vmatpush1.bf16.xpose.msra.mxu0 0
  %1087 = vmatprep.subr.bf16.mxu0 0
  %1088 = vmatpush1.bf16.xpose.msra.mxu0 0
  %1089 = vmatprep.mubr.bf16.mxu0 0
  %1090 = vmatmul.mubr.bf16.gmra.mrb[0].mxu0 %v1052
  %v1091 = vpop.f32.mrb[0].mxu0
  %v1092 = vadd.f32 %v381, %v1091
  %v1093 = vpop.f32.mrb[0].mxu0
  %v1094 = vpop.f32.mrb[0].mxu0
  %v1095 = vpop.f32.mrb[0].mxu0
  %1096 = vdwg.mxu0
  %1097 = vrot.lane.b32.xlu0 %v375, 32
  %v1098 = vpop.permute.xlu0 %1097
  %1099 = vrot.lane.b32.xlu0 %v377, 32
  %v1100 = vpop.permute.xlu0 %1099
  %v1102 = vsel %vm388, %v1098, 0
  %v1105 = vsel %vm388, %v1100, 0
  %1107 = vmatprep.subr.bf16.mxu0 0
  %1108 = vmatpush1.bf16.xpose.msra.mxu0 %v1105
  %1109 = vmatprep.subr.bf16.mxu0 0
  %1110 = vmatpush1.bf16.xpose.msra.mxu0 0
  %1111 = vmatprep.subr.bf16.mxu0 0
  %1112 = vmatpush1.bf16.xpose.msra.mxu0 0
  %1113 = vmatprep.subr.bf16.mxu0 0
  %1114 = vmatpush1.bf16.xpose.msra.mxu0 0
  %1115 = vmatprep.subr.bf16.mxu0 0
  %1116 = vmatpush1.bf16.xpose.msra.mxu0 0
  %1117 = vmatprep.subr.bf16.mxu0 0
  %1118 = vmatpush1.bf16.xpose.msra.mxu0 0
  %1119 = vmatprep.subr.bf16.mxu0 0
  %1120 = vmatpush1.bf16.xpose.msra.mxu0 0
  %1121 = vmatprep.subr.bf16.mxu0 0
  %1122 = vmatpush1.bf16.xpose.msra.mxu0 0
  %1123 = vmatprep.subr.bf16.mxu0 0
  %1124 = vmatpush1.bf16.xpose.msra.mxu0 0
  %1125 = vmatprep.subr.bf16.mxu0 0
  %1126 = vmatpush1.bf16.xpose.msra.mxu0 0
  %1127 = vmatprep.subr.bf16.mxu0 0
  %1128 = vmatpush1.bf16.xpose.msra.mxu0 0
  %1129 = vmatprep.subr.bf16.mxu0 0
  %1130 = vmatpush1.bf16.xpose.msra.mxu0 0
  %1131 = vmatprep.subr.bf16.mxu0 0
  %1132 = vmatpush1.bf16.xpose.msra.mxu0 0
  %1133 = vmatprep.subr.bf16.mxu0 0
  %1134 = vmatpush1.bf16.xpose.msra.mxu0 0
  %1135 = vmatprep.subr.bf16.mxu0 0
  %1136 = vmatpush1.bf16.xpose.msra.mxu0 0
  %1137 = vmatprep.subr.bf16.mxu0 0
  %1138 = vmatpush1.bf16.xpose.msra.mxu0 0
  %1139 = vmatprep.mubr.bf16.mxu0 0
  %1140 = vmatmul.mubr.bf16.gmra.mrb[0].mxu0 %v1102
  %v1141 = vpop.f32.mrb[0].mxu0
  %v1142 = vadd.f32 %v385, %v1141
  %v1143 = vpop.f32.mrb[0].mxu0
  %v1144 = vpop.f32.mrb[0].mxu0
  %v1145 = vpop.f32.mrb[0].mxu0
  %1146 = vdwg.mxu0
  %v1147 = vsel %vm481, %v1092, -inf
  %1148 = vmax.xlane.f32.xlu0 %v1147
  %v1149 = vpop.xlane.xlu0 %1148
  %v1150 = vsel %vm481, %v1142, -inf
  %1151 = vmax.xlane.f32.xlu0 %v1150
  %v1152 = vpop.xlane.xlu0 %1151
  %v1153 = vsub.f32 %v1092, %v1149
  %v1154 = vsub.f32 %v1142, %v1152
  %v1155 = vmul.f32 %v1153, 1.442695
  %v1156 = vpow.pop %v1155
  %v1157 = vmul.f32 %v1154, 1.442695
  %v1158 = vpow.pop %v1157
  %v1159 = vsel %vm481, %v1156, 0.0
  %1160 = vadd.xlane.f32.xlu0 %v1159
  %v1161 = vpop.xlane.xlu0 %1160
  %v1162 = vsel %vm481, %v1158, 0.0
  %1163 = vadd.xlane.f32.xlu0 %v1162
  %v1164 = vpop.xlane.xlu0 %1163
  %v1165 = vrcp.pop %v1161
  %v1166 = vrcp.pop %v1164
  %v1167 = vmul.f32 %v1156, %v1165
  %v1168 = vmul.f32 %v1158, %v1166
  %v1169 = vpack.c.bf16 %v1167, %v1167
  %v1170 = vpack.c.bf16 %v1168, %v1168
  %1171 = vrot.lane.b32.xlu0 %v506, 32
  %v1172 = vpop.permute.xlu0 %1171
  %v1174 = vsel %vm481, %v1169, 0
  %v1177 = vsel %vm511, %v1172, 0
  %1179 = vmatprep.subr.bf16.mxu0 0
  %1180 = vmatpush1.bf16.msra.mxu0 %v1177
  %1181 = vmatprep.subr.bf16.mxu0 0
  %1182 = vmatpush1.bf16.msra.mxu0 0
  %1183 = vmatprep.subr.bf16.mxu0 0
  %1184 = vmatpush1.bf16.msra.mxu0 0
  %1185 = vmatprep.subr.bf16.mxu0 0
  %1186 = vmatpush1.bf16.msra.mxu0 0
  %1187 = vmatprep.subr.bf16.mxu0 0
  %1188 = vmatpush1.bf16.msra.mxu0 0
  %1189 = vmatprep.subr.bf16.mxu0 0
  %1190 = vmatpush1.bf16.msra.mxu0 0
  %1191 = vmatprep.subr.bf16.mxu0 0
  %1192 = vmatpush1.bf16.msra.mxu0 0
  %1193 = vmatprep.subr.bf16.mxu0 0
  %1194 = vmatpush1.bf16.msra.mxu0 0
  %1195 = vmatprep.subr.bf16.mxu0 0
  %1196 = vmatpush1.bf16.msra.mxu0 0
  %1197 = vmatprep.subr.bf16.mxu0 0
  %1198 = vmatpush1.bf16.msra.mxu0 0
  %1199 = vmatprep.subr.bf16.mxu0 0
  %1200 = vmatpush1.bf16.msra.mxu0 0
  %1201 = vmatprep.subr.bf16.mxu0 0
  %1202 = vmatpush1.bf16.msra.mxu0 0
  %1203 = vmatprep.subr.bf16.mxu0 0
  %1204 = vmatpush1.bf16.msra.mxu0 0
  %1205 = vmatprep.subr.bf16.mxu0 0
  %1206 = vmatpush1.bf16.msra.mxu0 0
  %1207 = vmatprep.subr.bf16.mxu0 0
  %1208 = vmatpush1.bf16.msra.mxu0 0
  %1209 = vmatprep.subr.bf16.mxu0 0
  %1210 = vmatpush1.bf16.msra.mxu0 0
  %1211 = vmatprep.mubr.bf16.mxu0 0
  %1212 = vmatmul.mubr.bf16.gmra.mrb[0].mxu0 %v1174
  %v1213 = vpop.f32.mrb[0].mxu0
  %v1214 = vadd.f32 0.0, %v1213
  %v1215 = vpop.f32.mrb[0].mxu0
  %v1216 = vpop.f32.mrb[0].mxu0
  %v1217 = vpop.f32.mrb[0].mxu0
  %1218 = vdwg.mxu0
  %1219 = vrot.lane.b32.xlu0 %v507, 32
  %v1220 = vpop.permute.xlu0 %1219
  %v1222 = vsel %vm481, %v1170, 0
  %v1225 = vsel %vm511, %v1220, 0
  %1227 = vmatprep.subr.bf16.mxu0 0
  %1228 = vmatpush1.bf16.msra.mxu0 %v1225
  %1229 = vmatprep.subr.bf16.mxu0 0
  %1230 = vmatpush1.bf16.msra.mxu0 0
  %1231 = vmatprep.subr.bf16.mxu0 0
  %1232 = vmatpush1.bf16.msra.mxu0 0
  %1233 = vmatprep.subr.bf16.mxu0 0
  %1234 = vmatpush1.bf16.msra.mxu0 0
  %1235 = vmatprep.subr.bf16.mxu0 0
  %1236 = vmatpush1.bf16.msra.mxu0 0
  %1237 = vmatprep.subr.bf16.mxu0 0
  %1238 = vmatpush1.bf16.msra.mxu0 0
  %1239 = vmatprep.subr.bf16.mxu0 0
  %1240 = vmatpush1.bf16.msra.mxu0 0
  %1241 = vmatprep.subr.bf16.mxu0 0
  %1242 = vmatpush1.bf16.msra.mxu0 0
  %1243 = vmatprep.subr.bf16.mxu0 0
  %1244 = vmatpush1.bf16.msra.mxu0 0
  %1245 = vmatprep.subr.bf16.mxu0 0
  %1246 = vmatpush1.bf16.msra.mxu0 0
  %1247 = vmatprep.subr.bf16.mxu0 0
  %1248 = vmatpush1.bf16.msra.mxu0 0
  %1249 = vmatprep.subr.bf16.mxu0 0
  %1250 = vmatpush1.bf16.msra.mxu0 0
  %1251 = vmatprep.subr.bf16.mxu0 0
  %1252 = vmatpush1.bf16.msra.mxu0 0
  %1253 = vmatprep.subr.bf16.mxu0 0
  %1254 = vmatpush1.bf16.msra.mxu0 0
  %1255 = vmatprep.subr.bf16.mxu0 0
  %1256 = vmatpush1.bf16.msra.mxu0 0
  %1257 = vmatprep.subr.bf16.mxu0 0
  %1258 = vmatpush1.bf16.msra.mxu0 0
  %1259 = vmatprep.mubr.bf16.mxu0 0
  %1260 = vmatmul.mubr.bf16.gmra.mrb[0].mxu0 %v1222
  %v1261 = vpop.f32.mrb[0].mxu0
  %v1262 = vadd.f32 0.0, %v1261
  %v1263 = vpop.f32.mrb[0].mxu0
  %v1264 = vpop.f32.mrb[0].mxu0
  %v1265 = vpop.f32.mrb[0].mxu0
  %1266 = vdwg.mxu0
  %1269 = vrot.lane.b32.xlu0 %v773, 32
  %v1270 = vpop.permute.xlu0 %1269
  %1271 = vrot.lane.b32.xlu0 %v822, 32
  %v1272 = vpop.permute.xlu0 %1271
  %1277 = vrot.lane.b32.xlu0 %v994, 64
  %v1278 = vpop.permute.xlu0 %1277
  %1279 = vrot.lane.b32.xlu0 %v1042, 64
  %v1280 = vpop.permute.xlu0 %1279
  %1285 = vrot.lane.b32.xlu0 %v1214, 96
  %v1286 = vpop.permute.xlu0 %1285
  %1287 = vrot.lane.b32.xlu0 %v1262, 96
  %v1288 = vpop.permute.xlu0 %1287
  %v1291 = vsel %vm388, %v550, %v1270
  %v1292 = vsel %vm388, %v596, %v1272
  %vm1293 = vcmask 523264
  %v1294 = vsel %vm1293, %v1291, %v1278
  %v1295 = vsel %vm1293, %v1292, %v1280
  %vm1296 = vcmask 785408
  %v1297 = vsel %vm1296, %v1294, %v1286
  %v1298 = vsel %vm1296, %v1295, %v1288
  %v1299 = vld [vmem:[%s4] sm:$0xf]
  %v1300 = vld [vmem:[%s4 + $0x4] sm:$0xf]
  %v1301 = vld [vmem:[%s4 + $0x8] sm:$0xf]
  %v1302 = vld [vmem:[%s4 + $0xc] sm:$0xf]
  %v1303 = vld [vmem:[%s4 + $0x10] sm:$0xf]
  %v1304 = vld [vmem:[%s4 + $0x14] sm:$0xf]
  %v1305 = vld [vmem:[%s4 + $0x18] sm:$0xf]
  %v1306 = vld [vmem:[%s4 + $0x1c] sm:$0xf]
  %v1307 = vld [vmem:[%s4 + $0x20] sm:$0xf]
  %v1308 = vld [vmem:[%s4 + $0x24] sm:$0xf]
  %v1309 = vld [vmem:[%s4 + $0x28] sm:$0xf]
  %v1310 = vld [vmem:[%s4 + $0x2c] sm:$0xf]
  %v1311 = vld [vmem:[%s4 + $0x30] sm:$0xf]
  %v1312 = vld [vmem:[%s4 + $0x34] sm:$0xf]
  %v1313 = vld [vmem:[%s4 + $0x38] sm:$0xf]
  %v1314 = vld [vmem:[%s4 + $0x3c] sm:$0xf]
  %v1315 = vpack.c.bf16 %v1298, %v1297
  %v1316 = vld [vmem:[%s5] sm:$0x1]
  %v1318 = vlaneseq
  %v1319 = vshrl.u32 %v1318, 7
  %v1320 = vsub.s32 0, %v1319
  %v1321 = vrot.slane %v1316, %v1320
  %v1339 = vunpack.c.l.b16 %v1299
  %v1340 = vunpack.c.l.b16 %v1300
  %v1341 = vunpack.c.l.b16 %v1301
  %v1342 = vunpack.c.l.b16 %v1302
  %v1343 = vunpack.c.l.b16 %v1303
  %v1344 = vunpack.c.l.b16 %v1304
  %v1345 = vunpack.c.l.b16 %v1305
  %v1346 = vunpack.c.l.b16 %v1306
  %v1347 = vunpack.c.l.b16 %v1307
  %v1348 = vunpack.c.l.b16 %v1308
  %v1349 = vunpack.c.l.b16 %v1309
  %v1350 = vunpack.c.l.b16 %v1310
  %v1351 = vunpack.c.l.b16 %v1311
  %v1352 = vunpack.c.l.b16 %v1312
  %v1353 = vunpack.c.l.b16 %v1313
  %v1354 = vunpack.c.l.b16 %v1314
  %v1355 = vpack.c.b16 %v1340, %v1339
  %v1356 = vpack.c.b16 %v1342, %v1341
  %v1357 = vpack.c.b16 %v1344, %v1343
  %v1358 = vpack.c.b16 %v1346, %v1345
  %v1359 = vpack.c.b16 %v1348, %v1347
  %v1360 = vpack.c.b16 %v1350, %v1349
  %v1361 = vpack.c.b16 %v1352, %v1351
  %v1362 = vpack.c.b16 %v1354, %v1353
  %1371 = vmatprep.subr.bf16.mxu0 0
  %1372 = vmatpush1.bf16.xpose.msra.mxu0 %v1355
  %1373 = vmatprep.subr.bf16.mxu0 0
  %1374 = vmatpush1.bf16.xpose.msra.mxu0 %v1356
  %1375 = vmatprep.subr.bf16.mxu0 0
  %1376 = vmatpush1.bf16.xpose.msra.mxu0 %v1357
  %1377 = vmatprep.subr.bf16.mxu0 0
  %1378 = vmatpush1.bf16.xpose.msra.mxu0 %v1358
  %1379 = vmatprep.subr.bf16.mxu0 0
  %1380 = vmatpush1.bf16.xpose.msra.mxu0 %v1359
  %1381 = vmatprep.subr.bf16.mxu0 0
  %1382 = vmatpush1.bf16.xpose.msra.mxu0 %v1360
  %1383 = vmatprep.subr.bf16.mxu0 0
  %1384 = vmatpush1.bf16.xpose.msra.mxu0 %v1361
  %1385 = vmatprep.subr.bf16.mxu0 0
  %1386 = vmatpush1.bf16.xpose.msra.mxu0 %v1362
  %1387 = vmatprep.subr.bf16.mxu0 0
  %1388 = vmatpush1.bf16.xpose.msra.mxu0 0
  %1389 = vmatprep.subr.bf16.mxu0 0
  %1390 = vmatpush1.bf16.xpose.msra.mxu0 0
  %1391 = vmatprep.subr.bf16.mxu0 0
  %1392 = vmatpush1.bf16.xpose.msra.mxu0 0
  %1393 = vmatprep.subr.bf16.mxu0 0
  %1394 = vmatpush1.bf16.xpose.msra.mxu0 0
  %1395 = vmatprep.subr.bf16.mxu0 0
  %1396 = vmatpush1.bf16.xpose.msra.mxu0 0
  %1397 = vmatprep.subr.bf16.mxu0 0
  %1398 = vmatpush1.bf16.xpose.msra.mxu0 0
  %1399 = vmatprep.subr.bf16.mxu0 0
  %1400 = vmatpush1.bf16.xpose.msra.mxu0 0
  %1401 = vmatprep.subr.bf16.mxu0 0
  %1402 = vmatpush1.bf16.xpose.msra.mxu0 0
  %1403 = vmatprep.mubr.bf16.mxu0 0
  %1404 = vmatmul.mubr.bf16.gmra.mrb[0].mxu0 %v1315
  %v1405 = vpop.f32.mrb[0].mxu0
  %v1406 = vadd.f32 %v1321, %v1405
  %v1407 = vpop.f32.mrb[0].mxu0
  %v1408 = vpop.f32.mrb[0].mxu0
  %v1409 = vadd.f32 %v1321, %v1408
  %v1410 = vpop.f32.mrb[0].mxu0
  %1411 = vdwg.mxu0
  %v1412 = vadd.f32 %v50, %v1406
  %v1413 = vadd.f32 %v51, %v1409
  %v1414 = vld [vmem:[%s6] sm:$0x1]
  %v1415 = vld [vmem:[%s7] sm:$0x1]
  %1416 = vadd.xlane.f32.xlu0 %v1412
  %v1417 = vpop.xlane.xlu0 %1416
  %1418 = vadd.xlane.f32.xlu0 %v1413
  %v1419 = vpop.xlane.xlu0 %1418
  %v1420 = vrcp.pop 128.0
  %v1421 = vmul.f32 %v1417, %v1420
  %v1422 = vmul.f32 %v1419, %v1420
  %v1423 = vsub.f32 %v1412, %v1421
  %v1424 = vsub.f32 %v1413, %v1422
  %v1425 = vmul.f32 %v1423, %v1423
  %v1426 = vmul.f32 %v1424, %v1424
  %1427 = vadd.xlane.f32.xlu0 %v1425
  %v1428 = vpop.xlane.xlu0 %1427
  %1429 = vadd.xlane.f32.xlu0 %v1426
  %v1430 = vpop.xlane.xlu0 %1429
  %v1431 = vmul.f32 %v1428, %v1420
  %v1432 = vmul.f32 %v1430, %v1420
  %v1433 = vadd.f32 %v1431, 1e-05
  %v1434 = vadd.f32 %v1432, 1e-05
  %v1435 = vrsqrt.pop %v1433
  %v1436 = vrsqrt.pop %v1434
  %v1437 = vmul.f32 %v1423, %v1435
  %v1438 = vmul.f32 %v1424, %v1436
  %v1440 = vlaneseq
  %v1441 = vshrl.u32 %v1440, 7
  %v1442 = vsub.s32 0, %v1441
  %v1443 = vrot.slane %v1414, %v1442
  %v1445 = vmul.f32 %v1437, %v1443
  %v1446 = vmul.f32 %v1438, %v1443
  %v1448 = vlaneseq
  %v1449 = vshrl.u32 %v1448, 7
  %v1450 = vsub.s32 0, %v1449
  %v1451 = vrot.slane %v1415, %v1450
  %v1453 = vadd.f32 %v1445, %v1451
  %v1454 = vadd.f32 %v1446, %v1451
  %v1455 = vld [vmem:[%s8] sm:$0xf]
  %v1456 = vld [vmem:[%s8 + $0x4] sm:$0xf]
  %v1457 = vld [vmem:[%s8 + $0x8] sm:$0xf]
  %v1458 = vld [vmem:[%s8 + $0xc] sm:$0xf]
  %v1459 = vld [vmem:[%s8 + $0x10] sm:$0xf]
  %v1460 = vld [vmem:[%s8 + $0x14] sm:$0xf]
  %v1461 = vld [vmem:[%s8 + $0x18] sm:$0xf]
  %v1462 = vld [vmem:[%s8 + $0x1c] sm:$0xf]
  %v1463 = vld [vmem:[%s8 + $0x20] sm:$0xf]
  %v1464 = vld [vmem:[%s8 + $0x24] sm:$0xf]
  %v1465 = vld [vmem:[%s8 + $0x28] sm:$0xf]
  %v1466 = vld [vmem:[%s8 + $0x2c] sm:$0xf]
  %v1467 = vld [vmem:[%s8 + $0x30] sm:$0xf]
  %v1468 = vld [vmem:[%s8 + $0x34] sm:$0xf]
  %v1469 = vld [vmem:[%s8 + $0x38] sm:$0xf]
  %v1470 = vld [vmem:[%s8 + $0x3c] sm:$0xf]
  %v1471 = vld [vmem:[%s8 + $0x40] sm:$0xf]
  %v1472 = vld [vmem:[%s8 + $0x44] sm:$0xf]
  %v1473 = vld [vmem:[%s8 + $0x48] sm:$0xf]
  %v1474 = vld [vmem:[%s8 + $0x4c] sm:$0xf]
  %v1475 = vld [vmem:[%s8 + $0x50] sm:$0xf]
  %v1476 = vld [vmem:[%s8 + $0x54] sm:$0xf]
  %v1477 = vld [vmem:[%s8 + $0x58] sm:$0xf]
  %v1478 = vld [vmem:[%s8 + $0x5c] sm:$0xf]
  %v1479 = vld [vmem:[%s8 + $0x60] sm:$0xf]
  %v1480 = vld [vmem:[%s8 + $0x64] sm:$0xf]
  %v1481 = vld [vmem:[%s8 + $0x68] sm:$0xf]
  %v1482 = vld [vmem:[%s8 + $0x6c] sm:$0xf]
  %v1483 = vld [vmem:[%s8 + $0x70] sm:$0xf]
  %v1484 = vld [vmem:[%s8 + $0x74] sm:$0xf]
  %v1485 = vld [vmem:[%s8 + $0x78] sm:$0xf]
  %v1486 = vld [vmem:[%s8 + $0x7c] sm:$0xf]
  %v1487 = vpack.c.bf16 %v1454, %v1453
  %v1488 = vld [vmem:[%s9] sm:$0x3]
  %v1490 = vlaneseq
  %v1491 = vshrl.u32 %v1490, 7
  %v1492 = vsub.s32 0, %v1491
  %v1493 = vrot.slane %v1488, %v1492
  %v1494 = vlaneseq
  %v1495 = vshrl.u32 %v1494, 7
  %v1496 = vsub.s32 1, %v1495
  %v1497 = vrot.slane %v1488, %v1496
  %v1532 = vunpack.c.l.b16 %v1455
  %v1533 = vunpack.c.l.b16 %v1456
  %v1534 = vunpack.c.l.b16 %v1457
  %v1535 = vunpack.c.l.b16 %v1458
  %v1536 = vunpack.c.l.b16 %v1459
  %v1537 = vunpack.c.l.b16 %v1460
  %v1538 = vunpack.c.l.b16 %v1461
  %v1539 = vunpack.c.l.b16 %v1462
  %v1540 = vunpack.c.l.b16 %v1463
  %v1541 = vunpack.c.l.b16 %v1464
  %v1542 = vunpack.c.l.b16 %v1465
  %v1543 = vunpack.c.l.b16 %v1466
  %v1544 = vunpack.c.l.b16 %v1467
  %v1545 = vunpack.c.l.b16 %v1468
  %v1546 = vunpack.c.l.b16 %v1469
  %v1547 = vunpack.c.l.b16 %v1470
  %v1548 = vunpack.c.l.b16 %v1471
  %v1549 = vunpack.c.l.b16 %v1472
  %v1550 = vunpack.c.l.b16 %v1473
  %v1551 = vunpack.c.l.b16 %v1474
  %v1552 = vunpack.c.l.b16 %v1475
  %v1553 = vunpack.c.l.b16 %v1476
  %v1554 = vunpack.c.l.b16 %v1477
  %v1555 = vunpack.c.l.b16 %v1478
  %v1556 = vunpack.c.l.b16 %v1479
  %v1557 = vunpack.c.l.b16 %v1480
  %v1558 = vunpack.c.l.b16 %v1481
  %v1559 = vunpack.c.l.b16 %v1482
  %v1560 = vunpack.c.l.b16 %v1483
  %v1561 = vunpack.c.l.b16 %v1484
  %v1562 = vunpack.c.l.b16 %v1485
  %v1563 = vunpack.c.l.b16 %v1486
  %v1564 = vpack.c.b16 %v1533, %v1532
  %v1565 = vpack.c.b16 %v1535, %v1534
  %v1566 = vpack.c.b16 %v1537, %v1536
  %v1567 = vpack.c.b16 %v1539, %v1538
  %v1568 = vpack.c.b16 %v1541, %v1540
  %v1569 = vpack.c.b16 %v1543, %v1542
  %v1570 = vpack.c.b16 %v1545, %v1544
  %v1571 = vpack.c.b16 %v1547, %v1546
  %v1572 = vpack.c.b16 %v1549, %v1548
  %v1573 = vpack.c.b16 %v1551, %v1550
  %v1574 = vpack.c.b16 %v1553, %v1552
  %v1575 = vpack.c.b16 %v1555, %v1554
  %v1576 = vpack.c.b16 %v1557, %v1556
  %v1577 = vpack.c.b16 %v1559, %v1558
  %v1578 = vpack.c.b16 %v1561, %v1560
  %v1579 = vpack.c.b16 %v1563, %v1562
  %1596 = vmatprep.subr.bf16.mxu0 0
  %1597 = vmatpush1.bf16.xpose.msra.mxu0 %v1564
  %1598 = vmatprep.subr.bf16.mxu0 0
  %1599 = vmatpush1.bf16.xpose.msra.mxu0 %v1565
  %1600 = vmatprep.subr.bf16.mxu0 0
  %1601 = vmatpush1.bf16.xpose.msra.mxu0 %v1566
  %1602 = vmatprep.subr.bf16.mxu0 0
  %1603 = vmatpush1.bf16.xpose.msra.mxu0 %v1567
  %1604 = vmatprep.subr.bf16.mxu0 0
  %1605 = vmatpush1.bf16.xpose.msra.mxu0 %v1568
  %1606 = vmatprep.subr.bf16.mxu0 0
  %1607 = vmatpush1.bf16.xpose.msra.mxu0 %v1569
  %1608 = vmatprep.subr.bf16.mxu0 0
  %1609 = vmatpush1.bf16.xpose.msra.mxu0 %v1570
  %1610 = vmatprep.subr.bf16.mxu0 0
  %1611 = vmatpush1.bf16.xpose.msra.mxu0 %v1571
  %1612 = vmatprep.subr.bf16.mxu0 0
  %1613 = vmatpush1.bf16.xpose.msra.mxu0 %v1572
  %1614 = vmatprep.subr.bf16.mxu0 0
  %1615 = vmatpush1.bf16.xpose.msra.mxu0 %v1573
  %1616 = vmatprep.subr.bf16.mxu0 0
  %1617 = vmatpush1.bf16.xpose.msra.mxu0 %v1574
  %1618 = vmatprep.subr.bf16.mxu0 0
  %1619 = vmatpush1.bf16.xpose.msra.mxu0 %v1575
  %1620 = vmatprep.subr.bf16.mxu0 0
  %1621 = vmatpush1.bf16.xpose.msra.mxu0 %v1576
  %1622 = vmatprep.subr.bf16.mxu0 0
  %1623 = vmatpush1.bf16.xpose.msra.mxu0 %v1577
  %1624 = vmatprep.subr.bf16.mxu0 0
  %1625 = vmatpush1.bf16.xpose.msra.mxu0 %v1578
  %1626 = vmatprep.subr.bf16.mxu0 0
  %1627 = vmatpush1.bf16.xpose.msra.mxu0 %v1579
  %1628 = vmatprep.mubr.bf16.mxu0 0
  %1629 = vmatmul.mubr.bf16.gmra.mrb[0].mxu0 %v1487
  %v1630 = vpop.f32.mrb[0].mxu0
  %v1631 = vadd.f32 %v1493, %v1630
  %v1632 = vpop.f32.mrb[0].mxu0
  %v1633 = vadd.f32 %v1497, %v1632
  %v1634 = vpop.f32.mrb[0].mxu0
  %v1635 = vadd.f32 %v1493, %v1634
  %v1636 = vpop.f32.mrb[0].mxu0
  %v1637 = vadd.f32 %v1497, %v1636
  %1638 = vdwg.mxu0
  %v1639 = vmax.f32 %v1631, 0.0
  %v1640 = vmax.f32 %v1633, 0.0
  %v1641 = vmax.f32 %v1635, 0.0
  %v1642 = vmax.f32 %v1637, 0.0
  %v1643 = vld [vmem:[%s10] sm:$0xff]
  %v1644 = vld [vmem:[%s10 + $0x8] sm:$0xff]
  %v1645 = vld [vmem:[%s10 + $0x10] sm:$0xff]
  %v1646 = vld [vmem:[%s10 + $0x18] sm:$0xff]
  %v1647 = vld [vmem:[%s10 + $0x20] sm:$0xff]
  %v1648 = vld [vmem:[%s10 + $0x28] sm:$0xff]
  %v1649 = vld [vmem:[%s10 + $0x30] sm:$0xff]
  %v1650 = vld [vmem:[%s10 + $0x38] sm:$0xff]
  %v1651 = vld [vmem:[%s10 + $0x40] sm:$0xff]
  %v1652 = vld [vmem:[%s10 + $0x48] sm:$0xff]
  %v1653 = vld [vmem:[%s10 + $0x50] sm:$0xff]
  %v1654 = vld [vmem:[%s10 + $0x58] sm:$0xff]
  %v1655 = vld [vmem:[%s10 + $0x60] sm:$0xff]
  %v1656 = vld [vmem:[%s10 + $0x68] sm:$0xff]
  %v1657 = vld [vmem:[%s10 + $0x70] sm:$0xff]
  %v1658 = vld [vmem:[%s10 + $0x78] sm:$0xff]
  %v1659 = vpack.c.bf16 %v1641, %v1639
  %v1660 = vpack.c.bf16 %v1642, %v1640
  %v1661 = vld [vmem:[%s11] sm:$0x1]
  %v1663 = vlaneseq
  %v1664 = vshrl.u32 %v1663, 7
  %v1665 = vsub.s32 0, %v1664
  %v1666 = vrot.slane %v1661, %v1665
  %v1684 = vunpack.c.l.b16 %v1643
  %v1685 = vunpack.c.h.b16 %v1643
  %v1686 = vunpack.c.l.b16 %v1644
  %v1687 = vunpack.c.h.b16 %v1644
  %v1688 = vunpack.c.l.b16 %v1645
  %v1689 = vunpack.c.h.b16 %v1645
  %v1690 = vunpack.c.l.b16 %v1646
  %v1691 = vunpack.c.h.b16 %v1646
  %v1692 = vunpack.c.l.b16 %v1647
  %v1693 = vunpack.c.h.b16 %v1647
  %v1694 = vunpack.c.l.b16 %v1648
  %v1695 = vunpack.c.h.b16 %v1648
  %v1696 = vunpack.c.l.b16 %v1649
  %v1697 = vunpack.c.h.b16 %v1649
  %v1698 = vunpack.c.l.b16 %v1650
  %v1699 = vunpack.c.h.b16 %v1650
  %v1700 = vunpack.c.l.b16 %v1651
  %v1701 = vunpack.c.h.b16 %v1651
  %v1702 = vunpack.c.l.b16 %v1652
  %v1703 = vunpack.c.h.b16 %v1652
  %v1704 = vunpack.c.l.b16 %v1653
  %v1705 = vunpack.c.h.b16 %v1653
  %v1706 = vunpack.c.l.b16 %v1654
  %v1707 = vunpack.c.h.b16 %v1654
  %v1708 = vunpack.c.l.b16 %v1655
  %v1709 = vunpack.c.h.b16 %v1655
  %v1710 = vunpack.c.l.b16 %v1656
  %v1711 = vunpack.c.h.b16 %v1656
  %v1712 = vunpack.c.l.b16 %v1657
  %v1713 = vunpack.c.h.b16 %v1657
  %v1714 = vunpack.c.l.b16 %v1658
  %v1715 = vunpack.c.h.b16 %v1658
  %v1716 = vpack.c.b16 %v1686, %v1684
  %v1717 = vpack.c.b16 %v1687, %v1685
  %v1718 = vpack.c.b16 %v1690, %v1688
  %v1719 = vpack.c.b16 %v1691, %v1689
  %v1720 = vpack.c.b16 %v1694, %v1692
  %v1721 = vpack.c.b16 %v1695, %v1693
  %v1722 = vpack.c.b16 %v1698, %v1696
  %v1723 = vpack.c.b16 %v1699, %v1697
  %v1724 = vpack.c.b16 %v1702, %v1700
  %v1725 = vpack.c.b16 %v1703, %v1701
  %v1726 = vpack.c.b16 %v1706, %v1704
  %v1727 = vpack.c.b16 %v1707, %v1705
  %v1728 = vpack.c.b16 %v1710, %v1708
  %v1729 = vpack.c.b16 %v1711, %v1709
  %v1730 = vpack.c.b16 %v1714, %v1712
  %v1731 = vpack.c.b16 %v1715, %v1713
  %1748 = vmatprep.subr.bf16.mxu0 %v1717
  %1749 = vmatpush1.bf16.xpose.msra.mxu0 %v1716
  %1750 = vmatprep.subr.bf16.mxu0 %v1719
  %1751 = vmatpush1.bf16.xpose.msra.mxu0 %v1718
  %1752 = vmatprep.subr.bf16.mxu0 %v1721
  %1753 = vmatpush1.bf16.xpose.msra.mxu0 %v1720
  %1754 = vmatprep.subr.bf16.mxu0 %v1723
  %1755 = vmatpush1.bf16.xpose.msra.mxu0 %v1722
  %1756 = vmatprep.subr.bf16.mxu0 %v1725
  %1757 = vmatpush1.bf16.xpose.msra.mxu0 %v1724
  %1758 = vmatprep.subr.bf16.mxu0 %v1727
  %1759 = vmatpush1.bf16.xpose.msra.mxu0 %v1726
  %1760 = vmatprep.subr.bf16.mxu0 %v1729
  %1761 = vmatpush1.bf16.xpose.msra.mxu0 %v1728
  %1762 = vmatprep.subr.bf16.mxu0 %v1731
  %1763 = vmatpush1.bf16.xpose.msra.mxu0 %v1730
  %1764 = vmatprep.subr.bf16.mxu0 0
  %1765 = vmatpush1.bf16.xpose.msra.mxu0 0
  %1766 = vmatprep.subr.bf16.mxu0 0
  %1767 = vmatpush1.bf16.xpose.msra.mxu0 0
  %1768 = vmatprep.subr.bf16.mxu0 0
  %1769 = vmatpush1.bf16.xpose.msra.mxu0 0
  %1770 = vmatprep.subr.bf16.mxu0 0
  %1771 = vmatpush1.bf16.xpose.msra.mxu0 0
  %1772 = vmatprep.subr.bf16.mxu0 0
  %1773 = vmatpush1.bf16.xpose.msra.mxu0 0
  %1774 = vmatprep.subr.bf16.mxu0 0
  %1775 = vmatpush1.bf16.xpose.msra.mxu0 0
  %1776 = vmatprep.subr.bf16.mxu0 0
  %1777 = vmatpush1.bf16.xpose.msra.mxu0 0
  %1778 = vmatprep.subr.bf16.mxu0 0
  %1779 = vmatpush1.bf16.xpose.msra.mxu0 0
  %1780 = vmatprep.mubr.bf16.mxu0 %v1660
  %1781 = vmatmul.mubr.bf16.gmra.mrb[0].mxu0 %v1659
  %v1782 = vpop.f32.mrb[0].mxu0
  %v1783 = vadd.f32 %v1666, %v1782
  %v1784 = vpop.f32.mrb[0].mxu0
  %v1785 = vpop.f32.mrb[0].mxu0
  %v1786 = vadd.f32 %v1666, %v1785
  %v1787 = vpop.f32.mrb[0].mxu0
  %1788 = vdwg.mxu0
  %v1789 = vadd.f32 %v1453, %v1783
  %v1790 = vadd.f32 %v1454, %v1786
  %v1791 = vld [vmem:[%s12] sm:$0x1]
  %v1792 = vld [vmem:[%s13] sm:$0x1]
  %1793 = vadd.xlane.f32.xlu0 %v1789
  %v1794 = vpop.xlane.xlu0 %1793
  %1795 = vadd.xlane.f32.xlu0 %v1790
  %v1796 = vpop.xlane.xlu0 %1795
  %v1797 = vmul.f32 %v1794, %v1420
  %v1798 = vmul.f32 %v1796, %v1420
  %v1799 = vsub.f32 %v1789, %v1797
  %v1800 = vsub.f32 %v1790, %v1798
  %v1801 = vmul.f32 %v1799, %v1799
  %v1802 = vmul.f32 %v1800, %v1800
  %1803 = vadd.xlane.f32.xlu0 %v1801
  %v1804 = vpop.xlane.xlu0 %1803
  %1805 = vadd.xlane.f32.xlu0 %v1802
  %v1806 = vpop.xlane.xlu0 %1805
  %v1807 = vmul.f32 %v1804, %v1420
  %v1808 = vmul.f32 %v1806, %v1420
  %v1809 = vadd.f32 %v1807, 1e-05
  %v1810 = vadd.f32 %v1808, 1e-05
  %v1811 = vrsqrt.pop %v1809
  %v1812 = vrsqrt.pop %v1810
  %v1813 = vmul.f32 %v1799, %v1811
  %v1814 = vmul.f32 %v1800, %v1812
  %v1816 = vlaneseq
  %v1817 = vshrl.u32 %v1816, 7
  %v1818 = vsub.s32 0, %v1817
  %v1819 = vrot.slane %v1791, %v1818
  %v1821 = vmul.f32 %v1813, %v1819
  %v1822 = vmul.f32 %v1814, %v1819
  %v1824 = vlaneseq
  %v1825 = vshrl.u32 %v1824, 7
  %v1826 = vsub.s32 0, %v1825
  %v1827 = vrot.slane %v1792, %v1826
  %v1829 = vadd.f32 %v1821, %v1827
  %v1830 = vadd.f32 %v1822, %v1827
  %v1831 = vpack.c.bf16 %v1829, %v1829
  %v1832 = vpack.c.bf16 %v1830, %v1830
  %1833 = vst [vmem:[%s14] sm:$0xf] %v1831
  %1834 = vst [vmem:[%s14 + $0x4] sm:$0xf] %v1832
  // Predicated region
  $region58: #{text_classifier_forward.4} parent=0 // pred_check
    _
  $region59: #{text_classifier_forward.4} parent=0 // pred_check_branch
    %1836 = sbr.rel (0) target = $region61
  $region60: #{text_classifier_forward.4} parent=0 // pred_region
    _
  $region61: #{text_classifier_forward.4} parent=0 // pred_fallthru
    _
  // Predicated region
  $region62: #{text_classifier_forward.4} parent=0 // pred_check
    _
  $region63: #{text_classifier_forward.4} parent=0 // pred_check_branch
    %1838 = sbr.rel (0) target = $region65
  $region64: #{text_classifier_forward.4} parent=0 // pred_region
    _
  $region65: #{text_classifier_forward.4} parent=0 // pred_fallthru
    _

</llo_original>
